<compile_context>
chip_gen: v7x
topology: tpu7x:2x2x1
jax: 0.10.0
libtpu: 0.0.40
codegen_flags: <defaults>
</compile_context>

<pallas_src>
import numpy as np
import jax
import jax.numpy as jnp
from jax.experimental import pallas as pl
from jax.experimental.pallas import tpu as pltpu


_GELU_C = 0.7978845608028654  # sqrt(2/pi)


def _gelu_tanh(x):
    # tanh-approximate GELU (EUP tanh + a few VALU ops).
    return 0.5 * x * (1.0 + jnp.tanh(_GELU_C * (x + 0.044715 * x * x * x)))


def _const_spec(shape):
    """BlockSpec covering the whole array; block index is constant across the grid
    (no re-DMA between grid steps)."""
    return pl.BlockSpec(shape, lambda *_: (0,) * len(shape))


# ----------------------------- kernel 1: per-role hbase precompute -----------------------------

def _precompute_kernel(summar_ref, token_ref, ent_ref, role_ref,
                       w1s_s_ref, w1r_s_ref, w1x_s_ref, b1_s_ref,
                       w1s_m_ref, w1r_m_ref, w1x_m_ref, b1_m_ref,
                       hs_ref, hm_ref, base_s_scr, base_m_scr):
    """hbase_r = (summar@W1s + x@W1x + b1) + role_r@W1r for both heads.

    The role-invariant base is computed once (r == 0) into VMEM scratch and
    reused for every role; each grid step only does the two per-role matmuls.
    """
    @pl.when(pl.program_id(0) == 0)
    def _init():
        summar = summar_ref[...]
        base_s_scr[...] = (
            jnp.dot(summar, w1s_s_ref[...], preferred_element_type=jnp.float32)
            + jnp.dot(token_ref[...], w1x_s_ref[...], preferred_element_type=jnp.float32)
            + b1_s_ref[...])
        base_m_scr[...] = (
            jnp.dot(summar, w1s_m_ref[...], preferred_element_type=jnp.float32)
            + jnp.dot(ent_ref[...], w1x_m_ref[...], preferred_element_type=jnp.float32)
            + b1_m_ref[...])

    role = role_ref[...]                                           # (M, H) for this role
    hs_ref[...] = base_s_scr[...] + jnp.dot(role, w1r_s_ref[...],
                                            preferred_element_type=jnp.float32)
    hm_ref[...] = base_m_scr[...] + jnp.dot(role, w1r_m_ref[...],
                                            preferred_element_type=jnp.float32)


def precompute_call(summar_f, token_f, ent_f, role_f, single_params, multi_params):
    M, H = summar_f.shape
    R = role_f.shape[0] // M
    w1s_s, w1r_s, w1x_s, _, b1_s, _, _ = single_params
    w1s_m, w1r_m, w1x_m, _, b1_m, _, _ = multi_params

    # TODO(synk): at production sizes (H>=768, M>=4k rows) additionally tile M with a
    # second ("parallel") grid axis and cast matmul inputs to bf16; at these demo sizes
    # one (M,H) block per role is optimal.
    in_specs = [
        _const_spec(summar_f.shape), _const_spec(token_f.shape), _const_spec(ent_f.shape),
        pl.BlockSpec((M, H), lambda r: (r, 0)),                    # role embedding, per role
        _const_spec(w1s_s.shape), _const_spec(w1r_s.shape),
        _const_spec(w1x_s.shape), _const_spec(b1_s.shape),
        _const_spec(w1s_m.shape), _const_spec(w1r_m.shape),
        _const_spec(w1x_m.shape), _const_spec(b1_m.shape),
    ]
    out_specs = [pl.BlockSpec((M, H), lambda r: (r, 0)),
                 pl.BlockSpec((M, H), lambda r: (r, 0))]
    return pl.pallas_call(
        _precompute_kernel,
        grid=(R,),
        in_specs=in_specs,
        out_specs=out_specs,
        out_shape=(jax.ShapeDtypeStruct((R * M, H), jnp.float32),
                   jax.ShapeDtypeStruct((R * M, H), jnp.float32)),
        scratch_shapes=[pltpu.VMEM((M, H), jnp.float32),           # role-invariant base (single)
                        pltpu.VMEM((M, H), jnp.float32)],          # role-invariant base (multi)
        compiler_params=pltpu.CompilerParams(
            dimension_semantics=("arbitrary",)),                   # base carried across roles
    )(summar_f, token_f, ent_f, role_f,
      w1s_s, w1r_s, w1x_s, b1_s, w1s_m, w1r_m, w1x_m, b1_m)


# ----------------------------- kernel 2: fused serial per-role step -----------------------------

def _role_step_kernel(hbs_ref, hbm_ref, gold_ref, tok_sel_ref, ent_sel_ref, mask_ref,
                      w1a_s_ref, w2_s_ref, b2_s_ref,
                      w1a_m_ref, w2_m_ref, b2_m_ref,
                      wa_ref, wb_ref, ba_ref,
                      pred_ref, loss_ref, pre_scr):
    """One role per grid step; pre_answer carried in VMEM scratch, loss accumulated
    in the resident (1,1) output block."""
    r = pl.program_id(0)

    @pl.when(r == 0)
    def _init():
        pre_scr[...] = jnp.zeros_like(pre_scr)       # pre_answer starts at zero
        loss_ref[...] = jnp.zeros_like(loss_ref)

    B, S = pre_scr.shape
    pre = pre_scr[...]                               # (B, S) answer carried from previous role

    def head(hbase, w1a_ref, w2_ref, b2_ref):
        # hbase: (B, H, S) already holds summar@W1s + role@W1r + x@W1x + b1 (transposed).
        # pre broadcasts over H (sublanes), w1a/w2 broadcast over S (lanes).
        h = hbase + pre[:, None, :] * w1a_ref[...][None]              # (B, H, S)
        g = _gelu_tanh(h)
        # Linear(H, 1) as a sublane reduction instead of a skinny (M,H)x(H,1) MXU matmul.
        logit = jnp.sum(g * w2_ref[...][None], axis=1) + b2_ref[...]  # (B, S)
        return jax.nn.sigmoid(logit)

    p_single = head(hbs_ref[0], w1a_s_ref, w2_s_ref, b2_s_ref)        # (B, S)
    p_multi = head(hbm_ref[0], w1a_m_ref, w2_m_ref, b2_m_ref)         # (B, S)

    # ---- device-side arg_map: max over precompiled 0/1 span-selection tables.
    # Sigmoid predictions are strictly > 0 and the reference's default for an
    # uncovered position is 0.0, so max_k(sel * p) reproduces the masked max +
    # zero default in a single multiply per element.
    pred_token = jnp.max(tok_sel_ref[...] * p_single[:, None, :], axis=-1)   # (B, S)
    pred_entity = jnp.max(ent_sel_ref[...] * p_multi[:, None, :], axis=-1)   # (B, S)
    pred_arg = 0.5 * (pred_token + pred_entity)
    # TODO(synk): output last dim S < 128 -> masked stores; pad S to 128 at production sizes.
    pred_ref[0] = pred_arg

    # ---- answer_linear: concat([pred_arg, pre_answer], -1) @ W.T + b, W split in halves.
    pre_scr[...] = (jnp.dot(pred_arg, wa_ref[...], preferred_element_type=jnp.float32)
                    + jnp.dot(pre, wb_ref[...], preferred_element_type=jnp.float32)
                    + ba_ref[...])

    # ---- BCE loss. Mirrors the reference exactly:
    #      loss = BCELoss()(pred, gold)   (mean over ALL B*S elements)
    #      loss = (loss * mask).sum()    == mean_bce * mask.sum()
    y = gold_ref[0]
    logp = jnp.maximum(jnp.log(pred_arg), -100.0)            # PyTorch BCE log clamp
    log1mp = jnp.maximum(jnp.log(1.0 - pred_arg), -100.0)
    bce = -(y * logp + (1.0 - y) * log1mp)
    mean_bce = jnp.sum(bce, keepdims=True) / float(B * S)     # (1, 1)
    loss_ref[...] = loss_ref[...] + mean_bce * jnp.sum(mask_ref[...], keepdims=True)


def role_step_call(hbase_s, hbase_m, gold_all, tok_sel, ent_sel, token_mask,
                   single_params, multi_params, answer_params):
    R, B, H, S = hbase_s.shape
    _, _, _, w1a_s, _, w2_s, b2_s = single_params
    _, _, _, w1a_m, _, w2_m, b2_m = multi_params
    wa, wb, ba = answer_params

    in_specs = [
        pl.BlockSpec((1, B, H, S), lambda r: (r, 0, 0, 0)),   # hbase single (per role)
        pl.BlockSpec((1, B, H, S), lambda r: (r, 0, 0, 0)),   # hbase multi (per role)
        pl.BlockSpec((1, B, S), lambda r: (r, 0, 0)),         # gold labels (per role)
        _const_spec(tok_sel.shape),                           # role-invariant inputs: constant
        _const_spec(ent_sel.shape),                           # block index -> no re-DMA across
        _const_spec(token_mask.shape),                        # the grid.
        _const_spec(w1a_s.shape), _const_spec(w2_s.shape), _const_spec(b2_s.shape),
        _const_spec(w1a_m.shape), _const_spec(w2_m.shape), _const_spec(b2_m.shape),
        _const_spec(wa.shape), _const_spec(wb.shape), _const_spec(ba.shape),
    ]
    out_specs = [
        pl.BlockSpec((1, B, S), lambda r: (r, 0, 0)),         # pred_arg_ids per role
        pl.BlockSpec((1, 1), lambda r: (0, 0)),               # total loss (resident accumulator)
    ]
    return pl.pallas_call(
        _role_step_kernel,
        grid=(R,),
        in_specs=in_specs,
        out_specs=out_specs,
        out_shape=(jax.ShapeDtypeStruct((R, B, S), jnp.float32),
                   jax.ShapeDtypeStruct((1, 1), jnp.float32)),
        scratch_shapes=[pltpu.VMEM((B, S), jnp.float32)],     # pre_answer carry
        compiler_params=pltpu.CompilerParams(
            dimension_semantics=("arbitrary",)),              # serial chain through pre_answer
    )(hbase_s, hbase_m, gold_all, tok_sel, ent_sel, token_mask,
      w1a_s, w2_s, b2_s, w1a_m, w2_m, b2_m, wa, wb, ba)


# ----------------------------- host-side compilation of the ragged span structures ------------

def build_span_tables(entity_spans, char2token, span2entity, B, S):
    """Compile the ragged python span structures into dense 0/1 selection tables.

    tok_sel[i, j, k] == 1  ->  pred_token[i, j] = max_k single_pred[i, k]
    ent_sel[i, p, k] == 1  ->  pred_entity[i, p] = max_k multi_pred[i, k]
    All-zero rows keep the reference's 0.0 default.
    """
    tok_sel = np.zeros((B, S, S), np.float32)
    ent_sel = np.zeros((B, S, S), np.float32)
    for i in range(B):
        for j, c2t in enumerate(char2token[i]):
            if j < S:
                tok_sel[i, j, c2t[0]:c2t[1]] = 1.0
        for j in range(len(span2entity)):             # mirrors the reference loop bound
            s2e = span2entity[i][j]
            entity = entity_spans[i][j]
            for span in entity:
                if span[1] <= S:
                    # pred_entity[span[0]:span[1]] = char_scores  (later entities overwrite)
                    for off, pos in enumerate(range(span[0], span[1])):
                        src = s2e[off]
                        ent_sel[i, pos, :] = 0.0
                        ent_sel[i, pos, src[0]:src[1]] = 1.0
    return jnp.asarray(tok_sel), jnp.asarray(ent_sel)


# ----------------------------- parameters -----------------------------

def init_params(key, hidden, max_seq_len, vocab, scale=0.05):
    ks = jax.random.split(key, 18)

    def nrm(k, shape):
        return jax.random.normal(k, shape, jnp.float32) * scale

    def head(kset):
        # Linear(3H+1, H) weight split along its input dim (+ bias) and Linear(H, 1).
        return (nrm(kset[0], (hidden, hidden)),   # W1 block acting on summar
                nrm(kset[1], (hidden, hidden)),   # W1 block acting on role
                nrm(kset[2], (hidden, hidden)),   # W1 block acting on token / entities
                nrm(kset[3], (hidden, 1)),        # W1 column acting on pre_answer
                nrm(kset[4], (1, hidden)),        # b1
                nrm(kset[5], (hidden, 1)),        # W2 of Linear(H, 1) (used as a reduction)
                nrm(kset[6], (1, 1)))             # b2

    single = head(ks[0:7])
    multi = head(ks[7:14])
    # answer_linear: Linear(2S, S); y = x @ W.T + b, W split into its two S-wide halves.
    answer = (nrm(ks[14], (max_seq_len, max_seq_len)),   # Wa.T (acts on pred_arg_ids_)
              nrm(ks[15], (max_seq_len, max_seq_len)),   # Wb.T (acts on the previous answer)
              nrm(ks[16], (1, max_seq_len)))             # bias
    role_table = nrm(ks[17], (vocab, hidden))            # stand-in for the external BERT
    return {"single": single, "multi": multi, "answer": answer, "role_table": role_table}


# ----------------------------- forward -----------------------------

@jax.jit
def _forward_device(params, role_ids, role_labels, summar_embedding, token_embedding,
                    entities_embedding, tok_sel, ent_sel, token_mask, role_ids_mask):
    R = role_ids.shape[0]
    B, S, H = summar_embedding.shape
    M = B * S

    # TODO(synk): external `bert(role_id, role_mask)[0]` encoder replaced by a deterministic
    # embedding-table lookup (the encoder is not part of this module); the gather stays in XLA.
    role_emb = params["role_table"][role_ids] * role_ids_mask[..., None].astype(jnp.float32)

    hbase_s, hbase_m = precompute_call(
        summar_embedding.reshape(M, H), token_embedding.reshape(M, H),
        entities_embedding.reshape(M, H), role_emb.reshape(R * M, H),
        params["single"], params["multi"])

    # Transpose to (R, B, H, S) so the fused per-role kernel only needs natural
    # lane/sublane broadcasts (cheap XLA transpose between the two pallas_calls).
    # TODO(synk): fold this transpose into the precompute kernel at production sizes.
    hbase_s = hbase_s.reshape(R, B, S, H).transpose(0, 1, 3, 2)
    hbase_m = hbase_m.reshape(R, B, S, H).transpose(0, 1, 3, 2)

    preds, loss = role_step_call(
        hbase_s, hbase_m, role_labels.astype(jnp.float32), tok_sel, ent_sel,
        token_mask.astype(jnp.float32),
        params["single"], params["multi"], params["answer"])
    return loss[0, 0], preds


def role_decoder_forward(params, role_ids, role_labels, summar_embedding, token_embedding,
                         entities_embedding, entity_spans, token_mask, role_ids_mask,
                         char2token, span2entity):
    B, S, _ = summar_embedding.shape
    tok_sel, ent_sel = build_span_tables(entity_spans, char2token, span2entity, B, S)
    return _forward_device(params, role_ids, role_labels, summar_embedding, token_embedding,
                           entities_embedding, tok_sel, ent_sel, token_mask, role_ids_mask)


# ----------------------------- pure-JAX reference (mirrors the torch module) -------------------

def _reference_forward(params, role_ids, role_labels, summar, token, ent, entity_spans,
                       token_mask, role_ids_mask, char2token, span2entity):
    R = role_ids.shape[0]
    B, S, H = summar.shape
    wa, wb, ba = params["answer"]
    pre = jnp.zeros((B, S), jnp.float32)
    total = jnp.float32(0.0)
    preds = []
    for r in range(R):
        role_emb = params["role_table"][role_ids[r]] * role_ids_mask[r][..., None].astype(jnp.float32)

        def mlp(x3, p):
            w1s, w1r, w1x, w1a, b1, w2, b2 = p
            h = (summar @ w1s + role_emb @ w1r + x3 @ w1x
                 + pre[..., None] * w1a.reshape(1, 1, H) + b1.reshape(1, 1, H))
            g = _gelu_tanh(h)
            logit = jnp.sum(g * w2.reshape(1, 1, H), axis=-1) + b2[0, 0]
            return jax.nn.sigmoid(logit)

        p_s = mlp(token, params["single"])
        p_m = mlp(ent, params["multi"])

        rows = []
        for i in range(B):
            pt = jnp.zeros((S,), jnp.float32)
            for j, c2t in enumerate(char2token[i]):
                pt = pt.at[j].set(jnp.max(p_s[i, c2t[0]:c2t[1]]))
            pe = jnp.zeros((S,), jnp.float32)
            for j in range(len(span2entity)):
                s2e = span2entity[i][j]
                entity = entity_spans[i][j]
                cs = jnp.stack([jnp.max(p_m[i, sp[0]:sp[1]]) for sp in s2e])
                for span in entity:
                    if span[1] <= S:
                        pe = pe.at[span[0]:span[1]].set(cs)
            rows.append(0.5 * (pt + pe))
        pred_arg = jnp.stack(rows)

        logp = jnp.maximum(jnp.log(pred_arg), -100.0)
        log1mp = jnp.maximum(jnp.log(1.0 - pred_arg), -100.0)
        bce = -(role_labels[r] * logp + (1.0 - role_labels[r]) * log1mp)
        total = total + jnp.mean(bce) * jnp.sum(token_mask)
        pre = pred_arg @ wa + pre @ wb + ba
        preds.append(pred_arg)
    return total, jnp.stack(preds)


# ----------------------------- main -----------------------------

if __name__ == "__main__":
    B, S, H = 2, 16, 32          # batch, max_seq_len (== seq_len), hidden_size
    ROLE_NUM = 2
    VOCAB = 20

    key = jax.random.PRNGKey(0)
    k_params, k1, k2, k3, k4, k5 = jax.random.split(key, 6)
    params = init_params(k_params, H, S, VOCAB)

    role_ids = jax.random.randint(k1, (ROLE_NUM, B, S), 0, VOCAB)
    role_labels = jax.random.bernoulli(k2, 0.3, (ROLE_NUM, B, S)).astype(jnp.float32)
    summar_embedding = jax.random.normal(k3, (B, S, H), jnp.float32) * 0.5
    token_embedding = jax.random.normal(k4, (B, S, H), jnp.float32) * 0.5
    entities_embedding = jax.random.normal(k5, (B, S, H), jnp.float32) * 0.5
    token_mask = jnp.ones((B, S), jnp.float32)
    role_ids_mask = jnp.ones((ROLE_NUM, B, S), jnp.float32)

    # Synthetic ragged span structures (python lists, like the reference).
    char2token = [[(j, j + 1) for j in range(S)] for _ in range(B)]
    span2entity = [[[(2 * j, 2 * j + 1), (2 * j + 4, 2 * j + 6)] for j in range(B)]
                   for _ in range(B)]
    entity_spans = [[[(4 * j, 4 * j + 2)] for j in range(B)] for _ in range(B)]

    total_loss, pred_arg_ids = role_decoder_forward(
        params, role_ids, role_labels, summar_embedding, token_embedding,
        entities_embedding, entity_spans, token_mask, role_ids_mask,
        char2token, span2entity)
    jax.block_until_ready((total_loss, pred_arg_ids))

    # correctness check against a pure-JAX mirror of the torch module
    ref_loss, ref_preds = _reference_forward(
        params, role_ids, role_labels, summar_embedding, token_embedding,
        entities_embedding, entity_spans, token_mask, role_ids_mask,
        char2token, span2entity)

    assert pred_arg_ids.shape == (ROLE_NUM, B, S)
    assert jnp.isfinite(total_loss)
    assert jnp.allclose(pred_arg_ids, ref_preds, rtol=1e-2, atol=1e-2), \
        float(jnp.max(jnp.abs(pred_arg_ids - ref_preds)))
    assert jnp.allclose(total_loss, ref_loss, rtol=1e-2, atol=1e-2), \
        (float(total_loss), float(ref_loss))
    print("KERNEL_OK")
</pallas_src>

<mosaic_0001>
module attributes {stable_mosaic.version = 11 : i64} {
  func.func @_precompute_kernel(%arg0: i32, %arg1: memref<32x32xf32, #tpu.memory_space<vmem>>, %arg2: memref<32x32xf32, #tpu.memory_space<vmem>>, %arg3: memref<32x32xf32, #tpu.memory_space<vmem>>, %arg4: memref<32x32xf32, #tpu.memory_space<vmem>>, %arg5: memref<32x32xf32, #tpu.memory_space<vmem>>, %arg6: memref<32x32xf32, #tpu.memory_space<vmem>>, %arg7: memref<32x32xf32, #tpu.memory_space<vmem>>, %arg8: memref<1x32xf32, #tpu.memory_space<vmem>>, %arg9: memref<32x32xf32, #tpu.memory_space<vmem>>, %arg10: memref<32x32xf32, #tpu.memory_space<vmem>>, %arg11: memref<32x32xf32, #tpu.memory_space<vmem>>, %arg12: memref<1x32xf32, #tpu.memory_space<vmem>>, %arg13: memref<32x32xf32, #tpu.memory_space<vmem>>, %arg14: memref<32x32xf32, #tpu.memory_space<vmem>>, %arg15: memref<32x32xf32, #tpu.memory_space<vmem>>, %arg16: memref<32x32xf32, #tpu.memory_space<vmem>>) attributes {dimension_semantics = [#tpu.dimension_semantics<arbitrary>], iteration_bounds = array<i64: 2>, scalar_prefetch = 0 : i64, scratch_operands = 2 : i64, tpu.core_type = #tpu.core_type<tc>, window_params = [{pipeline_mode = #tpu.pipeline_mode<synchronous>, transform_indices = @transform_0, window_bounds = array<i64: 32, 32>}, {pipeline_mode = #tpu.pipeline_mode<synchronous>, transform_indices = @transform_1, window_bounds = array<i64: 32, 32>}, {pipeline_mode = #tpu.pipeline_mode<synchronous>, transform_indices = @transform_2, window_bounds = array<i64: 32, 32>}, {transform_indices = @transform_3, window_bounds = array<i64: 32, 32>}, {pipeline_mode = #tpu.pipeline_mode<synchronous>, transform_indices = @transform_4, window_bounds = array<i64: 32, 32>}, {pipeline_mode = #tpu.pipeline_mode<synchronous>, transform_indices = @transform_5, window_bounds = array<i64: 32, 32>}, {pipeline_mode = #tpu.pipeline_mode<synchronous>, transform_indices = @transform_6, window_bounds = array<i64: 32, 32>}, {pipeline_mode = #tpu.pipeline_mode<synchronous>, transform_indices = @transform_7, window_bounds = array<i64: 1, 32>}, {pipeline_mode = #tpu.pipeline_mode<synchronous>, transform_indices = @transform_8, window_bounds = array<i64: 32, 32>}, {pipeline_mode = #tpu.pipeline_mode<synchronous>, transform_indices = @transform_9, window_bounds = array<i64: 32, 32>}, {pipeline_mode = #tpu.pipeline_mode<synchronous>, transform_indices = @transform_10, window_bounds = array<i64: 32, 32>}, {pipeline_mode = #tpu.pipeline_mode<synchronous>, transform_indices = @transform_11, window_bounds = array<i64: 1, 32>}, {transform_indices = @transform_12, window_bounds = array<i64: 32, 32>}, {transform_indices = @transform_13, window_bounds = array<i64: 32, 32>}]} {
    %c0_i32 = arith.constant 0 : i32
    %0 = arith.cmpi eq, %arg0, %c0_i32 : i32
    %1 = arith.extui %0 : i1 to i32
    %c0_i32_0 = arith.constant 0 : i32
    %2 = arith.cmpi ne, %1, %c0_i32_0 : i32
    scf.if %2 {
      %c0_15 = arith.constant 0 : index
      %c0_16 = arith.constant 0 : index
      %14 = vector.load %arg1[%c0_15, %c0_16] : memref<32x32xf32, #tpu.memory_space<vmem>>, vector<32x32xf32>
      %c0_17 = arith.constant 0 : index
      %c0_18 = arith.constant 0 : index
      %15 = vector.load %arg5[%c0_17, %c0_18] : memref<32x32xf32, #tpu.memory_space<vmem>>, vector<32x32xf32>
      %cst_19 = arith.constant dense<0.000000e+00> : vector<32x32xf32>
      %16 = tpu.matmul %14, %15, %cst_19 {dimension_numbers = #tpu.dot_dimension_numbers<[1], [0], [0], [1], [0, 0, 1, 1], [], []>} : vector<32x32xf32>, vector<32x32xf32>, vector<32x32xf32> -> vector<32x32xf32>
      %c0_20 = arith.constant 0 : index
      %c0_21 = arith.constant 0 : index
      %17 = vector.load %arg2[%c0_20, %c0_21] : memref<32x32xf32, #tpu.memory_space<vmem>>, vector<32x32xf32>
      %c0_22 = arith.constant 0 : index
      %c0_23 = arith.constant 0 : index
      %18 = vector.load %arg7[%c0_22, %c0_23] : memref<32x32xf32, #tpu.memory_space<vmem>>, vector<32x32xf32>
      %cst_24 = arith.constant dense<0.000000e+00> : vector<32x32xf32>
      %19 = tpu.matmul %17, %18, %cst_24 {dimension_numbers = #tpu.dot_dimension_numbers<[1], [0], [0], [1], [0, 0, 1, 1], [], []>} : vector<32x32xf32>, vector<32x32xf32>, vector<32x32xf32> -> vector<32x32xf32>
      %20 = arith.addf %16, %19 : vector<32x32xf32>
      %c0_25 = arith.constant 0 : index
      %c0_26 = arith.constant 0 : index
      %21 = vector.load %arg8[%c0_25, %c0_26] : memref<1x32xf32, #tpu.memory_space<vmem>>, vector<1x32xf32>
      %22 = vector.broadcast %21 : vector<1x32xf32> to vector<32x32xf32>
      %23 = arith.addf %20, %22 : vector<32x32xf32>
      %c0_27 = arith.constant 0 : index
      %c0_28 = arith.constant 0 : index
      %24 = vector.load %arg15[%c0_27, %c0_28] : memref<32x32xf32, #tpu.memory_space<vmem>>, vector<32x32xf32>
      tpu.vector_store %arg15[%c0_27, %c0_28], %23 {strides = array<i32>} : memref<32x32xf32, #tpu.memory_space<vmem>>, vector<32x32xf32>,
      %c0_29 = arith.constant 0 : index
      %c0_30 = arith.constant 0 : index
      %25 = vector.load %arg9[%c0_29, %c0_30] : memref<32x32xf32, #tpu.memory_space<vmem>>, vector<32x32xf32>
      %cst_31 = arith.constant dense<0.000000e+00> : vector<32x32xf32>
      %26 = tpu.matmul %14, %25, %cst_31 {dimension_numbers = #tpu.dot_dimension_numbers<[1], [0], [0], [1], [0, 0, 1, 1], [], []>} : vector<32x32xf32>, vector<32x32xf32>, vector<32x32xf32> -> vector<32x32xf32>
      %c0_32 = arith.constant 0 : index
      %c0_33 = arith.constant 0 : index
      %27 = vector.load %arg3[%c0_32, %c0_33] : memref<32x32xf32, #tpu.memory_space<vmem>>, vector<32x32xf32>
      %c0_34 = arith.constant 0 : index
      %c0_35 = arith.constant 0 : index
      %28 = vector.load %arg11[%c0_34, %c0_35] : memref<32x32xf32, #tpu.memory_space<vmem>>, vector<32x32xf32>
      %cst_36 = arith.constant dense<0.000000e+00> : vector<32x32xf32>
      %29 = tpu.matmul %27, %28, %cst_36 {dimension_numbers = #tpu.dot_dimension_numbers<[1], [0], [0], [1], [0, 0, 1, 1], [], []>} : vector<32x32xf32>, vector<32x32xf32>, vector<32x32xf32> -> vector<32x32xf32>
      %30 = arith.addf %26, %29 : vector<32x32xf32>
      %c0_37 = arith.constant 0 : index
      %c0_38 = arith.constant 0 : index
      %31 = vector.load %arg12[%c0_37, %c0_38] : memref<1x32xf32, #tpu.memory_space<vmem>>, vector<1x32xf32>
      %32 = vector.broadcast %31 : vector<1x32xf32> to vector<32x32xf32>
      %33 = arith.addf %30, %32 : vector<32x32xf32>
      %c0_39 = arith.constant 0 : index
      %c0_40 = arith.constant 0 : index
      %34 = vector.load %arg16[%c0_39, %c0_40] : memref<32x32xf32, #tpu.memory_space<vmem>>, vector<32x32xf32>
      tpu.vector_store %arg16[%c0_39, %c0_40], %33 {strides = array<i32>} : memref<32x32xf32, #tpu.memory_space<vmem>>, vector<32x32xf32>,
    } else {
    }
    %c0 = arith.constant 0 : index
    %c0_1 = arith.constant 0 : index
    %3 = vector.load %arg4[%c0, %c0_1] : memref<32x32xf32, #tpu.memory_space<vmem>>, vector<32x32xf32>
    %c0_2 = arith.constant 0 : index
    %c0_3 = arith.constant 0 : index
    %4 = vector.load %arg15[%c0_2, %c0_3] : memref<32x32xf32, #tpu.memory_space<vmem>>, vector<32x32xf32>
    %c0_4 = arith.constant 0 : index
    %c0_5 = arith.constant 0 : index
    %5 = vector.load %arg6[%c0_4, %c0_5] : memref<32x32xf32, #tpu.memory_space<vmem>>, vector<32x32xf32>
    %cst = arith.constant dense<0.000000e+00> : vector<32x32xf32>
    %6 = tpu.matmul %3, %5, %cst {dimension_numbers = #tpu.dot_dimension_numbers<[1], [0], [0], [1], [0, 0, 1, 1], [], []>} : vector<32x32xf32>, vector<32x32xf32>, vector<32x32xf32> -> vector<32x32xf32>
    %7 = arith.addf %4, %6 : vector<32x32xf32>
    %c0_6 = arith.constant 0 : index
    %c0_7 = arith.constant 0 : index
    %8 = vector.load %arg13[%c0_6, %c0_7] : memref<32x32xf32, #tpu.memory_space<vmem>>, vector<32x32xf32>
    tpu.vector_store %arg13[%c0_6, %c0_7], %7 {strides = array<i32>} : memref<32x32xf32, #tpu.memory_space<vmem>>, vector<32x32xf32>,
    %c0_8 = arith.constant 0 : index
    %c0_9 = arith.constant 0 : index
    %9 = vector.load %arg16[%c0_8, %c0_9] : memref<32x32xf32, #tpu.memory_space<vmem>>, vector<32x32xf32>
    %c0_10 = arith.constant 0 : index
    %c0_11 = arith.constant 0 : index
    %10 = vector.load %arg10[%c0_10, %c0_11] : memref<32x32xf32, #tpu.memory_space<vmem>>, vector<32x32xf32>
    %cst_12 = arith.constant dense<0.000000e+00> : vector<32x32xf32>
    %11 = tpu.matmul %3, %10, %cst_12 {dimension_numbers = #tpu.dot_dimension_numbers<[1], [0], [0], [1], [0, 0, 1, 1], [], []>} : vector<32x32xf32>, vector<32x32xf32>, vector<32x32xf32> -> vector<32x32xf32>
    %12 = arith.addf %9, %11 : vector<32x32xf32>
    %c0_13 = arith.constant 0 : index
    %c0_14 = arith.constant 0 : index
    %13 = vector.load %arg14[%c0_13, %c0_14] : memref<32x32xf32, #tpu.memory_space<vmem>>, vector<32x32xf32>
    tpu.vector_store %arg14[%c0_13, %c0_14], %12 {strides = array<i32>} : memref<32x32xf32, #tpu.memory_space<vmem>>, vector<32x32xf32>,
    return
  }
  func.func @transform_0(%arg0: i32) -> (i32, i32) {
    %c0_i32 = arith.constant 0 : i32
    %c0_i32_0 = arith.constant 0 : i32
    %c0_i32_1 = arith.constant 0 : i32
    return %c0_i32, %c0_i32_0 : i32, i32
  }
  func.func @transform_1(%arg0: i32) -> (i32, i32) {
    %c0_i32 = arith.constant 0 : i32
    %c0_i32_0 = arith.constant 0 : i32
    %c0_i32_1 = arith.constant 0 : i32
    return %c0_i32, %c0_i32_0 : i32, i32
  }
  func.func @transform_2(%arg0: i32) -> (i32, i32) {
    %c0_i32 = arith.constant 0 : i32
    %c0_i32_0 = arith.constant 0 : i32
    %c0_i32_1 = arith.constant 0 : i32
    return %c0_i32, %c0_i32_0 : i32, i32
  }
  func.func @transform_3(%arg0: i32) -> (i32, i32) {
    %c0_i32 = arith.constant 0 : i32
    %c0_i32_0 = arith.constant 0 : i32
    return %arg0, %c0_i32 : i32, i32
  }
  func.func @transform_4(%arg0: i32) -> (i32, i32) {
    %c0_i32 = arith.constant 0 : i32
    %c0_i32_0 = arith.constant 0 : i32
    %c0_i32_1 = arith.constant 0 : i32
    return %c0_i32, %c0_i32_0 : i32, i32
  }
  func.func @transform_5(%arg0: i32) -> (i32, i32) {
    %c0_i32 = arith.constant 0 : i32
    %c0_i32_0 = arith.constant 0 : i32
    %c0_i32_1 = arith.constant 0 : i32
    return %c0_i32, %c0_i32_0 : i32, i32
  }
  func.func @transform_6(%arg0: i32) -> (i32, i32) {
    %c0_i32 = arith.constant 0 : i32
    %c0_i32_0 = arith.constant 0 : i32
    %c0_i32_1 = arith.constant 0 : i32
    return %c0_i32, %c0_i32_0 : i32, i32
  }
  func.func @transform_7(%arg0: i32) -> (i32, i32) {
    %c0_i32 = arith.constant 0 : i32
    %c0_i32_0 = arith.constant 0 : i32
    %c0_i32_1 = arith.constant 0 : i32
    return %c0_i32, %c0_i32_0 : i32, i32
  }
  func.func @transform_8(%arg0: i32) -> (i32, i32) {
    %c0_i32 = arith.constant 0 : i32
    %c0_i32_0 = arith.constant 0 : i32
    %c0_i32_1 = arith.constant 0 : i32
    return %c0_i32, %c0_i32_0 : i32, i32
  }
  func.func @transform_9(%arg0: i32) -> (i32, i32) {
    %c0_i32 = arith.constant 0 : i32
    %c0_i32_0 = arith.constant 0 : i32
    %c0_i32_1 = arith.constant 0 : i32
    return %c0_i32, %c0_i32_0 : i32, i32
  }
  func.func @transform_10(%arg0: i32) -> (i32, i32) {
    %c0_i32 = arith.constant 0 : i32
    %c0_i32_0 = arith.constant 0 : i32
    %c0_i32_1 = arith.constant 0 : i32
    return %c0_i32, %c0_i32_0 : i32, i32
  }
  func.func @transform_11(%arg0: i32) -> (i32, i32) {
    %c0_i32 = arith.constant 0 : i32
    %c0_i32_0 = arith.constant 0 : i32
    %c0_i32_1 = arith.constant 0 : i32
    return %c0_i32, %c0_i32_0 : i32, i32
  }
  func.func @transform_12(%arg0: i32) -> (i32, i32) {
    %c0_i32 = arith.constant 0 : i32
    %c0_i32_0 = arith.constant 0 : i32
    return %arg0, %c0_i32 : i32, i32
  }
  func.func @transform_13(%arg0: i32) -> (i32, i32) {
    %c0_i32 = arith.constant 0 : i32
    %c0_i32_0 = arith.constant 0 : i32
    return %arg0, %c0_i32 : i32, i32
  }
}

module attributes {stable_mosaic.version = 11 : i64} {
  func.func @_role_step_kernel(%arg0: i32, %arg1: memref<1x2x32x16xf32, #tpu.memory_space<vmem>>, %arg2: memref<1x2x32x16xf32, #tpu.memory_space<vmem>>, %arg3: memref<1x2x16xf32, #tpu.memory_space<vmem>>, %arg4: memref<2x16x16xf32, #tpu.memory_space<vmem>>, %arg5: memref<2x16x16xf32, #tpu.memory_space<vmem>>, %arg6: memref<2x16xf32, #tpu.memory_space<vmem>>, %arg7: memref<32x1xf32, #tpu.memory_space<vmem>>, %arg8: memref<32x1xf32, #tpu.memory_space<vmem>>, %arg9: memref<1x1xf32, #tpu.memory_space<vmem>>, %arg10: memref<32x1xf32, #tpu.memory_space<vmem>>, %arg11: memref<32x1xf32, #tpu.memory_space<vmem>>, %arg12: memref<1x1xf32, #tpu.memory_space<vmem>>, %arg13: memref<16x16xf32, #tpu.memory_space<vmem>>, %arg14: memref<16x16xf32, #tpu.memory_space<vmem>>, %arg15: memref<1x16xf32, #tpu.memory_space<vmem>>, %arg16: memref<1x2x16xf32, #tpu.memory_space<vmem>>, %arg17: memref<1x1xf32, #tpu.memory_space<vmem>>, %arg18: memref<2x16xf32, #tpu.memory_space<vmem>>) attributes {dimension_semantics = [#tpu.dimension_semantics<arbitrary>], iteration_bounds = array<i64: 2>, scalar_prefetch = 0 : i64, scratch_operands = 1 : i64, tpu.core_type = #tpu.core_type<tc>, window_params = [{transform_indices = @transform_0, window_bounds = array<i64: 1, 2, 32, 16>}, {transform_indices = @transform_1, window_bounds = array<i64: 1, 2, 32, 16>}, {transform_indices = @transform_2, window_bounds = array<i64: 1, 2, 16>}, {pipeline_mode = #tpu.pipeline_mode<synchronous>, transform_indices = @transform_3, window_bounds = array<i64: 2, 16, 16>}, {pipeline_mode = #tpu.pipeline_mode<synchronous>, transform_indices = @transform_4, window_bounds = array<i64: 2, 16, 16>}, {pipeline_mode = #tpu.pipeline_mode<synchronous>, transform_indices = @transform_5, window_bounds = array<i64: 2, 16>}, {pipeline_mode = #tpu.pipeline_mode<synchronous>, transform_indices = @transform_6, window_bounds = array<i64: 32, 1>}, {pipeline_mode = #tpu.pipeline_mode<synchronous>, transform_indices = @transform_7, window_bounds = array<i64: 32, 1>}, {pipeline_mode = #tpu.pipeline_mode<synchronous>, transform_indices = @transform_8, window_bounds = array<i64: 1, 1>}, {pipeline_mode = #tpu.pipeline_mode<synchronous>, transform_indices = @transform_9, window_bounds = array<i64: 32, 1>}, {pipeline_mode = #tpu.pipeline_mode<synchronous>, transform_indices = @transform_10, window_bounds = array<i64: 32, 1>}, {pipeline_mode = #tpu.pipeline_mode<synchronous>, transform_indices = @transform_11, window_bounds = array<i64: 1, 1>}, {pipeline_mode = #tpu.pipeline_mode<synchronous>, transform_indices = @transform_12, window_bounds = array<i64: 16, 16>}, {pipeline_mode = #tpu.pipeline_mode<synchronous>, transform_indices = @transform_13, window_bounds = array<i64: 16, 16>}, {pipeline_mode = #tpu.pipeline_mode<synchronous>, transform_indices = @transform_14, window_bounds = array<i64: 1, 16>}, {transform_indices = @transform_15, window_bounds = array<i64: 1, 2, 16>}, {pipeline_mode = #tpu.pipeline_mode<synchronous>, transform_indices = @transform_16, window_bounds = array<i64: 1, 1>}]} {
    %c0_i32 = arith.constant 0 : i32
    %0 = arith.cmpi eq, %arg0, %c0_i32 : i32
    %1 = arith.extui %0 : i1 to i32
    %c0_i32_0 = arith.constant 0 : i32
    %2 = arith.cmpi ne, %1, %c0_i32_0 : i32
    scf.if %2 {
      %cst_72 = arith.constant 0.000000e+00 : f32
      %133 = vector.broadcast %cst_72 : f32 to vector<2x16xf32>
      %c0_73 = arith.constant 0 : index
      %c0_74 = arith.constant 0 : index
      %134 = vector.load %arg18[%c0_73, %c0_74] : memref<2x16xf32, #tpu.memory_space<vmem>>, vector<2x16xf32>
      tpu.vector_store %arg18[%c0_73, %c0_74], %133 {strides = array<i32>} : memref<2x16xf32, #tpu.memory_space<vmem>>, vector<2x16xf32>,
      %cst_75 = arith.constant 0.000000e+00 : f32
      %135 = vector.broadcast %cst_75 : f32 to vector<1x1xf32>
      %c0_76 = arith.constant 0 : index
      %c0_77 = arith.constant 0 : index
      %136 = vector.load %arg17[%c0_76, %c0_77] : memref<1x1xf32, #tpu.memory_space<vmem>>, vector<1x1xf32>
      tpu.vector_store %arg17[%c0_76, %c0_77], %135 {strides = array<i32>} : memref<1x1xf32, #tpu.memory_space<vmem>>, vector<1x1xf32>,
    } else {
    }
    %c0 = arith.constant 0 : index
    %c0_1 = arith.constant 0 : index
    %3 = vector.load %arg18[%c0, %c0_1] : memref<2x16xf32, #tpu.memory_space<vmem>>, vector<2x16xf32>
    %c0_2 = arith.constant 0 : index
    %c0_3 = arith.constant 0 : index
    %c0_4 = arith.constant 0 : index
    %c0_5 = arith.constant 0 : index
    %4 = vector.load %arg1[%c0_2, %c0_3, %c0_4, %c0_5] : memref<1x2x32x16xf32, #tpu.memory_space<vmem>>, vector<1x2x32x16xf32>
    %5 = vector.shape_cast %4 : vector<1x2x32x16xf32> to vector<2x32x16xf32>
    %6 = vector.shape_cast %3 : vector<2x16xf32> to vector<2x1x16xf32>
    %c0_6 = arith.constant 0 : index
    %c0_7 = arith.constant 0 : index
    %7 = vector.load %arg7[%c0_6, %c0_7] : memref<32x1xf32, #tpu.memory_space<vmem>>, vector<32x1xf32>
    %8 = vector.shape_cast %7 : vector<32x1xf32> to vector<1x32x1xf32>
    %9 = vector.broadcast %6 : vector<2x1x16xf32> to vector<2x32x16xf32>
    %10 = vector.broadcast %8 : vector<1x32x1xf32> to vector<2x32x16xf32>
    %11 = arith.mulf %9, %10 : vector<2x32x16xf32>
    %12 = arith.addf %5, %11 : vector<2x32x16xf32>
    %cst = arith.constant 5.000000e-01 : f32
    %13 = vector.broadcast %cst : f32 to vector<2x32x16xf32>
    %14 = arith.mulf %13, %12 : vector<2x32x16xf32>
    %cst_8 = arith.constant 4.471500e-02 : f32
    %15 = vector.broadcast %cst_8 : f32 to vector<2x32x16xf32>
    %16 = arith.mulf %15, %12 : vector<2x32x16xf32>
    %17 = arith.mulf %16, %12 : vector<2x32x16xf32>
    %18 = arith.mulf %17, %12 : vector<2x32x16xf32>
    %19 = arith.addf %12, %18 : vector<2x32x16xf32>
    %cst_9 = arith.constant 0.797884583 : f32
    %20 = vector.broadcast %cst_9 : f32 to vector<2x32x16xf32>
    %21 = arith.mulf %20, %19 : vector<2x32x16xf32>
    %22 = math.tanh %21 : vector<2x32x16xf32>
    %cst_10 = arith.constant 1.000000e+00 : f32
    %23 = vector.broadcast %cst_10 : f32 to vector<2x32x16xf32>
    %24 = arith.addf %23, %22 : vector<2x32x16xf32>
    %25 = arith.mulf %14, %24 : vector<2x32x16xf32>
    %c0_11 = arith.constant 0 : index
    %c0_12 = arith.constant 0 : index
    %26 = vector.load %arg8[%c0_11, %c0_12] : memref<32x1xf32, #tpu.memory_space<vmem>>, vector<32x1xf32>
    %27 = vector.shape_cast %26 : vector<32x1xf32> to vector<1x32x1xf32>
    %28 = vector.broadcast %27 : vector<1x32x1xf32> to vector<2x32x16xf32>
    %29 = arith.mulf %25, %28 : vector<2x32x16xf32>
    %cst_13 = arith.constant dense<0.000000e+00> : vector<2x16xf32>
    %30 = vector.multi_reduction <add>, %29, %cst_13 [1] : vector<2x32x16xf32> to vector<2x16xf32>
    %c0_14 = arith.constant 0 : index
    %c0_15 = arith.constant 0 : index
    %31 = vector.load %arg9[%c0_14, %c0_15] : memref<1x1xf32, #tpu.memory_space<vmem>>, vector<1x1xf32>
    %32 = vector.broadcast %31 : vector<1x1xf32> to vector<2x16xf32>
    %33 = arith.addf %30, %32 : vector<2x16xf32>
    %34 = arith.negf %33 : vector<2x16xf32>
    %35 = math.exp %34 : vector<2x16xf32>
    %cst_16 = arith.constant 1.000000e+00 : f32
    %36 = vector.broadcast %cst_16 : f32 to vector<2x16xf32>
    %37 = arith.addf %36, %35 : vector<2x16xf32>
    %38 = arith.divf %36, %37 : vector<2x16xf32>
    %c0_17 = arith.constant 0 : index
    %c0_18 = arith.constant 0 : index
    %c0_19 = arith.constant 0 : index
    %c0_20 = arith.constant 0 : index
    %39 = vector.load %arg2[%c0_17, %c0_18, %c0_19, %c0_20] : memref<1x2x32x16xf32, #tpu.memory_space<vmem>>, vector<1x2x32x16xf32>
    %40 = vector.shape_cast %39 : vector<1x2x32x16xf32> to vector<2x32x16xf32>
    %41 = vector.shape_cast %3 : vector<2x16xf32> to vector<2x1x16xf32>
    %c0_21 = arith.constant 0 : index
    %c0_22 = arith.constant 0 : index
    %42 = vector.load %arg10[%c0_21, %c0_22] : memref<32x1xf32, #tpu.memory_space<vmem>>, vector<32x1xf32>
    %43 = vector.shape_cast %42 : vector<32x1xf32> to vector<1x32x1xf32>
    %44 = vector.broadcast %41 : vector<2x1x16xf32> to vector<2x32x16xf32>
    %45 = vector.broadcast %43 : vector<1x32x1xf32> to vector<2x32x16xf32>
    %46 = arith.mulf %44, %45 : vector<2x32x16xf32>
    %47 = arith.addf %40, %46 : vector<2x32x16xf32>
    %cst_23 = arith.constant 5.000000e-01 : f32
    %48 = vector.broadcast %cst_23 : f32 to vector<2x32x16xf32>
    %49 = arith.mulf %48, %47 : vector<2x32x16xf32>
    %cst_24 = arith.constant 4.471500e-02 : f32
    %50 = vector.broadcast %cst_24 : f32 to vector<2x32x16xf32>
    %51 = arith.mulf %50, %47 : vector<2x32x16xf32>
    %52 = arith.mulf %51, %47 : vector<2x32x16xf32>
    %53 = arith.mulf %52, %47 : vector<2x32x16xf32>
    %54 = arith.addf %47, %53 : vector<2x32x16xf32>
    %cst_25 = arith.constant 0.797884583 : f32
    %55 = vector.broadcast %cst_25 : f32 to vector<2x32x16xf32>
    %56 = arith.mulf %55, %54 : vector<2x32x16xf32>
    %57 = math.tanh %56 : vector<2x32x16xf32>
    %cst_26 = arith.constant 1.000000e+00 : f32
    %58 = vector.broadcast %cst_26 : f32 to vector<2x32x16xf32>
    %59 = arith.addf %58, %57 : vector<2x32x16xf32>
    %60 = arith.mulf %49, %59 : vector<2x32x16xf32>
    %c0_27 = arith.constant 0 : index
    %c0_28 = arith.constant 0 : index
    %61 = vector.load %arg11[%c0_27, %c0_28] : memref<32x1xf32, #tpu.memory_space<vmem>>, vector<32x1xf32>
    %62 = vector.shape_cast %61 : vector<32x1xf32> to vector<1x32x1xf32>
    %63 = vector.broadcast %62 : vector<1x32x1xf32> to vector<2x32x16xf32>
    %64 = arith.mulf %60, %63 : vector<2x32x16xf32>
    %cst_29 = arith.constant dense<0.000000e+00> : vector<2x16xf32>
    %65 = vector.multi_reduction <add>, %64, %cst_29 [1] : vector<2x32x16xf32> to vector<2x16xf32>
    %c0_30 = arith.constant 0 : index
    %c0_31 = arith.constant 0 : index
    %66 = vector.load %arg12[%c0_30, %c0_31] : memref<1x1xf32, #tpu.memory_space<vmem>>, vector<1x1xf32>
    %67 = vector.broadcast %66 : vector<1x1xf32> to vector<2x16xf32>
    %68 = arith.addf %65, %67 : vector<2x16xf32>
    %69 = arith.negf %68 : vector<2x16xf32>
    %70 = math.exp %69 : vector<2x16xf32>
    %cst_32 = arith.constant 1.000000e+00 : f32
    %71 = vector.broadcast %cst_32 : f32 to vector<2x16xf32>
    %72 = arith.addf %71, %70 : vector<2x16xf32>
    %73 = arith.divf %71, %72 : vector<2x16xf32>
    %c0_33 = arith.constant 0 : index
    %c0_34 = arith.constant 0 : index
    %c0_35 = arith.constant 0 : index
    %74 = vector.load %arg4[%c0_33, %c0_34, %c0_35] : memref<2x16x16xf32, #tpu.memory_space<vmem>>, vector<2x16x16xf32>
    %75 = vector.shape_cast %38 : vector<2x16xf32> to vector<2x1x16xf32>
    %76 = vector.broadcast %75 : vector<2x1x16xf32> to vector<2x16x16xf32>
    %77 = arith.mulf %74, %76 : vector<2x16x16xf32>
    %cst_36 = arith.constant dense<0xFF800000> : vector<2x16xf32>
    %78 = vector.multi_reduction <maximumf>, %77, %cst_36 [2] : vector<2x16x16xf32> to vector<2x16xf32>
    %c0_37 = arith.constant 0 : index
    %c0_38 = arith.constant 0 : index
    %c0_39 = arith.constant 0 : index
    %79 = vector.load %arg5[%c0_37, %c0_38, %c0_39] : memref<2x16x16xf32, #tpu.memory_space<vmem>>, vector<2x16x16xf32>
    %80 = vector.shape_cast %73 : vector<2x16xf32> to vector<2x1x16xf32>
    %81 = vector.broadcast %80 : vector<2x1x16xf32> to vector<2x16x16xf32>
    %82 = arith.mulf %79, %81 : vector<2x16x16xf32>
    %cst_40 = arith.constant dense<0xFF800000> : vector<2x16xf32>
    %83 = vector.multi_reduction <maximumf>, %82, %cst_40 [2] : vector<2x16x16xf32> to vector<2x16xf32>
    %84 = arith.addf %78, %83 : vector<2x16xf32>
    %cst_41 = arith.constant 5.000000e-01 : f32
    %85 = vector.broadcast %cst_41 : f32 to vector<2x16xf32>
    %86 = arith.mulf %85, %84 : vector<2x16xf32>
    %c0_42 = arith.constant 0 : index
    %c0_43 = arith.constant 0 : index
    %c0_44 = arith.constant 0 : index
    %87 = vector.load %arg16[%c0_42, %c0_43, %c0_44] : memref<1x2x16xf32, #tpu.memory_space<vmem>>, vector<1x2x16xf32>
    %88 = vector.shape_cast %87 : vector<1x2x16xf32> to vector<2x16xf32>
    %89 = vector.shape_cast %86 : vector<2x16xf32> to vector<1x2x16xf32>
    tpu.vector_store %arg16[%c0_42, %c0_43, %c0_44], %89 {strides = array<i32>} : memref<1x2x16xf32, #tpu.memory_space<vmem>>, vector<1x2x16xf32>,
    %c0_45 = arith.constant 0 : index
    %c0_46 = arith.constant 0 : index
    %90 = vector.load %arg13[%c0_45, %c0_46] : memref<16x16xf32, #tpu.memory_space<vmem>>, vector<16x16xf32>
    %cst_47 = arith.constant dense<0.000000e+00> : vector<2x16xf32>
    %91 = tpu.matmul %86, %90, %cst_47 {dimension_numbers = #tpu.dot_dimension_numbers<[1], [0], [0], [1], [0, 0, 1, 1], [], []>} : vector<2x16xf32>, vector<16x16xf32>, vector<2x16xf32> -> vector<2x16xf32>
    %c0_48 = arith.constant 0 : index
    %c0_49 = arith.constant 0 : index
    %92 = vector.load %arg14[%c0_48, %c0_49] : memref<16x16xf32, #tpu.memory_space<vmem>>, vector<16x16xf32>
    %cst_50 = arith.constant dense<0.000000e+00> : vector<2x16xf32>
    %93 = tpu.matmul %3, %92, %cst_50 {dimension_numbers = #tpu.dot_dimension_numbers<[1], [0], [0], [1], [0, 0, 1, 1], [], []>} : vector<2x16xf32>, vector<16x16xf32>, vector<2x16xf32> -> vector<2x16xf32>
    %94 = arith.addf %91, %93 : vector<2x16xf32>
    %c0_51 = arith.constant 0 : index
    %c0_52 = arith.constant 0 : index
    %95 = vector.load %arg15[%c0_51, %c0_52] : memref<1x16xf32, #tpu.memory_space<vmem>>, vector<1x16xf32>
    %96 = vector.broadcast %95 : vector<1x16xf32> to vector<2x16xf32>
    %97 = arith.addf %94, %96 : vector<2x16xf32>
    %c0_53 = arith.constant 0 : index
    %c0_54 = arith.constant 0 : index
    %98 = vector.load %arg18[%c0_53, %c0_54] : memref<2x16xf32, #tpu.memory_space<vmem>>, vector<2x16xf32>
    tpu.vector_store %arg18[%c0_53, %c0_54], %97 {strides = array<i32>} : memref<2x16xf32, #tpu.memory_space<vmem>>, vector<2x16xf32>,
    %c0_55 = arith.constant 0 : index
    %c0_56 = arith.constant 0 : index
    %c0_57 = arith.constant 0 : index
    %99 = vector.load %arg3[%c0_55, %c0_56, %c0_57] : memref<1x2x16xf32, #tpu.memory_space<vmem>>, vector<1x2x16xf32>
    %100 = vector.shape_cast %99 : vector<1x2x16xf32> to vector<2x16xf32>
    %101 = math.log %86 : vector<2x16xf32>
    %cst_58 = arith.constant -1.000000e+02 : f32
    %102 = vector.broadcast %cst_58 : f32 to vector<2x16xf32>
    %103 = arith.maximumf %101, %102 : vector<2x16xf32>
    %cst_59 = arith.constant 1.000000e+00 : f32
    %104 = vector.broadcast %cst_59 : f32 to vector<2x16xf32>
    %105 = arith.subf %104, %86 : vector<2x16xf32>
    %106 = math.log %105 : vector<2x16xf32>
    %cst_60 = arith.constant -1.000000e+02 : f32
    %107 = vector.broadcast %cst_60 : f32 to vector<2x16xf32>
    %108 = arith.maximumf %106, %107 : vector<2x16xf32>
    %109 = arith.mulf %100, %103 : vector<2x16xf32>
    %cst_61 = arith.constant 1.000000e+00 : f32
    %110 = vector.broadcast %cst_61 : f32 to vector<2x16xf32>
    %111 = arith.subf %110, %100 : vector<2x16xf32>
    %112 = arith.mulf %111, %108 : vector<2x16xf32>
    %113 = arith.addf %109, %112 : vector<2x16xf32>
    %cst_62 = arith.constant 0.000000e+00 : f32
    %114 = vector.broadcast %cst_62 : f32 to vector<2x16xf32>
    %115 = arith.subf %114, %113 : vector<2x16xf32>
    %116 = vector.shape_cast %115 : vector<2x16xf32> to vector<1x2x16xf32>
    %cst_63 = arith.constant dense<0.000000e+00> : vector<1xf32>
    %117 = vector.multi_reduction <add>, %116, %cst_63 [1, 2] : vector<1x2x16xf32> to vector<1xf32>
    %118 = vector.shape_cast %117 : vector<1xf32> to vector<1x1x1xf32>
    %119 = vector.extract %118[0, 0, 0] : f32 from vector<1x1x1xf32>
    %120 = vector.broadcast %119 : f32 to vector<1x1xf32>
    %cst_64 = arith.constant 3.200000e+01 : f32
    %121 = vector.broadcast %cst_64 : f32 to vector<1x1xf32>
    %122 = arith.divf %120, %121 : vector<1x1xf32>
    %c0_65 = arith.constant 0 : index
    %c0_66 = arith.constant 0 : index
    %123 = vector.load %arg17[%c0_65, %c0_66] : memref<1x1xf32, #tpu.memory_space<vmem>>, vector<1x1xf32>
    %c0_67 = arith.constant 0 : index
    %c0_68 = arith.constant 0 : index
    %124 = vector.load %arg6[%c0_67, %c0_68] : memref<2x16xf32, #tpu.memory_space<vmem>>, vector<2x16xf32>
    %125 = vector.shape_cast %124 : vector<2x16xf32> to vector<1x2x16xf32>
    %cst_69 = arith.constant dense<0.000000e+00> : vector<1xf32>
    %126 = vector.multi_reduction <add>, %125, %cst_69 [1, 2] : vector<1x2x16xf32> to vector<1xf32>
    %127 = vector.shape_cast %126 : vector<1xf32> to vector<1x1x1xf32>
    %128 = vector.extract %127[0, 0, 0] : f32 from vector<1x1x1xf32>
    %129 = vector.broadcast %128 : f32 to vector<1x1xf32>
    %130 = arith.mulf %122, %129 : vector<1x1xf32>
    %131 = arith.addf %123, %130 : vector<1x1xf32>
    %c0_70 = arith.constant 0 : index
    %c0_71 = arith.constant 0 : index
    %132 = vector.load %arg17[%c0_70, %c0_71] : memref<1x1xf32, #tpu.memory_space<vmem>>, vector<1x1xf32>
    tpu.vector_store %arg17[%c0_70, %c0_71], %131 {strides = array<i32>} : memref<1x1xf32, #tpu.memory_space<vmem>>, vector<1x1xf32>,
    return
  }
  func.func @transform_0(%arg0: i32) -> (i32, i32, i32, i32) {
    %c0_i32 = arith.constant 0 : i32
    %c0_i32_0 = arith.constant 0 : i32
    %c0_i32_1 = arith.constant 0 : i32
    %c0_i32_2 = arith.constant 0 : i32
    return %arg0, %c0_i32, %c0_i32_0, %c0_i32_1 : i32, i32, i32, i32
  }
  func.func @transform_1(%arg0: i32) -> (i32, i32, i32, i32) {
    %c0_i32 = arith.constant 0 : i32
    %c0_i32_0 = arith.constant 0 : i32
    %c0_i32_1 = arith.constant 0 : i32
    %c0_i32_2 = arith.constant 0 : i32
    return %arg0, %c0_i32, %c0_i32_0, %c0_i32_1 : i32, i32, i32, i32
  }
  func.func @transform_2(%arg0: i32) -> (i32, i32, i32) {
    %c0_i32 = arith.constant 0 : i32
    %c0_i32_0 = arith.constant 0 : i32
    %c0_i32_1 = arith.constant 0 : i32
    return %arg0, %c0_i32, %c0_i32_0 : i32, i32, i32
  }
  func.func @transform_3(%arg0: i32) -> (i32, i32, i32) {
    %c0_i32 = arith.constant 0 : i32
    %c0_i32_0 = arith.constant 0 : i32
    %c0_i32_1 = arith.constant 0 : i32
    %c0_i32_2 = arith.constant 0 : i32
    return %c0_i32, %c0_i32_0, %c0_i32_1 : i32, i32, i32
  }
  func.func @transform_4(%arg0: i32) -> (i32, i32, i32) {
    %c0_i32 = arith.constant 0 : i32
    %c0_i32_0 = arith.constant 0 : i32
    %c0_i32_1 = arith.constant 0 : i32
    %c0_i32_2 = arith.constant 0 : i32
    return %c0_i32, %c0_i32_0, %c0_i32_1 : i32, i32, i32
  }
  func.func @transform_5(%arg0: i32) -> (i32, i32) {
    %c0_i32 = arith.constant 0 : i32
    %c0_i32_0 = arith.constant 0 : i32
    %c0_i32_1 = arith.constant 0 : i32
    return %c0_i32, %c0_i32_0 : i32, i32
  }
  func.func @transform_6(%arg0: i32) -> (i32, i32) {
    %c0_i32 = arith.constant 0 : i32
    %c0_i32_0 = arith.constant 0 : i32
    %c0_i32_1 = arith.constant 0 : i32
    return %c0_i32, %c0_i32_0 : i32, i32
  }
  func.func @transform_7(%arg0: i32) -> (i32, i32) {
    %c0_i32 = arith.constant 0 : i32
    %c0_i32_0 = arith.constant 0 : i32
    %c0_i32_1 = arith.constant 0 : i32
    return %c0_i32, %c0_i32_0 : i32, i32
  }
  func.func @transform_8(%arg0: i32) -> (i32, i32) {
    %c0_i32 = arith.constant 0 : i32
    %c0_i32_0 = arith.constant 0 : i32
    %c0_i32_1 = arith.constant 0 : i32
    return %c0_i32, %c0_i32_0 : i32, i32
  }
  func.func @transform_9(%arg0: i32) -> (i32, i32) {
    %c0_i32 = arith.constant 0 : i32
    %c0_i32_0 = arith.constant 0 : i32
    %c0_i32_1 = arith.constant 0 : i32
    return %c0_i32, %c0_i32_0 : i32, i32
  }
  func.func @transform_10(%arg0: i32) -> (i32, i32) {
    %c0_i32 = arith.constant 0 : i32
    %c0_i32_0 = arith.constant 0 : i32
    %c0_i32_1 = arith.constant 0 : i32
    return %c0_i32, %c0_i32_0 : i32, i32
  }
  func.func @transform_11(%arg0: i32) -> (i32, i32) {
    %c0_i32 = arith.constant 0 : i32
    %c0_i32_0 = arith.constant 0 : i32
    %c0_i32_1 = arith.constant 0 : i32
    return %c0_i32, %c0_i32_0 : i32, i32
  }
  func.func @transform_12(%arg0: i32) -> (i32, i32) {
    %c0_i32 = arith.constant 0 : i32
    %c0_i32_0 = arith.constant 0 : i32
    %c0_i32_1 = arith.constant 0 : i32
    return %c0_i32, %c0_i32_0 : i32, i32
  }
  func.func @transform_13(%arg0: i32) -> (i32, i32) {
    %c0_i32 = arith.constant 0 : i32
    %c0_i32_0 = arith.constant 0 : i32
    %c0_i32_1 = arith.constant 0 : i32
    return %c0_i32, %c0_i32_0 : i32, i32
  }
  func.func @transform_14(%arg0: i32) -> (i32, i32) {
    %c0_i32 = arith.constant 0 : i32
    %c0_i32_0 = arith.constant 0 : i32
    %c0_i32_1 = arith.constant 0 : i32
    return %c0_i32, %c0_i32_0 : i32, i32
  }
  func.func @transform_15(%arg0: i32) -> (i32, i32, i32) {
    %c0_i32 = arith.constant 0 : i32
    %c0_i32_0 = arith.constant 0 : i32
    %c0_i32_1 = arith.constant 0 : i32
    return %arg0, %c0_i32, %c0_i32_0 : i32, i32, i32
  }
  func.func @transform_16(%arg0: i32) -> (i32, i32) {
    %c0_i32 = arith.constant 0 : i32
    %c0_i32_0 = arith.constant 0 : i32
    %c0_i32_1 = arith.constant 0 : i32
    return %c0_i32, %c0_i32_0 : i32, i32
  }
}

</mosaic_0001>

<llo_original>
// kernel: _forward_device.2
$region0: #{_forward_device.2}
  #allocation0 [shape = 'u32[]', space=smem, size = 0x4, offset = 0x4, fixed_abs, tag = 'smem constant byte address 0x4 - core index']
  #allocation1 [shape = 'u32[144,128]{1,0:T(1,128)}', space=vmem, size = 0x12000, scoped, tag = 'internal scratch']
  #allocation2 [shape = 'f32[32,32]{1,0:T(8,128)}', space=vmem, size = 0x4000, scoped, tag = 'scratch operand']
  #allocation3 [shape = 'f32[32,32]{1,0:T(8,128)}', space=vmem, size = 0x4000, scoped, tag = 'scratch operand']
  %s0 = inlined_call_operand.vmem [shape: f32[32,32], index: 0, kind: input, shape index: {}]
  %s1 = inlined_call_operand.vmem [shape: f32[32,32], index: 1, kind: input, shape index: {}]
  %s2 = inlined_call_operand.vmem [shape: f32[32,32], index: 2, kind: input, shape index: {}]
  %s3 = inlined_call_operand.vmem [shape: f32[64,32], index: 3, kind: input, shape index: {}]
  %s4 = inlined_call_operand.vmem [shape: f32[32,32], index: 4, kind: input, shape index: {}]
  %s5 = inlined_call_operand.vmem [shape: f32[32,32], index: 5, kind: input, shape index: {}]
  %s6 = inlined_call_operand.vmem [shape: f32[32,32], index: 6, kind: input, shape index: {}]
  %s7 = inlined_call_operand.vmem [shape: f32[1,32], index: 7, kind: input, shape index: {}]
  %s8 = inlined_call_operand.vmem [shape: f32[32,32], index: 8, kind: input, shape index: {}]
  %s9 = inlined_call_operand.vmem [shape: f32[32,32], index: 9, kind: input, shape index: {}]
  %s10 = inlined_call_operand.vmem [shape: f32[32,32], index: 10, kind: input, shape index: {}]
  %s11 = inlined_call_operand.vmem [shape: f32[1,32], index: 11, kind: input, shape index: {}]
  %s12 = inlined_call_operand.vmem [shape: f32[64,32], index: 12, kind: output, shape index: {0}]
  %s13 = inlined_call_operand.vmem [shape: f32[64,32], index: 13, kind: output, shape index: {1}]
  %14 = xla_tuple %s12, %s13
  %s15 = sld [smem:[#allocation0]]
  $region93: #{_forward_device.2} parent=0
    _
  %s17 = ssub.s32 1, %s15
  %s18 = scalar_select 0, %s17, %s15
  loop: start=0, step=1, limit=4
  $region2: #{_forward_device.2} parent=0 // loop_pre_header
    _
  $region3: #{_forward_device.2} parent=0 // loop_header
    %s20 = sphi 0, %s24
    %p21 = scmp.ge.s32.totalorder %s20, 4
    %s28 = sphi 0, %s28
    %s30 = sphi 0, %s28
    %s31 = sphi 0, %s30
    %s45 = sphi 0, %s31
    %s49 = sphi 0, %s49
    %s51 = sphi 0, %s49
    %s52 = sphi 0, %s51
    %s66 = sphi 0, %s52
    %s70 = sphi 0, %s70
    %s72 = sphi 0, %s70
    %s73 = sphi 0, %s72
    %s87 = sphi 0, %s73
    %s93 = sphi 0, %s95
    %s96 = sphi 0, %s93
    %s97 = sphi 0, %s96
    %s113 = sphi 0, %s97
    %s117 = sphi 0, %s117
    %s119 = sphi 0, %s117
    %s120 = sphi 0, %s119
    %s134 = sphi 0, %s120
    %s138 = sphi 0, %s138
    %s140 = sphi 0, %s138
    %s141 = sphi 0, %s140
    %s155 = sphi 0, %s141
    %s159 = sphi 0, %s159
    %s161 = sphi 0, %s159
    %s162 = sphi 0, %s161
    %s176 = sphi 0, %s162
    %s180 = sphi 0, %s180
    %s182 = sphi 0, %s180
    %s183 = sphi 0, %s182
    %s197 = sphi 0, %s183
    %s201 = sphi 0, %s201
    %s203 = sphi 0, %s201
    %s204 = sphi 0, %s203
    %s218 = sphi 0, %s204
    %s222 = sphi 0, %s222
    %s224 = sphi 0, %s222
    %s225 = sphi 0, %s224
    %s239 = sphi 0, %s225
    %s243 = sphi 0, %s243
    %s245 = sphi 0, %s243
    %s246 = sphi 0, %s245
    %s260 = sphi 0, %s246
    %s264 = sphi 0, %s264
    %s266 = sphi 0, %s264
    %s267 = sphi 0, %s266
    %s281 = sphi 0, %s267
    %s287 = sphi 0, %s289
    %s290 = sphi 0, %s287
    %s291 = sphi 0, %s290
    %s307 = sphi 0, %s291
    %s313 = sphi 0, %s315
    %s316 = sphi 0, %s313
    %s317 = sphi 0, %s316
    %s333 = sphi 0, %s317
  $region4: #{_forward_device.2} parent=0 // loop_header_branch
    %23 = sbr.rel (%p21) target = $region8
  $region5: #{_forward_device.2} parent=0 // loop_body
    %s25 = ssub.s32 %s20, 1
    %s26 = ssub.s32 %s20, 2
    %s27 = sadd.s32 %s20, 1
    %s29 = sadd.s32 %s28, 1
    %p32 = scmp.eq.s32.totalorder %s20, 1
    %p33 = scmp.ne.s32.totalorder %s28, %s30
    %p34 = scmp.eq.s32.totalorder %s20, 0
    %p35 = por %p33, %p34
    %p36 = scmp.ne.s32.totalorder %s28, %s30
    %p37 = scmp.eq.s32.totalorder %s25, 1
    %p38 = por %p36, %p37
    %p39 = scmp.ne.s32.totalorder %s30, %s31
    %p40 = scmp.eq.s32.totalorder %s25, 0
    %p41 = por %p39, %p40
    %p42 = scmp.ne.s32.totalorder %s30, %s31
    %p43 = scmp.eq.s32.totalorder %s26, 1
    %p44 = por %p42, %p43
    %p46 = scmp.ne.s32.totalorder %s31, %s45
    %p47 = scmp.eq.s32.totalorder %s26, 0
    %p48 = por %p46, %p47
    %s50 = sadd.s32 %s49, 1
    %p53 = scmp.eq.s32.totalorder %s20, 1
    %p54 = scmp.ne.s32.totalorder %s49, %s51
    %p55 = scmp.eq.s32.totalorder %s20, 0
    %p56 = por %p54, %p55
    %p57 = scmp.ne.s32.totalorder %s49, %s51
    %p58 = scmp.eq.s32.totalorder %s25, 1
    %p59 = por %p57, %p58
    %p60 = scmp.ne.s32.totalorder %s51, %s52
    %p61 = scmp.eq.s32.totalorder %s25, 0
    %p62 = por %p60, %p61
    %p63 = scmp.ne.s32.totalorder %s51, %s52
    %p64 = scmp.eq.s32.totalorder %s26, 1
    %p65 = por %p63, %p64
    %p67 = scmp.ne.s32.totalorder %s52, %s66
    %p68 = scmp.eq.s32.totalorder %s26, 0
    %p69 = por %p67, %p68
    %s71 = sadd.s32 %s70, 1
    %p74 = scmp.eq.s32.totalorder %s20, 1
    %p75 = scmp.ne.s32.totalorder %s70, %s72
    %p76 = scmp.eq.s32.totalorder %s20, 0
    %p77 = por %p75, %p76
    %p78 = scmp.ne.s32.totalorder %s70, %s72
    %p79 = scmp.eq.s32.totalorder %s25, 1
    %p80 = por %p78, %p79
    %p81 = scmp.ne.s32.totalorder %s72, %s73
    %p82 = scmp.eq.s32.totalorder %s25, 0
    %p83 = por %p81, %p82
    %p84 = scmp.ne.s32.totalorder %s72, %s73
    %p85 = scmp.eq.s32.totalorder %s26, 1
    %p86 = por %p84, %p85
    %p88 = scmp.ne.s32.totalorder %s73, %s87
    %p89 = scmp.eq.s32.totalorder %s26, 0
    %p90 = por %p88, %p89
    %s91 = ssub.s32 %s20, %s27
    %p92 = scmp.eq.s32.totalorder %s91, 0
    %s94 = sadd.s32 %s93, 1
    %s95 = scalar_select %p92, %s93, %s94
    %p98 = pneg %p92
    %p99 = scmp.eq.s32.totalorder %s20, 1
    %p100 = por %p98, %p99
    %p101 = scmp.ne.s32.totalorder %s93, %s96
    %p102 = scmp.eq.s32.totalorder %s20, 0
    %p103 = por %p101, %p102
    %p104 = scmp.ne.s32.totalorder %s93, %s96
    %p105 = scmp.eq.s32.totalorder %s25, 1
    %p106 = por %p104, %p105
    %p107 = scmp.ne.s32.totalorder %s96, %s97
    %p108 = scmp.eq.s32.totalorder %s25, 0
    %p109 = por %p107, %p108
    %p110 = scmp.ne.s32.totalorder %s96, %s97
    %p111 = scmp.eq.s32.totalorder %s26, 1
    %p112 = por %p110, %p111
    %p114 = scmp.ne.s32.totalorder %s97, %s113
    %p115 = scmp.eq.s32.totalorder %s26, 0
    %p116 = por %p114, %p115
    %s118 = sadd.s32 %s117, 1
    %p121 = scmp.eq.s32.totalorder %s20, 1
    %p122 = scmp.ne.s32.totalorder %s117, %s119
    %p123 = scmp.eq.s32.totalorder %s20, 0
    %p124 = por %p122, %p123
    %p125 = scmp.ne.s32.totalorder %s117, %s119
    %p126 = scmp.eq.s32.totalorder %s25, 1
    %p127 = por %p125, %p126
    %p128 = scmp.ne.s32.totalorder %s119, %s120
    %p129 = scmp.eq.s32.totalorder %s25, 0
    %p130 = por %p128, %p129
    %p131 = scmp.ne.s32.totalorder %s119, %s120
    %p132 = scmp.eq.s32.totalorder %s26, 1
    %p133 = por %p131, %p132
    %p135 = scmp.ne.s32.totalorder %s120, %s134
    %p136 = scmp.eq.s32.totalorder %s26, 0
    %p137 = por %p135, %p136
    %s139 = sadd.s32 %s138, 1
    %p142 = scmp.eq.s32.totalorder %s20, 1
    %p143 = scmp.ne.s32.totalorder %s138, %s140
    %p144 = scmp.eq.s32.totalorder %s20, 0
    %p145 = por %p143, %p144
    %p146 = scmp.ne.s32.totalorder %s138, %s140
    %p147 = scmp.eq.s32.totalorder %s25, 1
    %p148 = por %p146, %p147
    %p149 = scmp.ne.s32.totalorder %s140, %s141
    %p150 = scmp.eq.s32.totalorder %s25, 0
    %p151 = por %p149, %p150
    %p152 = scmp.ne.s32.totalorder %s140, %s141
    %p153 = scmp.eq.s32.totalorder %s26, 1
    %p154 = por %p152, %p153
    %p156 = scmp.ne.s32.totalorder %s141, %s155
    %p157 = scmp.eq.s32.totalorder %s26, 0
    %p158 = por %p156, %p157
    %s160 = sadd.s32 %s159, 1
    %p163 = scmp.eq.s32.totalorder %s20, 1
    %p164 = scmp.ne.s32.totalorder %s159, %s161
    %p165 = scmp.eq.s32.totalorder %s20, 0
    %p166 = por %p164, %p165
    %p167 = scmp.ne.s32.totalorder %s159, %s161
    %p168 = scmp.eq.s32.totalorder %s25, 1
    %p169 = por %p167, %p168
    %p170 = scmp.ne.s32.totalorder %s161, %s162
    %p171 = scmp.eq.s32.totalorder %s25, 0
    %p172 = por %p170, %p171
    %p173 = scmp.ne.s32.totalorder %s161, %s162
    %p174 = scmp.eq.s32.totalorder %s26, 1
    %p175 = por %p173, %p174
    %p177 = scmp.ne.s32.totalorder %s162, %s176
    %p178 = scmp.eq.s32.totalorder %s26, 0
    %p179 = por %p177, %p178
    %s181 = sadd.s32 %s180, 1
    %p184 = scmp.eq.s32.totalorder %s20, 1
    %p185 = scmp.ne.s32.totalorder %s180, %s182
    %p186 = scmp.eq.s32.totalorder %s20, 0
    %p187 = por %p185, %p186
    %p188 = scmp.ne.s32.totalorder %s180, %s182
    %p189 = scmp.eq.s32.totalorder %s25, 1
    %p190 = por %p188, %p189
    %p191 = scmp.ne.s32.totalorder %s182, %s183
    %p192 = scmp.eq.s32.totalorder %s25, 0
    %p193 = por %p191, %p192
    %p194 = scmp.ne.s32.totalorder %s182, %s183
    %p195 = scmp.eq.s32.totalorder %s26, 1
    %p196 = por %p194, %p195
    %p198 = scmp.ne.s32.totalorder %s183, %s197
    %p199 = scmp.eq.s32.totalorder %s26, 0
    %p200 = por %p198, %p199
    %s202 = sadd.s32 %s201, 1
    %p205 = scmp.eq.s32.totalorder %s20, 1
    %p206 = scmp.ne.s32.totalorder %s201, %s203
    %p207 = scmp.eq.s32.totalorder %s20, 0
    %p208 = por %p206, %p207
    %p209 = scmp.ne.s32.totalorder %s201, %s203
    %p210 = scmp.eq.s32.totalorder %s25, 1
    %p211 = por %p209, %p210
    %p212 = scmp.ne.s32.totalorder %s203, %s204
    %p213 = scmp.eq.s32.totalorder %s25, 0
    %p214 = por %p212, %p213
    %p215 = scmp.ne.s32.totalorder %s203, %s204
    %p216 = scmp.eq.s32.totalorder %s26, 1
    %p217 = por %p215, %p216
    %p219 = scmp.ne.s32.totalorder %s204, %s218
    %p220 = scmp.eq.s32.totalorder %s26, 0
    %p221 = por %p219, %p220
    %s223 = sadd.s32 %s222, 1
    %p226 = scmp.eq.s32.totalorder %s20, 1
    %p227 = scmp.ne.s32.totalorder %s222, %s224
    %p228 = scmp.eq.s32.totalorder %s20, 0
    %p229 = por %p227, %p228
    %p230 = scmp.ne.s32.totalorder %s222, %s224
    %p231 = scmp.eq.s32.totalorder %s25, 1
    %p232 = por %p230, %p231
    %p233 = scmp.ne.s32.totalorder %s224, %s225
    %p234 = scmp.eq.s32.totalorder %s25, 0
    %p235 = por %p233, %p234
    %p236 = scmp.ne.s32.totalorder %s224, %s225
    %p237 = scmp.eq.s32.totalorder %s26, 1
    %p238 = por %p236, %p237
    %p240 = scmp.ne.s32.totalorder %s225, %s239
    %p241 = scmp.eq.s32.totalorder %s26, 0
    %p242 = por %p240, %p241
    %s244 = sadd.s32 %s243, 1
    %p247 = scmp.eq.s32.totalorder %s20, 1
    %p248 = scmp.ne.s32.totalorder %s243, %s245
    %p249 = scmp.eq.s32.totalorder %s20, 0
    %p250 = por %p248, %p249
    %p251 = scmp.ne.s32.totalorder %s243, %s245
    %p252 = scmp.eq.s32.totalorder %s25, 1
    %p253 = por %p251, %p252
    %p254 = scmp.ne.s32.totalorder %s245, %s246
    %p255 = scmp.eq.s32.totalorder %s25, 0
    %p256 = por %p254, %p255
    %p257 = scmp.ne.s32.totalorder %s245, %s246
    %p258 = scmp.eq.s32.totalorder %s26, 1
    %p259 = por %p257, %p258
    %p261 = scmp.ne.s32.totalorder %s246, %s260
    %p262 = scmp.eq.s32.totalorder %s26, 0
    %p263 = por %p261, %p262
    %s265 = sadd.s32 %s264, 1
    %p268 = scmp.eq.s32.totalorder %s20, 1
    %p269 = scmp.ne.s32.totalorder %s264, %s266
    %p270 = scmp.eq.s32.totalorder %s20, 0
    %p271 = por %p269, %p270
    %p272 = scmp.ne.s32.totalorder %s264, %s266
    %p273 = scmp.eq.s32.totalorder %s25, 1
    %p274 = por %p272, %p273
    %p275 = scmp.ne.s32.totalorder %s266, %s267
    %p276 = scmp.eq.s32.totalorder %s25, 0
    %p277 = por %p275, %p276
    %p278 = scmp.ne.s32.totalorder %s266, %s267
    %p279 = scmp.eq.s32.totalorder %s26, 1
    %p280 = por %p278, %p279
    %p282 = scmp.ne.s32.totalorder %s267, %s281
    %p283 = scmp.eq.s32.totalorder %s26, 0
    %p284 = por %p282, %p283
    %s285 = ssub.s32 %s20, %s27
    %p286 = scmp.eq.s32.totalorder %s285, 0
    %s288 = sadd.s32 %s287, 1
    %s289 = scalar_select %p286, %s287, %s288
    %p292 = pneg %p286
    %p293 = scmp.eq.s32.totalorder %s20, 1
    %p294 = por %p292, %p293
    %p295 = scmp.ne.s32.totalorder %s287, %s290
    %p296 = scmp.eq.s32.totalorder %s20, 0
    %p297 = por %p295, %p296
    %p298 = scmp.ne.s32.totalorder %s287, %s290
    %p299 = scmp.eq.s32.totalorder %s25, 1
    %p300 = por %p298, %p299
    %p301 = scmp.ne.s32.totalorder %s290, %s291
    %p302 = scmp.eq.s32.totalorder %s25, 0
    %p303 = por %p301, %p302
    %p304 = scmp.ne.s32.totalorder %s290, %s291
    %p305 = scmp.eq.s32.totalorder %s26, 1
    %p306 = por %p304, %p305
    %p308 = scmp.ne.s32.totalorder %s291, %s307
    %p309 = scmp.eq.s32.totalorder %s26, 0
    %p310 = por %p308, %p309
    %s311 = ssub.s32 %s20, %s27
    %p312 = scmp.eq.s32.totalorder %s311, 0
    %s314 = sadd.s32 %s313, 1
    %s315 = scalar_select %p312, %s313, %s314
    %p318 = pneg %p312
    %p319 = scmp.eq.s32.totalorder %s20, 1
    %p320 = por %p318, %p319
    %p321 = scmp.ne.s32.totalorder %s313, %s316
    %p322 = scmp.eq.s32.totalorder %s20, 0
    %p323 = por %p321, %p322
    %p324 = scmp.ne.s32.totalorder %s313, %s316
    %p325 = scmp.eq.s32.totalorder %s25, 1
    %p326 = por %p324, %p325
    %p327 = scmp.ne.s32.totalorder %s316, %s317
    %p328 = scmp.eq.s32.totalorder %s25, 0
    %p329 = por %p327, %p328
    %p330 = scmp.ne.s32.totalorder %s316, %s317
    %p331 = scmp.eq.s32.totalorder %s26, 1
    %p332 = por %p330, %p331
    %p334 = scmp.ne.s32.totalorder %s317, %s333
    %p335 = scmp.eq.s32.totalorder %s26, 0
    %p336 = por %p334, %p335
    %p337 = scmp.le.s32.totalorder 1, %s20
    %p338 = scmp.lt.s32.totalorder %s20, 3
    %p339 = pnand %p337, %p338
    %p340 = pneg %p339
    // Predicated region
    $region9: #{_forward_device.2} parent=5 // pred_check
      _
    $region10: #{_forward_device.2} parent=5 // pred_check_branch
      %342 = sbr.rel (%p339) target = $region12
    $region11: #{_forward_device.2} parent=5 // pred_region
      %s343 = ssub.s32 %s20, 1
      // Predicated region
      $region13: #{_forward_device.2} parent=11 // pred_check
        %p344 = pneg %p41
      $region14: #{_forward_device.2} parent=11 // pred_check_branch
        %346 = sbr.rel (%p344) target = $region16
      $region15: #{_forward_device.2} parent=11 // pred_region
        _
      $region16: #{_forward_device.2} parent=11 // pred_fallthru
        _
      // Predicated region
      $region17: #{_forward_device.2} parent=11 // pred_check
        %p347 = pneg %p62
      $region18: #{_forward_device.2} parent=11 // pred_check_branch
        %349 = sbr.rel (%p347) target = $region20
      $region19: #{_forward_device.2} parent=11 // pred_region
        _
      $region20: #{_forward_device.2} parent=11 // pred_fallthru
        _
      // Predicated region
      $region21: #{_forward_device.2} parent=11 // pred_check
        %p350 = pneg %p83
      $region22: #{_forward_device.2} parent=11 // pred_check_branch
        %352 = sbr.rel (%p350) target = $region24
      $region23: #{_forward_device.2} parent=11 // pred_region
        _
      $region24: #{_forward_device.2} parent=11 // pred_fallthru
        _
      // Predicated region
      $region25: #{_forward_device.2} parent=11 // pred_check
        %p353 = pneg %p130
      $region26: #{_forward_device.2} parent=11 // pred_check_branch
        %355 = sbr.rel (%p353) target = $region28
      $region27: #{_forward_device.2} parent=11 // pred_region
        _
      $region28: #{_forward_device.2} parent=11 // pred_fallthru
        _
      // Predicated region
      $region29: #{_forward_device.2} parent=11 // pred_check
        %p356 = pneg %p151
      $region30: #{_forward_device.2} parent=11 // pred_check_branch
        %358 = sbr.rel (%p356) target = $region32
      $region31: #{_forward_device.2} parent=11 // pred_region
        _
      $region32: #{_forward_device.2} parent=11 // pred_fallthru
        _
      // Predicated region
      $region33: #{_forward_device.2} parent=11 // pred_check
        %p359 = pneg %p172
      $region34: #{_forward_device.2} parent=11 // pred_check_branch
        %361 = sbr.rel (%p359) target = $region36
      $region35: #{_forward_device.2} parent=11 // pred_region
        _
      $region36: #{_forward_device.2} parent=11 // pred_fallthru
        _
      // Predicated region
      $region37: #{_forward_device.2} parent=11 // pred_check
        %p362 = pneg %p193
      $region38: #{_forward_device.2} parent=11 // pred_check_branch
        %364 = sbr.rel (%p362) target = $region40
      $region39: #{_forward_device.2} parent=11 // pred_region
        _
      $region40: #{_forward_device.2} parent=11 // pred_fallthru
        _
      // Predicated region
      $region41: #{_forward_device.2} parent=11 // pred_check
        %p365 = pneg %p214
      $region42: #{_forward_device.2} parent=11 // pred_check_branch
        %367 = sbr.rel (%p365) target = $region44
      $region43: #{_forward_device.2} parent=11 // pred_region
        _
      $region44: #{_forward_device.2} parent=11 // pred_fallthru
        _
      // Predicated region
      $region45: #{_forward_device.2} parent=11 // pred_check
        %p368 = pneg %p235
      $region46: #{_forward_device.2} parent=11 // pred_check_branch
        %370 = sbr.rel (%p368) target = $region48
      $region47: #{_forward_device.2} parent=11 // pred_region
        _
      $region48: #{_forward_device.2} parent=11 // pred_fallthru
        _
      // Predicated region
      $region49: #{_forward_device.2} parent=11 // pred_check
        %p371 = pneg %p256
      $region50: #{_forward_device.2} parent=11 // pred_check_branch
        %373 = sbr.rel (%p371) target = $region52
      $region51: #{_forward_device.2} parent=11 // pred_region
        _
      $region52: #{_forward_device.2} parent=11 // pred_fallthru
        _
      // Predicated region
      $region53: #{_forward_device.2} parent=11 // pred_check
        %p374 = pneg %p277
      $region54: #{_forward_device.2} parent=11 // pred_check_branch
        %376 = sbr.rel (%p374) target = $region56
      $region55: #{_forward_device.2} parent=11 // pred_region
        _
      $region56: #{_forward_device.2} parent=11 // pred_fallthru
        _
    $region12: #{_forward_device.2} parent=5 // pred_fallthru
      _
    %p377 = scmp.lt.s32.totalorder %s20, 2
    // Predicated region
    $region57: #{_forward_device.2} parent=5 // pred_check
      %p378 = pneg %p377
    $region58: #{_forward_device.2} parent=5 // pred_check_branch
      %380 = sbr.rel (%p378) target = $region60
    $region59: #{_forward_device.2} parent=5 // pred_region
      // Predicated region
      $region61: #{_forward_device.2} parent=59 // pred_check
        %p381 = pneg %p103
      $region62: #{_forward_device.2} parent=59 // pred_check_branch
        %383 = sbr.rel (%p381) target = $region64
      $region63: #{_forward_device.2} parent=59 // pred_region
        %s384 = smul.u32 4, %s20
        %p385 = scmp.lt.s32.totalorder %s384, 7
        %s386 = scalar_select %p385, %s384, 7
        %s387 = smul.addr %s386, 8
        %s388 = scalar_lea.vmem %s3, %s387
        %s389 = smul.u32 4, %s20
      $region64: #{_forward_device.2} parent=59 // pred_fallthru
        _
    $region60: #{_forward_device.2} parent=5 // pred_fallthru
      _
    %p390 = scmp.le.s32.totalorder 1, %s20
    %p391 = scmp.lt.s32.totalorder %s20, 3
    %p392 = pnand %p390, %p391
    %p393 = pneg %p392
    // Predicated region
    $region65: #{_forward_device.2} parent=5 // pred_check
      _
    $region66: #{_forward_device.2} parent=5 // pred_check_branch
      %395 = sbr.rel (%p392) target = $region68
    $region67: #{_forward_device.2} parent=5 // pred_region
      %s396 = ssub.s32 %s20, 1
      %p397 = pneg %p41
      %p398 = pneg %p38
      %p399 = pneg %p62
      %p400 = pneg %p59
      %p401 = pneg %p83
      %p402 = pneg %p80
      %s403 = smul.u32 4, %s25
      %p404 = scmp.lt.s32.totalorder %s403, 7
      %s405 = scalar_select %p404, %s403, 7
      %s406 = smul.addr %s405, 8
      %s407 = scalar_lea.vmem %s3, %s406
      %p408 = pneg %p109
      %p409 = pneg %p106
      %p410 = pneg %p130
      %p411 = pneg %p127
      %p412 = pneg %p151
      %p413 = pneg %p148
      %p414 = pneg %p172
      %p415 = pneg %p169
      %p416 = pneg %p193
      %p417 = pneg %p190
      %p418 = pneg %p214
      %p419 = pneg %p211
      %p420 = pneg %p235
      %p421 = pneg %p232
      %p422 = pneg %p256
      %p423 = pneg %p253
      %p424 = pneg %p277
      %p425 = pneg %p274
      %p426 = pneg %p303
      %p427 = pneg %p300
      %s428 = smul.u32 4, %s25
      %p429 = scmp.lt.s32.totalorder %s428, 7
      %s430 = scalar_select %p429, %s428, 7
      %s431 = smul.addr %s430, 8
      %s432 = scalar_lea.vmem %s12, %s431
      %p433 = pneg %p329
      %p434 = pneg %p326
      %s435 = smul.u32 4, %s25
      %p436 = scmp.lt.s32.totalorder %s435, 7
      %s437 = scalar_select %p436, %s435, 7
      %s438 = smul.addr %s437, 8
      %s439 = scalar_lea.vmem %s13, %s438
      %s440 = smul.u32 4, %s25
      %p441 = scmp.lt.s32.totalorder %s440, 7
      %s442 = scalar_select %p441, %s440, 7
      %s443 = smul.addr %s442, 8
      %s444 = scalar_lea.vmem %s3, %s443
      %s445 = smul.u32 4, %s25
      %s446 = smul.u32 4, %s25
      %p447 = scmp.lt.s32.totalorder %s446, 7
      %s448 = scalar_select %p447, %s446, 7
      %s449 = smul.addr %s448, 8
      %s450 = scalar_lea.vmem %s12, %s449
      %s451 = smul.u32 4, %s25
      %s452 = smul.u32 4, %s25
      %p453 = scmp.lt.s32.totalorder %s452, 7
      %s454 = scalar_select %p453, %s452, 7
      %s455 = smul.addr %s454, 8
      %s456 = scalar_lea.vmem %s13, %s455
      %s457 = smul.u32 4, %s25
      %p458 = scmp.eq.s32.totalorder %s25, 0
      // Predicated region
      $region69: #{_forward_device.2} parent=67 // pred_check
        %p459 = pneg %p458
      $region70: #{_forward_device.2} parent=67 // pred_check_branch
        %461 = sbr.rel (%p459) target = $region72
      $region71: #{_forward_device.2} parent=67 // pred_region
        %v462 = vld [vmem:[%s0] sm:$0xff]
        %v463 = vld [vmem:[%s0 + $0x8] sm:$0xff]
        %v464 = vld [vmem:[%s0 + $0x10] sm:$0xff]
        %v465 = vld [vmem:[%s0 + $0x18] sm:$0xff]
        %v466 = vld [vmem:[%s4] sm:$0xff]
        %v467 = vld [vmem:[%s4 + $0x8] sm:$0xff]
        %v468 = vld [vmem:[%s4 + $0x10] sm:$0xff]
        %v469 = vld [vmem:[%s4 + $0x18] sm:$0xff]
        %v470 = vld [vmem:[%s1] sm:$0xff]
        %v471 = vld [vmem:[%s1 + $0x8] sm:$0xff]
        %v472 = vld [vmem:[%s1 + $0x10] sm:$0xff]
        %v473 = vld [vmem:[%s1 + $0x18] sm:$0xff]
        %v474 = vld [vmem:[%s6] sm:$0xff]
        %v475 = vld [vmem:[%s6 + $0x8] sm:$0xff]
        %v476 = vld [vmem:[%s6 + $0x10] sm:$0xff]
        %v477 = vld [vmem:[%s6 + $0x18] sm:$0xff]
        %vm478 = vcmask 261120
        %v480 = vsel %vm478, %v470, 0
        %v483 = vsel %vm478, %v471, 0
        %v486 = vsel %vm478, %v472, 0
        %v489 = vsel %vm478, %v473, 0
        %491 = vmatprep.subr.mxu0 0.0
        %492 = vmatpush1.msra.mxu0 %v474
        %493 = vmatprep.subr.mxu0 0.0
        %494 = vmatpush1.msra.mxu0 %v475
        %495 = vmatprep.subr.mxu0 0.0
        %496 = vmatpush1.msra.mxu0 %v476
        %497 = vmatprep.subr.mxu0 0.0
        %498 = vmatpush1.msra.mxu0 %v477
        %499 = vmatprep.subr.mxu0 0.0
        %500 = vmatpush1.msra.mxu0 0.0
        %501 = vmatprep.subr.mxu0 0.0
        %502 = vmatpush1.msra.mxu0 0.0
        %503 = vmatprep.subr.mxu0 0.0
        %504 = vmatpush1.msra.mxu0 0.0
        %505 = vmatprep.subr.mxu0 0.0
        %506 = vmatpush1.msra.mxu0 0.0
        %507 = vmatprep.subr.mxu0 0.0
        %508 = vmatpush1.msra.mxu0 0.0
        %509 = vmatprep.subr.mxu0 0.0
        %510 = vmatpush1.msra.mxu0 0.0
        %511 = vmatprep.subr.mxu0 0.0
        %512 = vmatpush1.msra.mxu0 0.0
        %513 = vmatprep.subr.mxu0 0.0
        %514 = vmatpush1.msra.mxu0 0.0
        %515 = vmatprep.subr.mxu0 0.0
        %516 = vmatpush1.msra.mxu0 0.0
        %517 = vmatprep.subr.mxu0 0.0
        %518 = vmatpush1.msra.mxu0 0.0
        %519 = vmatprep.subr.mxu0 0.0
        %520 = vmatpush1.msra.mxu0 0.0
        %521 = vmatprep.subr.mxu0 0.0
        %522 = vmatpush1.msra.mxu0 0.0
        %523 = vmatprep.subr.mxu0 0.0
        %524 = vmatpush1.msra.mxu0 0.0
        %525 = vmatprep.subr.mxu0 0.0
        %526 = vmatpush1.msra.mxu0 0.0
        %527 = vmatprep.subr.mxu0 0.0
        %528 = vmatpush1.msra.mxu0 0.0
        %529 = vmatprep.subr.mxu0 0.0
        %530 = vmatpush1.msra.mxu0 0.0
        %531 = vmatprep.subr.mxu0 0.0
        %532 = vmatpush1.msra.mxu0 0.0
        %533 = vmatprep.subr.mxu0 0.0
        %534 = vmatpush1.msra.mxu0 0.0
        %535 = vmatprep.subr.mxu0 0.0
        %536 = vmatpush1.msra.mxu0 0.0
        %537 = vmatprep.subr.mxu0 0.0
        %538 = vmatpush1.msra.mxu0 0.0
        %539 = vmatprep.subr.mxu0 0.0
        %540 = vmatpush1.msra.mxu0 0.0
        %541 = vmatprep.subr.mxu0 0.0
        %542 = vmatpush1.msra.mxu0 0.0
        %543 = vmatprep.subr.mxu0 0.0
        %544 = vmatpush1.msra.mxu0 0.0
        %545 = vmatprep.subr.mxu0 0.0
        %546 = vmatpush1.msra.mxu0 0.0
        %547 = vmatprep.subr.mxu0 0.0
        %548 = vmatpush1.msra.mxu0 0.0
        %549 = vmatprep.subr.mxu0 0.0
        %550 = vmatpush1.msra.mxu0 0.0
        %551 = vmatprep.subr.mxu0 0.0
        %552 = vmatpush1.msra.mxu0 0.0
        %553 = vmatprep.subr.mxu0 0.0
        %554 = vmatpush1.msra.mxu0 0.0
        %555 = vmatprep.mubr.f32.mxu0 0.0
        %556 = vmatmul.mubr.f32.gmra.mrb[0].mxu0 %v480
        %v557 = vpop.f32.mrb[0].mxu0
        %v558 = vadd.f32 0.0, %v557
        %v559 = vpop.f32.mrb[0].mxu0
        %560 = vmatprep.mubr.f32.mxu0 0.0
        %561 = vmatmul.mubr.f32.gmra.mrb[0].mxu0 %v483
        %v562 = vpop.f32.mrb[0].mxu0
        %v563 = vadd.f32 0.0, %v562
        %v564 = vpop.f32.mrb[0].mxu0
        %565 = vmatprep.mubr.f32.mxu0 0.0
        %566 = vmatmul.mubr.f32.gmra.mrb[0].mxu0 %v486
        %v567 = vpop.f32.mrb[0].mxu0
        %v568 = vadd.f32 0.0, %v567
        %v569 = vpop.f32.mrb[0].mxu0
        %570 = vmatprep.mubr.f32.mxu0 0.0
        %571 = vmatmul.mubr.f32.gmra.mrb[0].mxu0 %v489
        %v572 = vpop.f32.mrb[0].mxu0
        %v573 = vadd.f32 0.0, %v572
        %v574 = vpop.f32.mrb[0].mxu0
        %575 = vdwg.mxu0
        %v577 = vsel %vm478, %v462, 0
        %v580 = vsel %vm478, %v463, 0
        %v583 = vsel %vm478, %v464, 0
        %v586 = vsel %vm478, %v465, 0
        %588 = vmatprep.subr.mxu0 0.0
        %589 = vmatpush1.msra.mxu0 %v466
        %590 = vmatprep.subr.mxu0 0.0
        %591 = vmatpush1.msra.mxu0 %v467
        %592 = vmatprep.subr.mxu0 0.0
        %593 = vmatpush1.msra.mxu0 %v468
        %594 = vmatprep.subr.mxu0 0.0
        %595 = vmatpush1.msra.mxu0 %v469
        %596 = vmatprep.subr.mxu0 0.0
        %597 = vmatpush1.msra.mxu0 0.0
        %598 = vmatprep.subr.mxu0 0.0
        %599 = vmatpush1.msra.mxu0 0.0
        %600 = vmatprep.subr.mxu0 0.0
        %601 = vmatpush1.msra.mxu0 0.0
        %602 = vmatprep.subr.mxu0 0.0
        %603 = vmatpush1.msra.mxu0 0.0
        %604 = vmatprep.subr.mxu0 0.0
        %605 = vmatpush1.msra.mxu0 0.0
        %606 = vmatprep.subr.mxu0 0.0
        %607 = vmatpush1.msra.mxu0 0.0
        %608 = vmatprep.subr.mxu0 0.0
        %609 = vmatpush1.msra.mxu0 0.0
        %610 = vmatprep.subr.mxu0 0.0
        %611 = vmatpush1.msra.mxu0 0.0
        %612 = vmatprep.subr.mxu0 0.0
        %613 = vmatpush1.msra.mxu0 0.0
        %614 = vmatprep.subr.mxu0 0.0
        %615 = vmatpush1.msra.mxu0 0.0
        %616 = vmatprep.subr.mxu0 0.0
        %617 = vmatpush1.msra.mxu0 0.0
        %618 = vmatprep.subr.mxu0 0.0
        %619 = vmatpush1.msra.mxu0 0.0
        %620 = vmatprep.subr.mxu0 0.0
        %621 = vmatpush1.msra.mxu0 0.0
        %622 = vmatprep.subr.mxu0 0.0
        %623 = vmatpush1.msra.mxu0 0.0
        %624 = vmatprep.subr.mxu0 0.0
        %625 = vmatpush1.msra.mxu0 0.0
        %626 = vmatprep.subr.mxu0 0.0
        %627 = vmatpush1.msra.mxu0 0.0
        %628 = vmatprep.subr.mxu0 0.0
        %629 = vmatpush1.msra.mxu0 0.0
        %630 = vmatprep.subr.mxu0 0.0
        %631 = vmatpush1.msra.mxu0 0.0
        %632 = vmatprep.subr.mxu0 0.0
        %633 = vmatpush1.msra.mxu0 0.0
        %634 = vmatprep.subr.mxu0 0.0
        %635 = vmatpush1.msra.mxu0 0.0
        %636 = vmatprep.subr.mxu0 0.0
        %637 = vmatpush1.msra.mxu0 0.0
        %638 = vmatprep.subr.mxu0 0.0
        %639 = vmatpush1.msra.mxu0 0.0
        %640 = vmatprep.subr.mxu0 0.0
        %641 = vmatpush1.msra.mxu0 0.0
        %642 = vmatprep.subr.mxu0 0.0
        %643 = vmatpush1.msra.mxu0 0.0
        %644 = vmatprep.subr.mxu0 0.0
        %645 = vmatpush1.msra.mxu0 0.0
        %646 = vmatprep.subr.mxu0 0.0
        %647 = vmatpush1.msra.mxu0 0.0
        %648 = vmatprep.subr.mxu0 0.0
        %649 = vmatpush1.msra.mxu0 0.0
        %650 = vmatprep.subr.mxu0 0.0
        %651 = vmatpush1.msra.mxu0 0.0
        %652 = vmatprep.mubr.f32.mxu0 0.0
        %653 = vmatmul.mubr.f32.gmra.mrb[0].mxu0 %v577
        %v654 = vpop.f32.mrb[0].mxu0
        %v655 = vadd.f32 %v558, %v654
        %v656 = vpop.f32.mrb[0].mxu0
        %657 = vmatprep.mubr.f32.mxu0 0.0
        %658 = vmatmul.mubr.f32.gmra.mrb[0].mxu0 %v580
        %v659 = vpop.f32.mrb[0].mxu0
        %v660 = vadd.f32 %v563, %v659
        %v661 = vpop.f32.mrb[0].mxu0
        %662 = vmatprep.mubr.f32.mxu0 0.0
        %663 = vmatmul.mubr.f32.gmra.mrb[0].mxu0 %v583
        %v664 = vpop.f32.mrb[0].mxu0
        %v665 = vadd.f32 %v568, %v664
        %v666 = vpop.f32.mrb[0].mxu0
        %667 = vmatprep.mubr.f32.mxu0 0.0
        %668 = vmatmul.mubr.f32.gmra.mrb[0].mxu0 %v586
        %v669 = vpop.f32.mrb[0].mxu0
        %v670 = vadd.f32 %v573, %v669
        %v671 = vpop.f32.mrb[0].mxu0
        %672 = vdwg.mxu0
        %v673 = vld [vmem:[%s7] sm:$0x1]
        %v675 = vlaneseq
        %v676 = vshrl.u32 %v675, 7
        %v677 = vsub.s32 0, %v676
        %v678 = vrot.slane %v673, %v677
        %v680 = vadd.f32 %v655, %v678
        %v681 = vadd.f32 %v660, %v678
        %v682 = vadd.f32 %v665, %v678
        %v683 = vadd.f32 %v670, %v678
        %684 = vst.msk [vmem:[#allocation2] sm:$0xff] %vm478, %v680
        %685 = vst.msk [vmem:[#allocation2 + $0x8] sm:$0xff] %vm478, %v681
        %686 = vst.msk [vmem:[#allocation2 + $0x10] sm:$0xff] %vm478, %v682
        %687 = vst.msk [vmem:[#allocation2 + $0x18] sm:$0xff] %vm478, %v683
        %v688 = vld [vmem:[%s8] sm:$0xff]
        %v689 = vld [vmem:[%s8 + $0x8] sm:$0xff]
        %v690 = vld [vmem:[%s8 + $0x10] sm:$0xff]
        %v691 = vld [vmem:[%s8 + $0x18] sm:$0xff]
        %v692 = vld [vmem:[%s2] sm:$0xff]
        %v693 = vld [vmem:[%s2 + $0x8] sm:$0xff]
        %v694 = vld [vmem:[%s2 + $0x10] sm:$0xff]
        %v695 = vld [vmem:[%s2 + $0x18] sm:$0xff]
        %v696 = vld [vmem:[%s10] sm:$0xff]
        %v697 = vld [vmem:[%s10 + $0x8] sm:$0xff]
        %v698 = vld [vmem:[%s10 + $0x10] sm:$0xff]
        %v699 = vld [vmem:[%s10 + $0x18] sm:$0xff]
        %v701 = vsel %vm478, %v692, 0
        %v704 = vsel %vm478, %v693, 0
        %v707 = vsel %vm478, %v694, 0
        %v710 = vsel %vm478, %v695, 0
        %712 = vmatprep.subr.mxu0 0.0
        %713 = vmatpush1.msra.mxu0 %v696
        %714 = vmatprep.subr.mxu0 0.0
        %715 = vmatpush1.msra.mxu0 %v697
        %716 = vmatprep.subr.mxu0 0.0
        %717 = vmatpush1.msra.mxu0 %v698
        %718 = vmatprep.subr.mxu0 0.0
        %719 = vmatpush1.msra.mxu0 %v699
        %720 = vmatprep.subr.mxu0 0.0
        %721 = vmatpush1.msra.mxu0 0.0
        %722 = vmatprep.subr.mxu0 0.0
        %723 = vmatpush1.msra.mxu0 0.0
        %724 = vmatprep.subr.mxu0 0.0
        %725 = vmatpush1.msra.mxu0 0.0
        %726 = vmatprep.subr.mxu0 0.0
        %727 = vmatpush1.msra.mxu0 0.0
        %728 = vmatprep.subr.mxu0 0.0
        %729 = vmatpush1.msra.mxu0 0.0
        %730 = vmatprep.subr.mxu0 0.0
        %731 = vmatpush1.msra.mxu0 0.0
        %732 = vmatprep.subr.mxu0 0.0
        %733 = vmatpush1.msra.mxu0 0.0
        %734 = vmatprep.subr.mxu0 0.0
        %735 = vmatpush1.msra.mxu0 0.0
        %736 = vmatprep.subr.mxu0 0.0
        %737 = vmatpush1.msra.mxu0 0.0
        %738 = vmatprep.subr.mxu0 0.0
        %739 = vmatpush1.msra.mxu0 0.0
        %740 = vmatprep.subr.mxu0 0.0
        %741 = vmatpush1.msra.mxu0 0.0
        %742 = vmatprep.subr.mxu0 0.0
        %743 = vmatpush1.msra.mxu0 0.0
        %744 = vmatprep.subr.mxu0 0.0
        %745 = vmatpush1.msra.mxu0 0.0
        %746 = vmatprep.subr.mxu0 0.0
        %747 = vmatpush1.msra.mxu0 0.0
        %748 = vmatprep.subr.mxu0 0.0
        %749 = vmatpush1.msra.mxu0 0.0
        %750 = vmatprep.subr.mxu0 0.0
        %751 = vmatpush1.msra.mxu0 0.0
        %752 = vmatprep.subr.mxu0 0.0
        %753 = vmatpush1.msra.mxu0 0.0
        %754 = vmatprep.subr.mxu0 0.0
        %755 = vmatpush1.msra.mxu0 0.0
        %756 = vmatprep.subr.mxu0 0.0
        %757 = vmatpush1.msra.mxu0 0.0
        %758 = vmatprep.subr.mxu0 0.0
        %759 = vmatpush1.msra.mxu0 0.0
        %760 = vmatprep.subr.mxu0 0.0
        %761 = vmatpush1.msra.mxu0 0.0
        %762 = vmatprep.subr.mxu0 0.0
        %763 = vmatpush1.msra.mxu0 0.0
        %764 = vmatprep.subr.mxu0 0.0
        %765 = vmatpush1.msra.mxu0 0.0
        %766 = vmatprep.subr.mxu0 0.0
        %767 = vmatpush1.msra.mxu0 0.0
        %768 = vmatprep.subr.mxu0 0.0
        %769 = vmatpush1.msra.mxu0 0.0
        %770 = vmatprep.subr.mxu0 0.0
        %771 = vmatpush1.msra.mxu0 0.0
        %772 = vmatprep.subr.mxu0 0.0
        %773 = vmatpush1.msra.mxu0 0.0
        %774 = vmatprep.subr.mxu0 0.0
        %775 = vmatpush1.msra.mxu0 0.0
        %776 = vmatprep.mubr.f32.mxu0 0.0
        %777 = vmatmul.mubr.f32.gmra.mrb[0].mxu0 %v701
        %v778 = vpop.f32.mrb[0].mxu0
        %v779 = vadd.f32 0.0, %v778
        %v780 = vpop.f32.mrb[0].mxu0
        %781 = vmatprep.mubr.f32.mxu0 0.0
        %782 = vmatmul.mubr.f32.gmra.mrb[0].mxu0 %v704
        %v783 = vpop.f32.mrb[0].mxu0
        %v784 = vadd.f32 0.0, %v783
        %v785 = vpop.f32.mrb[0].mxu0
        %786 = vmatprep.mubr.f32.mxu0 0.0
        %787 = vmatmul.mubr.f32.gmra.mrb[0].mxu0 %v707
        %v788 = vpop.f32.mrb[0].mxu0
        %v789 = vadd.f32 0.0, %v788
        %v790 = vpop.f32.mrb[0].mxu0
        %791 = vmatprep.mubr.f32.mxu0 0.0
        %792 = vmatmul.mubr.f32.gmra.mrb[0].mxu0 %v710
        %v793 = vpop.f32.mrb[0].mxu0
        %v794 = vadd.f32 0.0, %v793
        %v795 = vpop.f32.mrb[0].mxu0
        %796 = vdwg.mxu0
        %797 = vmatprep.subr.mxu0 0.0
        %798 = vmatpush1.msra.mxu0 %v688
        %799 = vmatprep.subr.mxu0 0.0
        %800 = vmatpush1.msra.mxu0 %v689
        %801 = vmatprep.subr.mxu0 0.0
        %802 = vmatpush1.msra.mxu0 %v690
        %803 = vmatprep.subr.mxu0 0.0
        %804 = vmatpush1.msra.mxu0 %v691
        %805 = vmatprep.subr.mxu0 0.0
        %806 = vmatpush1.msra.mxu0 0.0
        %807 = vmatprep.subr.mxu0 0.0
        %808 = vmatpush1.msra.mxu0 0.0
        %809 = vmatprep.subr.mxu0 0.0
        %810 = vmatpush1.msra.mxu0 0.0
        %811 = vmatprep.subr.mxu0 0.0
        %812 = vmatpush1.msra.mxu0 0.0
        %813 = vmatprep.subr.mxu0 0.0
        %814 = vmatpush1.msra.mxu0 0.0
        %815 = vmatprep.subr.mxu0 0.0
        %816 = vmatpush1.msra.mxu0 0.0
        %817 = vmatprep.subr.mxu0 0.0
        %818 = vmatpush1.msra.mxu0 0.0
        %819 = vmatprep.subr.mxu0 0.0
        %820 = vmatpush1.msra.mxu0 0.0
        %821 = vmatprep.subr.mxu0 0.0
        %822 = vmatpush1.msra.mxu0 0.0
        %823 = vmatprep.subr.mxu0 0.0
        %824 = vmatpush1.msra.mxu0 0.0
        %825 = vmatprep.subr.mxu0 0.0
        %826 = vmatpush1.msra.mxu0 0.0
        %827 = vmatprep.subr.mxu0 0.0
        %828 = vmatpush1.msra.mxu0 0.0
        %829 = vmatprep.subr.mxu0 0.0
        %830 = vmatpush1.msra.mxu0 0.0
        %831 = vmatprep.subr.mxu0 0.0
        %832 = vmatpush1.msra.mxu0 0.0
        %833 = vmatprep.subr.mxu0 0.0
        %834 = vmatpush1.msra.mxu0 0.0
        %835 = vmatprep.subr.mxu0 0.0
        %836 = vmatpush1.msra.mxu0 0.0
        %837 = vmatprep.subr.mxu0 0.0
        %838 = vmatpush1.msra.mxu0 0.0
        %839 = vmatprep.subr.mxu0 0.0
        %840 = vmatpush1.msra.mxu0 0.0
        %841 = vmatprep.subr.mxu0 0.0
        %842 = vmatpush1.msra.mxu0 0.0
        %843 = vmatprep.subr.mxu0 0.0
        %844 = vmatpush1.msra.mxu0 0.0
        %845 = vmatprep.subr.mxu0 0.0
        %846 = vmatpush1.msra.mxu0 0.0
        %847 = vmatprep.subr.mxu0 0.0
        %848 = vmatpush1.msra.mxu0 0.0
        %849 = vmatprep.subr.mxu0 0.0
        %850 = vmatpush1.msra.mxu0 0.0
        %851 = vmatprep.subr.mxu0 0.0
        %852 = vmatpush1.msra.mxu0 0.0
        %853 = vmatprep.subr.mxu0 0.0
        %854 = vmatpush1.msra.mxu0 0.0
        %855 = vmatprep.subr.mxu0 0.0
        %856 = vmatpush1.msra.mxu0 0.0
        %857 = vmatprep.subr.mxu0 0.0
        %858 = vmatpush1.msra.mxu0 0.0
        %859 = vmatprep.subr.mxu0 0.0
        %860 = vmatpush1.msra.mxu0 0.0
        %861 = vmatprep.mubr.f32.mxu0 0.0
        %862 = vmatmul.mubr.f32.gmra.mrb[0].mxu0 %v577
        %v863 = vpop.f32.mrb[0].mxu0
        %v864 = vadd.f32 %v779, %v863
        %v865 = vpop.f32.mrb[0].mxu0
        %866 = vmatprep.mubr.f32.mxu0 0.0
        %867 = vmatmul.mubr.f32.gmra.mrb[0].mxu0 %v580
        %v868 = vpop.f32.mrb[0].mxu0
        %v869 = vadd.f32 %v784, %v868
        %v870 = vpop.f32.mrb[0].mxu0
        %871 = vmatprep.mubr.f32.mxu0 0.0
        %872 = vmatmul.mubr.f32.gmra.mrb[0].mxu0 %v583
        %v873 = vpop.f32.mrb[0].mxu0
        %v874 = vadd.f32 %v789, %v873
        %v875 = vpop.f32.mrb[0].mxu0
        %876 = vmatprep.mubr.f32.mxu0 0.0
        %877 = vmatmul.mubr.f32.gmra.mrb[0].mxu0 %v586
        %v878 = vpop.f32.mrb[0].mxu0
        %v879 = vadd.f32 %v794, %v878
        %v880 = vpop.f32.mrb[0].mxu0
        %881 = vdwg.mxu0
        %v882 = vld [vmem:[%s11] sm:$0x1]
        %v884 = vlaneseq
        %v885 = vshrl.u32 %v884, 7
        %v886 = vsub.s32 0, %v885
        %v887 = vrot.slane %v882, %v886
        %v889 = vadd.f32 %v864, %v887
        %v890 = vadd.f32 %v869, %v887
        %v891 = vadd.f32 %v874, %v887
        %v892 = vadd.f32 %v879, %v887
        %893 = vst.msk [vmem:[#allocation3] sm:$0xff] %vm478, %v889
        %894 = vst.msk [vmem:[#allocation3 + $0x8] sm:$0xff] %vm478, %v890
        %895 = vst.msk [vmem:[#allocation3 + $0x10] sm:$0xff] %vm478, %v891
        %896 = vst.msk [vmem:[#allocation3 + $0x18] sm:$0xff] %vm478, %v892
      $region72: #{_forward_device.2} parent=67 // pred_fallthru
        _
      %v897 = vld [vmem:[%s444] sm:$0xff]
      %v898 = vld [vmem:[%s444 + $0x8] sm:$0xff]
      %v899 = vld [vmem:[%s444 + $0x10] sm:$0xff]
      %v900 = vld [vmem:[%s444 + $0x18] sm:$0xff]
      %v901 = vld [vmem:[#allocation2] sm:$0xff]
      %v902 = vld [vmem:[#allocation2 + $0x8] sm:$0xff]
      %v903 = vld [vmem:[#allocation2 + $0x10] sm:$0xff]
      %v904 = vld [vmem:[#allocation2 + $0x18] sm:$0xff]
      %v905 = vld [vmem:[%s5] sm:$0xff]
      %v906 = vld [vmem:[%s5 + $0x8] sm:$0xff]
      %v907 = vld [vmem:[%s5 + $0x10] sm:$0xff]
      %v908 = vld [vmem:[%s5 + $0x18] sm:$0xff]
      %vm909 = vcmask 261120
      %v911 = vsel %vm909, %v897, 0
      %v914 = vsel %vm909, %v898, 0
      %v917 = vsel %vm909, %v899, 0
      %v920 = vsel %vm909, %v900, 0
      %922 = vmatprep.subr.mxu0 0.0
      %923 = vmatpush1.msra.mxu0 %v905
      %924 = vmatprep.subr.mxu0 0.0
      %925 = vmatpush1.msra.mxu0 %v906
      %926 = vmatprep.subr.mxu0 0.0
      %927 = vmatpush1.msra.mxu0 %v907
      %928 = vmatprep.subr.mxu0 0.0
      %929 = vmatpush1.msra.mxu0 %v908
      %930 = vmatprep.subr.mxu0 0.0
      %931 = vmatpush1.msra.mxu0 0.0
      %932 = vmatprep.subr.mxu0 0.0
      %933 = vmatpush1.msra.mxu0 0.0
      %934 = vmatprep.subr.mxu0 0.0
      %935 = vmatpush1.msra.mxu0 0.0
      %936 = vmatprep.subr.mxu0 0.0
      %937 = vmatpush1.msra.mxu0 0.0
      %938 = vmatprep.subr.mxu0 0.0
      %939 = vmatpush1.msra.mxu0 0.0
      %940 = vmatprep.subr.mxu0 0.0
      %941 = vmatpush1.msra.mxu0 0.0
      %942 = vmatprep.subr.mxu0 0.0
      %943 = vmatpush1.msra.mxu0 0.0
      %944 = vmatprep.subr.mxu0 0.0
      %945 = vmatpush1.msra.mxu0 0.0
      %946 = vmatprep.subr.mxu0 0.0
      %947 = vmatpush1.msra.mxu0 0.0
      %948 = vmatprep.subr.mxu0 0.0
      %949 = vmatpush1.msra.mxu0 0.0
      %950 = vmatprep.subr.mxu0 0.0
      %951 = vmatpush1.msra.mxu0 0.0
      %952 = vmatprep.subr.mxu0 0.0
      %953 = vmatpush1.msra.mxu0 0.0
      %954 = vmatprep.subr.mxu0 0.0
      %955 = vmatpush1.msra.mxu0 0.0
      %956 = vmatprep.subr.mxu0 0.0
      %957 = vmatpush1.msra.mxu0 0.0
      %958 = vmatprep.subr.mxu0 0.0
      %959 = vmatpush1.msra.mxu0 0.0
      %960 = vmatprep.subr.mxu0 0.0
      %961 = vmatpush1.msra.mxu0 0.0
      %962 = vmatprep.subr.mxu0 0.0
      %963 = vmatpush1.msra.mxu0 0.0
      %964 = vmatprep.subr.mxu0 0.0
      %965 = vmatpush1.msra.mxu0 0.0
      %966 = vmatprep.subr.mxu0 0.0
      %967 = vmatpush1.msra.mxu0 0.0
      %968 = vmatprep.subr.mxu0 0.0
      %969 = vmatpush1.msra.mxu0 0.0
      %970 = vmatprep.subr.mxu0 0.0
      %971 = vmatpush1.msra.mxu0 0.0
      %972 = vmatprep.subr.mxu0 0.0
      %973 = vmatpush1.msra.mxu0 0.0
      %974 = vmatprep.subr.mxu0 0.0
      %975 = vmatpush1.msra.mxu0 0.0
      %976 = vmatprep.subr.mxu0 0.0
      %977 = vmatpush1.msra.mxu0 0.0
      %978 = vmatprep.subr.mxu0 0.0
      %979 = vmatpush1.msra.mxu0 0.0
      %980 = vmatprep.subr.mxu0 0.0
      %981 = vmatpush1.msra.mxu0 0.0
      %982 = vmatprep.subr.mxu0 0.0
      %983 = vmatpush1.msra.mxu0 0.0
      %984 = vmatprep.subr.mxu0 0.0
      %985 = vmatpush1.msra.mxu0 0.0
      %986 = vmatprep.mubr.f32.mxu0 0.0
      %987 = vmatmul.mubr.f32.gmra.mrb[0].mxu0 %v911
      %v988 = vpop.f32.mrb[0].mxu0
      %v989 = vadd.f32 0.0, %v988
      %v990 = vpop.f32.mrb[0].mxu0
      %991 = vmatprep.mubr.f32.mxu0 0.0
      %992 = vmatmul.mubr.f32.gmra.mrb[0].mxu0 %v914
      %v993 = vpop.f32.mrb[0].mxu0
      %v994 = vadd.f32 0.0, %v993
      %v995 = vpop.f32.mrb[0].mxu0
      %996 = vmatprep.mubr.f32.mxu0 0.0
      %997 = vmatmul.mubr.f32.gmra.mrb[0].mxu0 %v917
      %v998 = vpop.f32.mrb[0].mxu0
      %v999 = vadd.f32 0.0, %v998
      %v1000 = vpop.f32.mrb[0].mxu0
      %1001 = vmatprep.mubr.f32.mxu0 0.0
      %1002 = vmatmul.mubr.f32.gmra.mrb[0].mxu0 %v920
      %v1003 = vpop.f32.mrb[0].mxu0
      %v1004 = vadd.f32 0.0, %v1003
      %v1005 = vpop.f32.mrb[0].mxu0
      %1006 = vdwg.mxu0
      %v1007 = vadd.f32 %v901, %v989
      %v1008 = vadd.f32 %v902, %v994
      %v1009 = vadd.f32 %v903, %v999
      %v1010 = vadd.f32 %v904, %v1004
      %1011 = vst.msk [vmem:[%s450] sm:$0xff] %vm909, %v1007
      %1012 = vst.msk [vmem:[%s450 + $0x8] sm:$0xff] %vm909, %v1008
      %1013 = vst.msk [vmem:[%s450 + $0x10] sm:$0xff] %vm909, %v1009
      %1014 = vst.msk [vmem:[%s450 + $0x18] sm:$0xff] %vm909, %v1010
      %v1015 = vld [vmem:[#allocation3] sm:$0xff]
      %v1016 = vld [vmem:[#allocation3 + $0x8] sm:$0xff]
      %v1017 = vld [vmem:[#allocation3 + $0x10] sm:$0xff]
      %v1018 = vld [vmem:[#allocation3 + $0x18] sm:$0xff]
      %v1019 = vld [vmem:[%s9] sm:$0xff]
      %v1020 = vld [vmem:[%s9 + $0x8] sm:$0xff]
      %v1021 = vld [vmem:[%s9 + $0x10] sm:$0xff]
      %v1022 = vld [vmem:[%s9 + $0x18] sm:$0xff]
      %1023 = vmatprep.subr.mxu0 0.0
      %1024 = vmatpush1.msra.mxu0 %v1019
      %1025 = vmatprep.subr.mxu0 0.0
      %1026 = vmatpush1.msra.mxu0 %v1020
      %1027 = vmatprep.subr.mxu0 0.0
      %1028 = vmatpush1.msra.mxu0 %v1021
      %1029 = vmatprep.subr.mxu0 0.0
      %1030 = vmatpush1.msra.mxu0 %v1022
      %1031 = vmatprep.subr.mxu0 0.0
      %1032 = vmatpush1.msra.mxu0 0.0
      %1033 = vmatprep.subr.mxu0 0.0
      %1034 = vmatpush1.msra.mxu0 0.0
      %1035 = vmatprep.subr.mxu0 0.0
      %1036 = vmatpush1.msra.mxu0 0.0
      %1037 = vmatprep.subr.mxu0 0.0
      %1038 = vmatpush1.msra.mxu0 0.0
      %1039 = vmatprep.subr.mxu0 0.0
      %1040 = vmatpush1.msra.mxu0 0.0
      %1041 = vmatprep.subr.mxu0 0.0
      %1042 = vmatpush1.msra.mxu0 0.0
      %1043 = vmatprep.subr.mxu0 0.0
      %1044 = vmatpush1.msra.mxu0 0.0
      %1045 = vmatprep.subr.mxu0 0.0
      %1046 = vmatpush1.msra.mxu0 0.0
      %1047 = vmatprep.subr.mxu0 0.0
      %1048 = vmatpush1.msra.mxu0 0.0
      %1049 = vmatprep.subr.mxu0 0.0
      %1050 = vmatpush1.msra.mxu0 0.0
      %1051 = vmatprep.subr.mxu0 0.0
      %1052 = vmatpush1.msra.mxu0 0.0
      %1053 = vmatprep.subr.mxu0 0.0
      %1054 = vmatpush1.msra.mxu0 0.0
      %1055 = vmatprep.subr.mxu0 0.0
      %1056 = vmatpush1.msra.mxu0 0.0
      %1057 = vmatprep.subr.mxu0 0.0
      %1058 = vmatpush1.msra.mxu0 0.0
      %1059 = vmatprep.subr.mxu0 0.0
      %1060 = vmatpush1.msra.mxu0 0.0
      %1061 = vmatprep.subr.mxu0 0.0
      %1062 = vmatpush1.msra.mxu0 0.0
      %1063 = vmatprep.subr.mxu0 0.0
      %1064 = vmatpush1.msra.mxu0 0.0
      %1065 = vmatprep.subr.mxu0 0.0
      %1066 = vmatpush1.msra.mxu0 0.0
      %1067 = vmatprep.subr.mxu0 0.0
      %1068 = vmatpush1.msra.mxu0 0.0
      %1069 = vmatprep.subr.mxu0 0.0
      %1070 = vmatpush1.msra.mxu0 0.0
      %1071 = vmatprep.subr.mxu0 0.0
      %1072 = vmatpush1.msra.mxu0 0.0
      %1073 = vmatprep.subr.mxu0 0.0
      %1074 = vmatpush1.msra.mxu0 0.0
      %1075 = vmatprep.subr.mxu0 0.0
      %1076 = vmatpush1.msra.mxu0 0.0
      %1077 = vmatprep.subr.mxu0 0.0
      %1078 = vmatpush1.msra.mxu0 0.0
      %1079 = vmatprep.subr.mxu0 0.0
      %1080 = vmatpush1.msra.mxu0 0.0
      %1081 = vmatprep.subr.mxu0 0.0
      %1082 = vmatpush1.msra.mxu0 0.0
      %1083 = vmatprep.subr.mxu0 0.0
      %1084 = vmatpush1.msra.mxu0 0.0
      %1085 = vmatprep.subr.mxu0 0.0
      %1086 = vmatpush1.msra.mxu0 0.0
      %1087 = vmatprep.mubr.f32.mxu0 0.0
      %1088 = vmatmul.mubr.f32.gmra.mrb[0].mxu0 %v911
      %v1089 = vpop.f32.mrb[0].mxu0
      %v1090 = vadd.f32 0.0, %v1089
      %v1091 = vpop.f32.mrb[0].mxu0
      %1092 = vmatprep.mubr.f32.mxu0 0.0
      %1093 = vmatmul.mubr.f32.gmra.mrb[0].mxu0 %v914
      %v1094 = vpop.f32.mrb[0].mxu0
      %v1095 = vadd.f32 0.0, %v1094
      %v1096 = vpop.f32.mrb[0].mxu0
      %1097 = vmatprep.mubr.f32.mxu0 0.0
      %1098 = vmatmul.mubr.f32.gmra.mrb[0].mxu0 %v917
      %v1099 = vpop.f32.mrb[0].mxu0
      %v1100 = vadd.f32 0.0, %v1099
      %v1101 = vpop.f32.mrb[0].mxu0
      %1102 = vmatprep.mubr.f32.mxu0 0.0
      %1103 = vmatmul.mubr.f32.gmra.mrb[0].mxu0 %v920
      %v1104 = vpop.f32.mrb[0].mxu0
      %v1105 = vadd.f32 0.0, %v1104
      %v1106 = vpop.f32.mrb[0].mxu0
      %1107 = vdwg.mxu0
      %v1108 = vadd.f32 %v1015, %v1090
      %v1109 = vadd.f32 %v1016, %v1095
      %v1110 = vadd.f32 %v1017, %v1100
      %v1111 = vadd.f32 %v1018, %v1105
      %1112 = vst.msk [vmem:[%s456] sm:$0xff] %vm909, %v1108
      %1113 = vst.msk [vmem:[%s456 + $0x8] sm:$0xff] %vm909, %v1109
      %1114 = vst.msk [vmem:[%s456 + $0x10] sm:$0xff] %vm909, %v1110
      %1115 = vst.msk [vmem:[%s456 + $0x18] sm:$0xff] %vm909, %v1111
      %s1116 = smul.u32 4, %s25
      %p1117 = scmp.lt.s32.totalorder %s1116, 7
      %s1118 = scalar_select %p1117, %s1116, 7
      %s1119 = smul.addr %s1118, 8
      %s1120 = scalar_lea.vmem %s12, %s1119
      %s1121 = smul.u32 4, %s25
      %p1122 = scmp.lt.s32.totalorder %s1121, 7
      %s1123 = scalar_select %p1122, %s1121, 7
      %s1124 = smul.addr %s1123, 8
      %s1125 = scalar_lea.vmem %s13, %s1124
      // Predicated region
      $region73: #{_forward_device.2} parent=67 // pred_check
        %p1126 = pneg %p300
      $region74: #{_forward_device.2} parent=67 // pred_check_branch
        %1128 = sbr.rel (%p1126) target = $region76
      $region75: #{_forward_device.2} parent=67 // pred_region
        %s1129 = smul.u32 4, %s25
      $region76: #{_forward_device.2} parent=67 // pred_fallthru
        _
      // Predicated region
      $region77: #{_forward_device.2} parent=67 // pred_check
        %p1130 = pneg %p326
      $region78: #{_forward_device.2} parent=67 // pred_check_branch
        %1132 = sbr.rel (%p1130) target = $region80
      $region79: #{_forward_device.2} parent=67 // pred_region
        %s1133 = smul.u32 4, %s25
      $region80: #{_forward_device.2} parent=67 // pred_fallthru
        _
    $region68: #{_forward_device.2} parent=5 // pred_fallthru
      _
    %p1134 = scmp.le.s32.totalorder 2, %s20
    // Predicated region
    $region81: #{_forward_device.2} parent=5 // pred_check
      %p1135 = pneg %p1134
    $region82: #{_forward_device.2} parent=5 // pred_check_branch
      %1137 = sbr.rel (%p1135) target = $region84
    $region83: #{_forward_device.2} parent=5 // pred_region
      %s1138 = ssub.s32 %s20, 2
      // Predicated region
      $region85: #{_forward_device.2} parent=83 // pred_check
        %p1139 = pneg %p306
      $region86: #{_forward_device.2} parent=83 // pred_check_branch
        %1141 = sbr.rel (%p1139) target = $region88
      $region87: #{_forward_device.2} parent=83 // pred_region
        %s1142 = smul.u32 4, %s26
        %p1143 = scmp.lt.s32.totalorder %s1142, 7
        %s1144 = scalar_select %p1143, %s1142, 7
        %s1145 = smul.addr %s1144, 8
        %s1146 = scalar_lea.vmem %s12, %s1145
      $region88: #{_forward_device.2} parent=83 // pred_fallthru
        _
      // Predicated region
      $region89: #{_forward_device.2} parent=83 // pred_check
        %p1147 = pneg %p332
      $region90: #{_forward_device.2} parent=83 // pred_check_branch
        %1149 = sbr.rel (%p1147) target = $region92
      $region91: #{_forward_device.2} parent=83 // pred_region
        %s1150 = smul.u32 4, %s26
        %p1151 = scmp.lt.s32.totalorder %s1150, 7
        %s1152 = scalar_select %p1151, %s1150, 7
        %s1153 = smul.addr %s1152, 8
        %s1154 = scalar_lea.vmem %s13, %s1153
      $region92: #{_forward_device.2} parent=83 // pred_fallthru
        _
    $region84: #{_forward_device.2} parent=5 // pred_fallthru
      _
  $region6: #{_forward_device.2} parent=0 // loop_footer
    %s24 = sadd.s32 1, %s20
  $region7: #{_forward_device.2} parent=0 // loop_footer_branch
    %19 = sbr.rel target = $region3
  $region8: #{_forward_device.2} parent=0 // loop_exit
    _

// kernel: _forward_device.3
$region0: #{_forward_device.3}
  #allocation0 [shape = 'u32[]', space=smem, size = 0x4, offset = 0x4, fixed_abs, tag = 'smem constant byte address 0x4 - core index']
  #allocation1 [shape = 'u32[144,128]{1,0:T(1,128)}', space=vmem, size = 0x12000, scoped, tag = 'internal scratch']
  #allocation2 [shape = 'f32[2,16]{1,0:T(2,128)}', space=vmem, size = 0x400, scoped, tag = 'scratch operand']
  #allocation3 [shape = 'f32[1,1]{1,0:T(1,128)S(1)}', space=vmem, size = 0x200, scoped, tag = 'scoped memory for _forward_device.3']
  #allocation4 [shape = 'f32[1,1]{1,0:T(1,128)S(1)}', space=vmem, size = 0x200, scoped, tag = 'scoped memory for _forward_device.3']
  %s0 = inlined_call_operand.vmem [shape: f32[2,2,32,16], index: 0, kind: input, shape index: {}]
  %s1 = inlined_call_operand.vmem [shape: f32[2,2,32,16], index: 1, kind: input, shape index: {}]
  %s2 = inlined_call_operand.vmem [shape: f32[2,2,16], index: 2, kind: input, shape index: {}]
  %s3 = inlined_call_operand.vmem [shape: f32[2,16,16], index: 3, kind: input, shape index: {}]
  %s4 = inlined_call_operand.vmem [shape: f32[2,16,16], index: 4, kind: input, shape index: {}]
  %s5 = inlined_call_operand.vmem [shape: f32[2,16], index: 5, kind: input, shape index: {}]
  %s6 = inlined_call_operand.vmem [shape: f32[32,1], index: 6, kind: input, shape index: {}]
  %s7 = inlined_call_operand.vmem [shape: f32[32,1], index: 7, kind: input, shape index: {}]
  %s8 = inlined_call_operand.<no memory space> [shape: f32[1,1], index: 8, kind: input, shape index: {}]
  %s9 = inlined_call_operand.vmem [shape: f32[32,1], index: 9, kind: input, shape index: {}]
  %s10 = inlined_call_operand.vmem [shape: f32[32,1], index: 10, kind: input, shape index: {}]
  %s11 = inlined_call_operand.<no memory space> [shape: f32[1,1], index: 11, kind: input, shape index: {}]
  %s12 = inlined_call_operand.vmem [shape: f32[16,16], index: 12, kind: input, shape index: {}]
  %s13 = inlined_call_operand.vmem [shape: f32[16,16], index: 13, kind: input, shape index: {}]
  %s14 = inlined_call_operand.vmem [shape: f32[1,16], index: 14, kind: input, shape index: {}]
  %s15 = inlined_call_operand.hbm [shape: f32[2,2,16], index: 15, kind: output, shape index: {0}]
  %s16 = inlined_call_operand.hbm [shape: f32[1,1], index: 16, kind: output, shape index: {1}]
  %17 = xla_tuple %s15, %s16
  %s18 = sld [smem:[#allocation0]]
  $region105: #{_forward_device.3} parent=0
    _
  %s20 = ssub.s32 1, %s18
  %s21 = scalar_select 0, %s20, %s18
  %v22 = vstv %s8
  %23 = vst [vmem:[#allocation3] sm:$0x1] %v22
  %v24 = vstv %s11
  %25 = vst [vmem:[#allocation4] sm:$0x1] %v24
  $region1: #{_forward_device.3} parent=0
    #allocation5 [shape = 'u8[2048]{0}', space=vmem, size = 0x800, scoped, tag = 'output window, operand 0']
    #allocation6 [shape = 's32[2]{0}', space=sflag, size = 0x8, scoped, tag = 'scoped memory for _forward_device.3']
    #allocation7 [shape = 'u8[512]{0}', space=vmem, size = 0x400, scoped, tag = 'output window, operand 1, single buffered']
    #allocation8 [shape = 's32[1]{0}', space=sflag, size = 0x4, scoped, tag = 'scoped memory for _forward_device.3']
    %26 = vsyncpa [#allocation6], 0
    %s27 = scalar_lea.sflag [#allocation6], 1
    %28 = vsyncpa %s27, 0
    %29 = vsyncpa [#allocation8], 0
    loop: start=0, step=1, limit=4
    $region2: #{_forward_device.3} parent=1 // loop_pre_header
      _
    $region3: #{_forward_device.3} parent=1 // loop_header
      %s31 = sphi 0, %s35
      %p32 = scmp.ge.s32.totalorder %s31, 4
      %s41 = sphi 0, %s43
      %s44 = sphi 0, %s41
      %s45 = sphi 0, %s44
      %s61 = sphi 0, %s45
      %s67 = sphi 0, %s69
      %s70 = sphi 0, %s67
      %s71 = sphi 0, %s70
      %s87 = sphi 0, %s71
      %s93 = sphi 0, %s95
      %s96 = sphi 0, %s93
      %s97 = sphi 0, %s96
      %s113 = sphi 0, %s97
      %s117 = sphi 0, %s117
      %s119 = sphi 0, %s117
      %s120 = sphi 0, %s119
      %s134 = sphi 0, %s120
      %s138 = sphi 0, %s138
      %s140 = sphi 0, %s138
      %s141 = sphi 0, %s140
      %s155 = sphi 0, %s141
      %s159 = sphi 0, %s159
      %s161 = sphi 0, %s159
      %s162 = sphi 0, %s161
      %s176 = sphi 0, %s162
      %s180 = sphi 0, %s180
      %s182 = sphi 0, %s180
      %s183 = sphi 0, %s182
      %s197 = sphi 0, %s183
      %s201 = sphi 0, %s201
      %s203 = sphi 0, %s201
      %s204 = sphi 0, %s203
      %s218 = sphi 0, %s204
      %s222 = sphi 0, %s222
      %s224 = sphi 0, %s222
      %s225 = sphi 0, %s224
      %s239 = sphi 0, %s225
      %s243 = sphi 0, %s243
      %s245 = sphi 0, %s243
      %s246 = sphi 0, %s245
      %s260 = sphi 0, %s246
      %s264 = sphi 0, %s264
      %s266 = sphi 0, %s264
      %s267 = sphi 0, %s266
      %s281 = sphi 0, %s267
      %s285 = sphi 0, %s285
      %s287 = sphi 0, %s285
      %s288 = sphi 0, %s287
      %s302 = sphi 0, %s288
      %s306 = sphi 0, %s306
      %s308 = sphi 0, %s306
      %s309 = sphi 0, %s308
      %s323 = sphi 0, %s309
      %s327 = sphi 0, %s327
      %s329 = sphi 0, %s327
      %s330 = sphi 0, %s329
      %s344 = sphi 0, %s330
      %s348 = sphi 0, %s348
      %s350 = sphi 0, %s348
      %s351 = sphi 0, %s350
      %s365 = sphi 0, %s351
      %s371 = sphi 0, %s373
      %s374 = sphi 0, %s371
      %s375 = sphi 0, %s374
      %s391 = sphi 0, %s375
      %s395 = sphi 0, %s395
      %s397 = sphi 0, %s395
      %s398 = sphi 0, %s397
      %s412 = sphi 0, %s398
    $region4: #{_forward_device.3} parent=1 // loop_header_branch
      %34 = sbr.rel (%p32) target = $region8
    $region5: #{_forward_device.3} parent=1 // loop_body
      %s36 = ssub.s32 %s31, 1
      %s37 = ssub.s32 %s31, 2
      %s38 = sadd.s32 %s31, 1
      %s39 = ssub.s32 %s31, %s38
      %p40 = scmp.eq.s32.totalorder %s39, 0
      %s42 = sadd.s32 %s41, 1
      %s43 = scalar_select %p40, %s41, %s42
      %p46 = pneg %p40
      %p47 = scmp.eq.s32.totalorder %s31, 1
      %p48 = por %p46, %p47
      %p49 = scmp.ne.s32.totalorder %s41, %s44
      %p50 = scmp.eq.s32.totalorder %s31, 0
      %p51 = por %p49, %p50
      %p52 = scmp.ne.s32.totalorder %s41, %s44
      %p53 = scmp.eq.s32.totalorder %s36, 1
      %p54 = por %p52, %p53
      %p55 = scmp.ne.s32.totalorder %s44, %s45
      %p56 = scmp.eq.s32.totalorder %s36, 0
      %p57 = por %p55, %p56
      %p58 = scmp.ne.s32.totalorder %s44, %s45
      %p59 = scmp.eq.s32.totalorder %s37, 1
      %p60 = por %p58, %p59
      %p62 = scmp.ne.s32.totalorder %s45, %s61
      %p63 = scmp.eq.s32.totalorder %s37, 0
      %p64 = por %p62, %p63
      %s65 = ssub.s32 %s31, %s38
      %p66 = scmp.eq.s32.totalorder %s65, 0
      %s68 = sadd.s32 %s67, 1
      %s69 = scalar_select %p66, %s67, %s68
      %p72 = pneg %p66
      %p73 = scmp.eq.s32.totalorder %s31, 1
      %p74 = por %p72, %p73
      %p75 = scmp.ne.s32.totalorder %s67, %s70
      %p76 = scmp.eq.s32.totalorder %s31, 0
      %p77 = por %p75, %p76
      %p78 = scmp.ne.s32.totalorder %s67, %s70
      %p79 = scmp.eq.s32.totalorder %s36, 1
      %p80 = por %p78, %p79
      %p81 = scmp.ne.s32.totalorder %s70, %s71
      %p82 = scmp.eq.s32.totalorder %s36, 0
      %p83 = por %p81, %p82
      %p84 = scmp.ne.s32.totalorder %s70, %s71
      %p85 = scmp.eq.s32.totalorder %s37, 1
      %p86 = por %p84, %p85
      %p88 = scmp.ne.s32.totalorder %s71, %s87
      %p89 = scmp.eq.s32.totalorder %s37, 0
      %p90 = por %p88, %p89
      %s91 = ssub.s32 %s31, %s38
      %p92 = scmp.eq.s32.totalorder %s91, 0
      %s94 = sadd.s32 %s93, 1
      %s95 = scalar_select %p92, %s93, %s94
      %p98 = pneg %p92
      %p99 = scmp.eq.s32.totalorder %s31, 1
      %p100 = por %p98, %p99
      %p101 = scmp.ne.s32.totalorder %s93, %s96
      %p102 = scmp.eq.s32.totalorder %s31, 0
      %p103 = por %p101, %p102
      %p104 = scmp.ne.s32.totalorder %s93, %s96
      %p105 = scmp.eq.s32.totalorder %s36, 1
      %p106 = por %p104, %p105
      %p107 = scmp.ne.s32.totalorder %s96, %s97
      %p108 = scmp.eq.s32.totalorder %s36, 0
      %p109 = por %p107, %p108
      %p110 = scmp.ne.s32.totalorder %s96, %s97
      %p111 = scmp.eq.s32.totalorder %s37, 1
      %p112 = por %p110, %p111
      %p114 = scmp.ne.s32.totalorder %s97, %s113
      %p115 = scmp.eq.s32.totalorder %s37, 0
      %p116 = por %p114, %p115
      %s118 = sadd.s32 %s117, 1
      %p121 = scmp.eq.s32.totalorder %s31, 1
      %p122 = scmp.ne.s32.totalorder %s117, %s119
      %p123 = scmp.eq.s32.totalorder %s31, 0
      %p124 = por %p122, %p123
      %p125 = scmp.ne.s32.totalorder %s117, %s119
      %p126 = scmp.eq.s32.totalorder %s36, 1
      %p127 = por %p125, %p126
      %p128 = scmp.ne.s32.totalorder %s119, %s120
      %p129 = scmp.eq.s32.totalorder %s36, 0
      %p130 = por %p128, %p129
      %p131 = scmp.ne.s32.totalorder %s119, %s120
      %p132 = scmp.eq.s32.totalorder %s37, 1
      %p133 = por %p131, %p132
      %p135 = scmp.ne.s32.totalorder %s120, %s134
      %p136 = scmp.eq.s32.totalorder %s37, 0
      %p137 = por %p135, %p136
      %s139 = sadd.s32 %s138, 1
      %p142 = scmp.eq.s32.totalorder %s31, 1
      %p143 = scmp.ne.s32.totalorder %s138, %s140
      %p144 = scmp.eq.s32.totalorder %s31, 0
      %p145 = por %p143, %p144
      %p146 = scmp.ne.s32.totalorder %s138, %s140
      %p147 = scmp.eq.s32.totalorder %s36, 1
      %p148 = por %p146, %p147
      %p149 = scmp.ne.s32.totalorder %s140, %s141
      %p150 = scmp.eq.s32.totalorder %s36, 0
      %p151 = por %p149, %p150
      %p152 = scmp.ne.s32.totalorder %s140, %s141
      %p153 = scmp.eq.s32.totalorder %s37, 1
      %p154 = por %p152, %p153
      %p156 = scmp.ne.s32.totalorder %s141, %s155
      %p157 = scmp.eq.s32.totalorder %s37, 0
      %p158 = por %p156, %p157
      %s160 = sadd.s32 %s159, 1
      %p163 = scmp.eq.s32.totalorder %s31, 1
      %p164 = scmp.ne.s32.totalorder %s159, %s161
      %p165 = scmp.eq.s32.totalorder %s31, 0
      %p166 = por %p164, %p165
      %p167 = scmp.ne.s32.totalorder %s159, %s161
      %p168 = scmp.eq.s32.totalorder %s36, 1
      %p169 = por %p167, %p168
      %p170 = scmp.ne.s32.totalorder %s161, %s162
      %p171 = scmp.eq.s32.totalorder %s36, 0
      %p172 = por %p170, %p171
      %p173 = scmp.ne.s32.totalorder %s161, %s162
      %p174 = scmp.eq.s32.totalorder %s37, 1
      %p175 = por %p173, %p174
      %p177 = scmp.ne.s32.totalorder %s162, %s176
      %p178 = scmp.eq.s32.totalorder %s37, 0
      %p179 = por %p177, %p178
      %s181 = sadd.s32 %s180, 1
      %p184 = scmp.eq.s32.totalorder %s31, 1
      %p185 = scmp.ne.s32.totalorder %s180, %s182
      %p186 = scmp.eq.s32.totalorder %s31, 0
      %p187 = por %p185, %p186
      %p188 = scmp.ne.s32.totalorder %s180, %s182
      %p189 = scmp.eq.s32.totalorder %s36, 1
      %p190 = por %p188, %p189
      %p191 = scmp.ne.s32.totalorder %s182, %s183
      %p192 = scmp.eq.s32.totalorder %s36, 0
      %p193 = por %p191, %p192
      %p194 = scmp.ne.s32.totalorder %s182, %s183
      %p195 = scmp.eq.s32.totalorder %s37, 1
      %p196 = por %p194, %p195
      %p198 = scmp.ne.s32.totalorder %s183, %s197
      %p199 = scmp.eq.s32.totalorder %s37, 0
      %p200 = por %p198, %p199
      %s202 = sadd.s32 %s201, 1
      %p205 = scmp.eq.s32.totalorder %s31, 1
      %p206 = scmp.ne.s32.totalorder %s201, %s203
      %p207 = scmp.eq.s32.totalorder %s31, 0
      %p208 = por %p206, %p207
      %p209 = scmp.ne.s32.totalorder %s201, %s203
      %p210 = scmp.eq.s32.totalorder %s36, 1
      %p211 = por %p209, %p210
      %p212 = scmp.ne.s32.totalorder %s203, %s204
      %p213 = scmp.eq.s32.totalorder %s36, 0
      %p214 = por %p212, %p213
      %p215 = scmp.ne.s32.totalorder %s203, %s204
      %p216 = scmp.eq.s32.totalorder %s37, 1
      %p217 = por %p215, %p216
      %p219 = scmp.ne.s32.totalorder %s204, %s218
      %p220 = scmp.eq.s32.totalorder %s37, 0
      %p221 = por %p219, %p220
      %s223 = sadd.s32 %s222, 1
      %p226 = scmp.eq.s32.totalorder %s31, 1
      %p227 = scmp.ne.s32.totalorder %s222, %s224
      %p228 = scmp.eq.s32.totalorder %s31, 0
      %p229 = por %p227, %p228
      %p230 = scmp.ne.s32.totalorder %s222, %s224
      %p231 = scmp.eq.s32.totalorder %s36, 1
      %p232 = por %p230, %p231
      %p233 = scmp.ne.s32.totalorder %s224, %s225
      %p234 = scmp.eq.s32.totalorder %s36, 0
      %p235 = por %p233, %p234
      %p236 = scmp.ne.s32.totalorder %s224, %s225
      %p237 = scmp.eq.s32.totalorder %s37, 1
      %p238 = por %p236, %p237
      %p240 = scmp.ne.s32.totalorder %s225, %s239
      %p241 = scmp.eq.s32.totalorder %s37, 0
      %p242 = por %p240, %p241
      %s244 = sadd.s32 %s243, 1
      %p247 = scmp.eq.s32.totalorder %s31, 1
      %p248 = scmp.ne.s32.totalorder %s243, %s245
      %p249 = scmp.eq.s32.totalorder %s31, 0
      %p250 = por %p248, %p249
      %p251 = scmp.ne.s32.totalorder %s243, %s245
      %p252 = scmp.eq.s32.totalorder %s36, 1
      %p253 = por %p251, %p252
      %p254 = scmp.ne.s32.totalorder %s245, %s246
      %p255 = scmp.eq.s32.totalorder %s36, 0
      %p256 = por %p254, %p255
      %p257 = scmp.ne.s32.totalorder %s245, %s246
      %p258 = scmp.eq.s32.totalorder %s37, 1
      %p259 = por %p257, %p258
      %p261 = scmp.ne.s32.totalorder %s246, %s260
      %p262 = scmp.eq.s32.totalorder %s37, 0
      %p263 = por %p261, %p262
      %s265 = sadd.s32 %s264, 1
      %p268 = scmp.eq.s32.totalorder %s31, 1
      %p269 = scmp.ne.s32.totalorder %s264, %s266
      %p270 = scmp.eq.s32.totalorder %s31, 0
      %p271 = por %p269, %p270
      %p272 = scmp.ne.s32.totalorder %s264, %s266
      %p273 = scmp.eq.s32.totalorder %s36, 1
      %p274 = por %p272, %p273
      %p275 = scmp.ne.s32.totalorder %s266, %s267
      %p276 = scmp.eq.s32.totalorder %s36, 0
      %p277 = por %p275, %p276
      %p278 = scmp.ne.s32.totalorder %s266, %s267
      %p279 = scmp.eq.s32.totalorder %s37, 1
      %p280 = por %p278, %p279
      %p282 = scmp.ne.s32.totalorder %s267, %s281
      %p283 = scmp.eq.s32.totalorder %s37, 0
      %p284 = por %p282, %p283
      %s286 = sadd.s32 %s285, 1
      %p289 = scmp.eq.s32.totalorder %s31, 1
      %p290 = scmp.ne.s32.totalorder %s285, %s287
      %p291 = scmp.eq.s32.totalorder %s31, 0
      %p292 = por %p290, %p291
      %p293 = scmp.ne.s32.totalorder %s285, %s287
      %p294 = scmp.eq.s32.totalorder %s36, 1
      %p295 = por %p293, %p294
      %p296 = scmp.ne.s32.totalorder %s287, %s288
      %p297 = scmp.eq.s32.totalorder %s36, 0
      %p298 = por %p296, %p297
      %p299 = scmp.ne.s32.totalorder %s287, %s288
      %p300 = scmp.eq.s32.totalorder %s37, 1
      %p301 = por %p299, %p300
      %p303 = scmp.ne.s32.totalorder %s288, %s302
      %p304 = scmp.eq.s32.totalorder %s37, 0
      %p305 = por %p303, %p304
      %s307 = sadd.s32 %s306, 1
      %p310 = scmp.eq.s32.totalorder %s31, 1
      %p311 = scmp.ne.s32.totalorder %s306, %s308
      %p312 = scmp.eq.s32.totalorder %s31, 0
      %p313 = por %p311, %p312
      %p314 = scmp.ne.s32.totalorder %s306, %s308
      %p315 = scmp.eq.s32.totalorder %s36, 1
      %p316 = por %p314, %p315
      %p317 = scmp.ne.s32.totalorder %s308, %s309
      %p318 = scmp.eq.s32.totalorder %s36, 0
      %p319 = por %p317, %p318
      %p320 = scmp.ne.s32.totalorder %s308, %s309
      %p321 = scmp.eq.s32.totalorder %s37, 1
      %p322 = por %p320, %p321
      %p324 = scmp.ne.s32.totalorder %s309, %s323
      %p325 = scmp.eq.s32.totalorder %s37, 0
      %p326 = por %p324, %p325
      %s328 = sadd.s32 %s327, 1
      %p331 = scmp.eq.s32.totalorder %s31, 1
      %p332 = scmp.ne.s32.totalorder %s327, %s329
      %p333 = scmp.eq.s32.totalorder %s31, 0
      %p334 = por %p332, %p333
      %p335 = scmp.ne.s32.totalorder %s327, %s329
      %p336 = scmp.eq.s32.totalorder %s36, 1
      %p337 = por %p335, %p336
      %p338 = scmp.ne.s32.totalorder %s329, %s330
      %p339 = scmp.eq.s32.totalorder %s36, 0
      %p340 = por %p338, %p339
      %p341 = scmp.ne.s32.totalorder %s329, %s330
      %p342 = scmp.eq.s32.totalorder %s37, 1
      %p343 = por %p341, %p342
      %p345 = scmp.ne.s32.totalorder %s330, %s344
      %p346 = scmp.eq.s32.totalorder %s37, 0
      %p347 = por %p345, %p346
      %s349 = sadd.s32 %s348, 1
      %p352 = scmp.eq.s32.totalorder %s31, 1
      %p353 = scmp.ne.s32.totalorder %s348, %s350
      %p354 = scmp.eq.s32.totalorder %s31, 0
      %p355 = por %p353, %p354
      %p356 = scmp.ne.s32.totalorder %s348, %s350
      %p357 = scmp.eq.s32.totalorder %s36, 1
      %p358 = por %p356, %p357
      %p359 = scmp.ne.s32.totalorder %s350, %s351
      %p360 = scmp.eq.s32.totalorder %s36, 0
      %p361 = por %p359, %p360
      %p362 = scmp.ne.s32.totalorder %s350, %s351
      %p363 = scmp.eq.s32.totalorder %s37, 1
      %p364 = por %p362, %p363
      %p366 = scmp.ne.s32.totalorder %s351, %s365
      %p367 = scmp.eq.s32.totalorder %s37, 0
      %p368 = por %p366, %p367
      %s369 = ssub.s32 %s31, %s38
      %p370 = scmp.eq.s32.totalorder %s369, 0
      %s372 = sadd.s32 %s371, 1
      %s373 = scalar_select %p370, %s371, %s372
      %p376 = pneg %p370
      %p377 = scmp.eq.s32.totalorder %s31, 1
      %p378 = por %p376, %p377
      %p379 = scmp.ne.s32.totalorder %s371, %s374
      %p380 = scmp.eq.s32.totalorder %s31, 0
      %p381 = por %p379, %p380
      %p382 = scmp.ne.s32.totalorder %s371, %s374
      %p383 = scmp.eq.s32.totalorder %s36, 1
      %p384 = por %p382, %p383
      %p385 = scmp.ne.s32.totalorder %s374, %s375
      %p386 = scmp.eq.s32.totalorder %s36, 0
      %p387 = por %p385, %p386
      %p388 = scmp.ne.s32.totalorder %s374, %s375
      %p389 = scmp.eq.s32.totalorder %s37, 1
      %p390 = por %p388, %p389
      %p392 = scmp.ne.s32.totalorder %s375, %s391
      %p393 = scmp.eq.s32.totalorder %s37, 0
      %p394 = por %p392, %p393
      %s396 = sadd.s32 %s395, 1
      %p399 = scmp.eq.s32.totalorder %s31, 1
      %p400 = scmp.ne.s32.totalorder %s395, %s397
      %p401 = scmp.eq.s32.totalorder %s31, 0
      %p402 = por %p400, %p401
      %p403 = scmp.ne.s32.totalorder %s395, %s397
      %p404 = scmp.eq.s32.totalorder %s36, 1
      %p405 = por %p403, %p404
      %p406 = scmp.ne.s32.totalorder %s397, %s398
      %p407 = scmp.eq.s32.totalorder %s36, 0
      %p408 = por %p406, %p407
      %p409 = scmp.ne.s32.totalorder %s397, %s398
      %p410 = scmp.eq.s32.totalorder %s37, 1
      %p411 = por %p409, %p410
      %p413 = scmp.ne.s32.totalorder %s398, %s412
      %p414 = scmp.eq.s32.totalorder %s37, 0
      %p415 = por %p413, %p414
      %p416 = scmp.le.s32.totalorder 1, %s31
      %p417 = scmp.lt.s32.totalorder %s31, 3
      %p418 = pnand %p416, %p417
      %p419 = pneg %p418
      // Predicated region
      $region9: #{_forward_device.3} parent=5 // pred_check
        _
      $region10: #{_forward_device.3} parent=5 // pred_check_branch
        %421 = sbr.rel (%p418) target = $region12
      $region11: #{_forward_device.3} parent=5 // pred_region
        %s422 = ssub.s32 %s31, 1
        // Predicated region
        $region13: #{_forward_device.3} parent=11 // pred_check
          %p423 = pneg %p130
        $region14: #{_forward_device.3} parent=11 // pred_check_branch
          %425 = sbr.rel (%p423) target = $region16
        $region15: #{_forward_device.3} parent=11 // pred_region
          _
        $region16: #{_forward_device.3} parent=11 // pred_fallthru
          _
        // Predicated region
        $region17: #{_forward_device.3} parent=11 // pred_check
          %p426 = pneg %p151
        $region18: #{_forward_device.3} parent=11 // pred_check_branch
          %428 = sbr.rel (%p426) target = $region20
        $region19: #{_forward_device.3} parent=11 // pred_region
          _
        $region20: #{_forward_device.3} parent=11 // pred_fallthru
          _
        // Predicated region
        $region21: #{_forward_device.3} parent=11 // pred_check
          %p429 = pneg %p172
        $region22: #{_forward_device.3} parent=11 // pred_check_branch
          %431 = sbr.rel (%p429) target = $region24
        $region23: #{_forward_device.3} parent=11 // pred_region
          _
        $region24: #{_forward_device.3} parent=11 // pred_fallthru
          _
        // Predicated region
        $region25: #{_forward_device.3} parent=11 // pred_check
          %p432 = pneg %p193
        $region26: #{_forward_device.3} parent=11 // pred_check_branch
          %434 = sbr.rel (%p432) target = $region28
        $region27: #{_forward_device.3} parent=11 // pred_region
          _
        $region28: #{_forward_device.3} parent=11 // pred_fallthru
          _
        // Predicated region
        $region29: #{_forward_device.3} parent=11 // pred_check
          %p435 = pneg %p214
        $region30: #{_forward_device.3} parent=11 // pred_check_branch
          %437 = sbr.rel (%p435) target = $region32
        $region31: #{_forward_device.3} parent=11 // pred_region
          _
        $region32: #{_forward_device.3} parent=11 // pred_fallthru
          _
        // Predicated region
        $region33: #{_forward_device.3} parent=11 // pred_check
          %p438 = pneg %p235
        $region34: #{_forward_device.3} parent=11 // pred_check_branch
          %440 = sbr.rel (%p438) target = $region36
        $region35: #{_forward_device.3} parent=11 // pred_region
          _
        $region36: #{_forward_device.3} parent=11 // pred_fallthru
          _
        // Predicated region
        $region37: #{_forward_device.3} parent=11 // pred_check
          %p441 = pneg %p256
        $region38: #{_forward_device.3} parent=11 // pred_check_branch
          %443 = sbr.rel (%p441) target = $region40
        $region39: #{_forward_device.3} parent=11 // pred_region
          _
        $region40: #{_forward_device.3} parent=11 // pred_fallthru
          _
        // Predicated region
        $region41: #{_forward_device.3} parent=11 // pred_check
          %p444 = pneg %p277
        $region42: #{_forward_device.3} parent=11 // pred_check_branch
          %446 = sbr.rel (%p444) target = $region44
        $region43: #{_forward_device.3} parent=11 // pred_region
          _
        $region44: #{_forward_device.3} parent=11 // pred_fallthru
          _
        // Predicated region
        $region45: #{_forward_device.3} parent=11 // pred_check
          %p447 = pneg %p298
        $region46: #{_forward_device.3} parent=11 // pred_check_branch
          %449 = sbr.rel (%p447) target = $region48
        $region47: #{_forward_device.3} parent=11 // pred_region
          _
        $region48: #{_forward_device.3} parent=11 // pred_fallthru
          _
        // Predicated region
        $region49: #{_forward_device.3} parent=11 // pred_check
          %p450 = pneg %p319
        $region50: #{_forward_device.3} parent=11 // pred_check_branch
          %452 = sbr.rel (%p450) target = $region52
        $region51: #{_forward_device.3} parent=11 // pred_region
          _
        $region52: #{_forward_device.3} parent=11 // pred_fallthru
          _
        // Predicated region
        $region53: #{_forward_device.3} parent=11 // pred_check
          %p453 = pneg %p340
        $region54: #{_forward_device.3} parent=11 // pred_check_branch
          %455 = sbr.rel (%p453) target = $region56
        $region55: #{_forward_device.3} parent=11 // pred_region
          _
        $region56: #{_forward_device.3} parent=11 // pred_fallthru
          _
        // Predicated region
        $region57: #{_forward_device.3} parent=11 // pred_check
          %p456 = pneg %p361
        $region58: #{_forward_device.3} parent=11 // pred_check_branch
          %458 = sbr.rel (%p456) target = $region60
        $region59: #{_forward_device.3} parent=11 // pred_region
          _
        $region60: #{_forward_device.3} parent=11 // pred_fallthru
          _
      $region12: #{_forward_device.3} parent=5 // pred_fallthru
        _
      %p459 = scmp.lt.s32.totalorder %s31, 2
      // Predicated region
      $region61: #{_forward_device.3} parent=5 // pred_check
        %p460 = pneg %p459
      $region62: #{_forward_device.3} parent=5 // pred_check_branch
        %462 = sbr.rel (%p460) target = $region64
      $region63: #{_forward_device.3} parent=5 // pred_region
        // Predicated region
        $region65: #{_forward_device.3} parent=63 // pred_check
          %p463 = pneg %p51
        $region66: #{_forward_device.3} parent=63 // pred_check_branch
          %465 = sbr.rel (%p463) target = $region68
        $region67: #{_forward_device.3} parent=63 // pred_region
          %p466 = scmp.lt.s32.totalorder %s31, 1
          %s467 = scalar_select %p466, %s31, 1
          %s468 = smul.addr %s467, 8
          %s469 = smul.addr %s468, 8
          %s470 = scalar_lea.vmem %s0, %s469
        $region68: #{_forward_device.3} parent=63 // pred_fallthru
          _
        // Predicated region
        $region69: #{_forward_device.3} parent=63 // pred_check
          %p471 = pneg %p77
        $region70: #{_forward_device.3} parent=63 // pred_check_branch
          %473 = sbr.rel (%p471) target = $region72
        $region71: #{_forward_device.3} parent=63 // pred_region
          %p474 = scmp.lt.s32.totalorder %s31, 1
          %s475 = scalar_select %p474, %s31, 1
          %s476 = smul.addr %s475, 8
          %s477 = smul.addr %s476, 8
          %s478 = scalar_lea.vmem %s1, %s477
        $region72: #{_forward_device.3} parent=63 // pred_fallthru
          _
        // Predicated region
        $region73: #{_forward_device.3} parent=63 // pred_check
          %p479 = pneg %p103
        $region74: #{_forward_device.3} parent=63 // pred_check_branch
          %481 = sbr.rel (%p479) target = $region76
        $region75: #{_forward_device.3} parent=63 // pred_region
          %p482 = scmp.lt.s32.totalorder %s31, 1
          %s483 = scalar_select %p482, %s31, 1
          %s484 = smul.addr %s483, 2
          %s485 = scalar_lea.vmem %s2, %s484
        $region76: #{_forward_device.3} parent=63 // pred_fallthru
          _
      $region64: #{_forward_device.3} parent=5 // pred_fallthru
        _
      %p486 = scmp.le.s32.totalorder 1, %s31
      %p487 = scmp.lt.s32.totalorder %s31, 3
      %p488 = pnand %p486, %p487
      %p489 = pneg %p488
      // Predicated region
      $region77: #{_forward_device.3} parent=5 // pred_check
        _
      $region78: #{_forward_device.3} parent=5 // pred_check_branch
        %491 = sbr.rel (%p488) target = $region80
      $region79: #{_forward_device.3} parent=5 // pred_region
        %s492 = ssub.s32 %s31, 1
        %p493 = scmp.lt.s32.totalorder %s36, 1
        %s494 = scalar_select %p493, %s36, 1
        %s495 = smul.addr %s494, 8
        %s496 = smul.addr %s495, 8
        %s497 = scalar_lea.vmem %s0, %s496
        %p498 = pneg %p57
        %p499 = pneg %p54
        %p500 = scmp.lt.s32.totalorder %s36, 1
        %s501 = scalar_select %p500, %s36, 1
        %s502 = smul.addr %s501, 8
        %s503 = smul.addr %s502, 8
        %s504 = scalar_lea.vmem %s1, %s503
        %p505 = pneg %p83
        %p506 = pneg %p80
        %p507 = scmp.lt.s32.totalorder %s36, 1
        %s508 = scalar_select %p507, %s36, 1
        %s509 = smul.addr %s508, 2
        %s510 = scalar_lea.vmem %s2, %s509
        %p511 = pneg %p109
        %p512 = pneg %p106
        %p513 = pneg %p130
        %p514 = pneg %p127
        %p515 = pneg %p151
        %p516 = pneg %p148
        %p517 = pneg %p172
        %p518 = pneg %p169
        %p519 = pneg %p193
        %p520 = pneg %p190
        %p521 = pneg %p214
        %p522 = pneg %p211
        %p523 = pneg %p235
        %p524 = pneg %p232
        %p525 = pneg %p256
        %p526 = pneg %p253
        %p527 = pneg %p277
        %p528 = pneg %p274
        %p529 = pneg %p298
        %p530 = pneg %p295
        %p531 = pneg %p319
        %p532 = pneg %p316
        %p533 = pneg %p340
        %p534 = pneg %p337
        %p535 = pneg %p361
        %p536 = pneg %p358
        %p537 = pneg %p387
        %p538 = pneg %p384
        %s539 = sand.u32 %s374, 1
        %s540 = scalar_lea.sflag [#allocation6], %s539
        %s541 = sand.u32 %s374, 1
        %s542 = smul.addr %s541, 2
        %s543 = scalar_lea.vmem [#allocation5], %s542
        %p544 = pneg %p408
        %p545 = pneg %p405
        %p546 = scmp.lt.s32.totalorder %s36, 1
        %s547 = scalar_select %p546, %s36, 1
        %s548 = smul.addr %s547, 8
        %s549 = smul.addr %s548, 8
        %s550 = scalar_lea.vmem %s0, %s549
        %p551 = scmp.lt.s32.totalorder %s36, 1
        %s552 = scalar_select %p551, %s36, 1
        %s553 = smul.addr %s552, 8
        %s554 = smul.addr %s553, 8
        %s555 = scalar_lea.vmem %s1, %s554
        %p556 = scmp.lt.s32.totalorder %s36, 1
        %s557 = scalar_select %p556, %s36, 1
        %s558 = smul.addr %s557, 2
        %s559 = scalar_lea.vmem %s2, %s558
        %p560 = scmp.eq.s32.totalorder %s36, 0
        // Predicated region
        $region81: #{_forward_device.3} parent=79 // pred_check
          %p561 = pneg %p560
        $region82: #{_forward_device.3} parent=79 // pred_check_branch
          %563 = sbr.rel (%p561) target = $region84
        $region83: #{_forward_device.3} parent=79 // pred_region
          %vm564 = vcmask 123904
          %565 = vst.msk [vmem:[#allocation2] sm:$0x3] %vm564, 0.0
          %vm566 = vcmask 0
          %567 = vst.msk [vmem:[#allocation7] sm:$0x1] %vm566, 0.0
        $region84: #{_forward_device.3} parent=79 // pred_fallthru
          _
        %v568 = vld [vmem:[#allocation2] sm:$0x3]
        %v569 = vld [vmem:[%s550] sm:$0xff]
        %v570 = vld [vmem:[%s550 + $0x8] sm:$0xff]
        %v571 = vld [vmem:[%s550 + $0x10] sm:$0xff]
        %v572 = vld [vmem:[%s550 + $0x18] sm:$0xff]
        %v573 = vld [vmem:[%s550 + $0x20] sm:$0xff]
        %v574 = vld [vmem:[%s550 + $0x28] sm:$0xff]
        %v575 = vld [vmem:[%s550 + $0x30] sm:$0xff]
        %v576 = vld [vmem:[%s550 + $0x38] sm:$0xff]
        %v579 = vunpack.c.l.s4 1966171168
        %v580 = vunpack.c.0.s8 %v579
        %v581 = vlaneseq
        %v582 = vshrl.u32 %v581, 7
        %v583 = vsub.s32 %v580, %v582
        %v584 = vrot.slane %v568, %v583
        %v585 = vcombine.high %v584, %v584
        %v587 = vunpack.c.l.s4 1966171168
        %v588 = vunpack.c.0.s8 %v587
        %v589 = vlaneseq
        %v590 = vshrl.u32 %v589, 7
        %v591 = vsub.s32 %v588, %v590
        %v592 = vrot.slane %v584, %v591
        %v594 = vunpack.c.l.s4 1966171168
        %v595 = vunpack.c.0.s8 %v594
        %v596 = vlaneseq
        %v597 = vshrl.u32 %v596, 7
        %v598 = vsub.s32 %v595, %v597
        %v599 = vrot.slane %v585, %v598
        %v600 = vld [vmem:[%s6] sm:$0xff]
        %v601 = vld [vmem:[%s6 + $0x8] sm:$0xff]
        %v602 = vld [vmem:[%s6 + $0x10] sm:$0xff]
        %v603 = vld [vmem:[%s6 + $0x18] sm:$0xff]
        %v604 = vlaneseq
        %v605 = vshrl.u32 %v604, 7
        %v606 = vsub.s32 0, %v605
        %v607 = vrot.slane %v592, %v606
        %v608 = vlaneseq
        %v609 = vshrl.u32 %v608, 7
        %v610 = vsub.s32 0, %v609
        %v611 = vrot.slane %v599, %v610
        %615 = vset.pattern.permute.xlu0 0
        %616 = vperm.xlu0 %615, %v600
        %v617 = vpop.permute.xlu0 %616
        %620 = vset.pattern.permute.xlu0 0
        %621 = vperm.xlu0 %620, %v601
        %v622 = vpop.permute.xlu0 %621
        %625 = vset.pattern.permute.xlu0 0
        %626 = vperm.xlu0 %625, %v602
        %v627 = vpop.permute.xlu0 %626
        %630 = vset.pattern.permute.xlu0 0
        %631 = vperm.xlu0 %630, %v603
        %v632 = vpop.permute.xlu0 %631
        %v634 = vmul.f32 %v607, %v617
        %v635 = vmul.f32 %v607, %v622
        %v636 = vmul.f32 %v607, %v627
        %v637 = vmul.f32 %v607, %v632
        %v638 = vmul.f32 %v611, %v617
        %v639 = vmul.f32 %v611, %v622
        %v640 = vmul.f32 %v611, %v627
        %v641 = vmul.f32 %v611, %v632
        %v642 = vadd.f32 %v569, %v634
        %v643 = vadd.f32 %v570, %v635
        %v644 = vadd.f32 %v571, %v636
        %v645 = vadd.f32 %v572, %v637
        %v646 = vadd.f32 %v573, %v638
        %v647 = vadd.f32 %v574, %v639
        %v648 = vadd.f32 %v575, %v640
        %v649 = vadd.f32 %v576, %v641
        %v650 = vmul.f32 %v642, 0.5
        %v651 = vmul.f32 %v643, 0.5
        %v652 = vmul.f32 %v644, 0.5
        %v653 = vmul.f32 %v645, 0.5
        %v654 = vmul.f32 %v646, 0.5
        %v655 = vmul.f32 %v647, 0.5
        %v656 = vmul.f32 %v648, 0.5
        %v657 = vmul.f32 %v649, 0.5
        %v658 = vmul.f32 %v642, 0.044715
        %v659 = vmul.f32 %v643, 0.044715
        %v660 = vmul.f32 %v644, 0.044715
        %v661 = vmul.f32 %v645, 0.044715
        %v662 = vmul.f32 %v646, 0.044715
        %v663 = vmul.f32 %v647, 0.044715
        %v664 = vmul.f32 %v648, 0.044715
        %v665 = vmul.f32 %v649, 0.044715
        %v666 = vmul.f32 %v658, %v642
        %v667 = vmul.f32 %v659, %v643
        %v668 = vmul.f32 %v660, %v644
        %v669 = vmul.f32 %v661, %v645
        %v670 = vmul.f32 %v662, %v646
        %v671 = vmul.f32 %v663, %v647
        %v672 = vmul.f32 %v664, %v648
        %v673 = vmul.f32 %v665, %v649
        %v674 = vmul.f32 %v666, %v642
        %v675 = vmul.f32 %v667, %v643
        %v676 = vmul.f32 %v668, %v644
        %v677 = vmul.f32 %v669, %v645
        %v678 = vmul.f32 %v670, %v646
        %v679 = vmul.f32 %v671, %v647
        %v680 = vmul.f32 %v672, %v648
        %v681 = vmul.f32 %v673, %v649
        %v682 = vadd.f32 %v642, %v674
        %v683 = vadd.f32 %v643, %v675
        %v684 = vadd.f32 %v644, %v676
        %v685 = vadd.f32 %v645, %v677
        %v686 = vadd.f32 %v646, %v678
        %v687 = vadd.f32 %v647, %v679
        %v688 = vadd.f32 %v648, %v680
        %v689 = vadd.f32 %v649, %v681
        %v690 = vmul.f32 %v682, 0.7978846
        %v691 = vmul.f32 %v683, 0.7978846
        %v692 = vmul.f32 %v684, 0.7978846
        %v693 = vmul.f32 %v685, 0.7978846
        %v694 = vmul.f32 %v686, 0.7978846
        %v695 = vmul.f32 %v687, 0.7978846
        %v696 = vmul.f32 %v688, 0.7978846
        %v697 = vmul.f32 %v689, 0.7978846
        %v698 = vtanh.pop %v690
        %v699 = vtanh.pop %v691
        %v700 = vtanh.pop %v692
        %v701 = vtanh.pop %v693
        %v702 = vtanh.pop %v694
        %v703 = vtanh.pop %v695
        %v704 = vtanh.pop %v696
        %v705 = vtanh.pop %v697
        %v706 = vadd.f32 %v698, 1.0
        %v707 = vadd.f32 %v699, 1.0
        %v708 = vadd.f32 %v700, 1.0
        %v709 = vadd.f32 %v701, 1.0
        %v710 = vadd.f32 %v702, 1.0
        %v711 = vadd.f32 %v703, 1.0
        %v712 = vadd.f32 %v704, 1.0
        %v713 = vadd.f32 %v705, 1.0
        %v714 = vmul.f32 %v650, %v706
        %v715 = vmul.f32 %v651, %v707
        %v716 = vmul.f32 %v652, %v708
        %v717 = vmul.f32 %v653, %v709
        %v718 = vmul.f32 %v654, %v710
        %v719 = vmul.f32 %v655, %v711
        %v720 = vmul.f32 %v656, %v712
        %v721 = vmul.f32 %v657, %v713
        %v722 = vld [vmem:[%s7] sm:$0xff]
        %v723 = vld [vmem:[%s7 + $0x8] sm:$0xff]
        %v724 = vld [vmem:[%s7 + $0x10] sm:$0xff]
        %v725 = vld [vmem:[%s7 + $0x18] sm:$0xff]
        %727 = vset.pattern.permute.xlu0 0
        %728 = vperm.xlu0 %727, %v722
        %v729 = vpop.permute.xlu0 %728
        %732 = vset.pattern.permute.xlu0 0
        %733 = vperm.xlu0 %732, %v723
        %v734 = vpop.permute.xlu0 %733
        %737 = vset.pattern.permute.xlu0 0
        %738 = vperm.xlu0 %737, %v724
        %v739 = vpop.permute.xlu0 %738
        %742 = vset.pattern.permute.xlu0 0
        %743 = vperm.xlu0 %742, %v725
        %v744 = vpop.permute.xlu0 %743
        %v746 = vmul.f32 %v714, %v729
        %v747 = vmul.f32 %v715, %v734
        %v748 = vmul.f32 %v716, %v739
        %v749 = vmul.f32 %v717, %v744
        %v750 = vmul.f32 %v718, %v729
        %v751 = vmul.f32 %v719, %v734
        %v752 = vmul.f32 %v720, %v739
        %v753 = vmul.f32 %v721, %v744
        %vm754 = vcmask 130048
        %v755 = vsel %vm754, %v746, 0.0
        %v756 = vsel %vm754, %v747, 0.0
        %v757 = vadd.f32 %v755, %v756
        %v758 = vsel %vm754, %v748, 0.0
        %v759 = vadd.f32 %v757, %v758
        %v760 = vsel %vm754, %v749, 0.0
        %v761 = vadd.f32 %v759, %v760
        %v762 = vrot.slane %v761, 4
        %v763 = vadd.f32 %v761, %v762
        %v764 = vrot.slane %v763, 2
        %v765 = vadd.f32 %v763, %v764
        %v766 = vrot.slane %v765, 1
        %v767 = vadd.f32 %v765, %v766
        %v768 = vsel %vm754, %v750, 0.0
        %v769 = vsel %vm754, %v751, 0.0
        %v770 = vadd.f32 %v768, %v769
        %v771 = vsel %vm754, %v752, 0.0
        %v772 = vadd.f32 %v770, %v771
        %v773 = vsel %vm754, %v753, 0.0
        %v774 = vadd.f32 %v772, %v773
        %v775 = vrot.slane %v774, 4
        %v776 = vadd.f32 %v774, %v775
        %v777 = vrot.slane %v776, 2
        %v778 = vadd.f32 %v776, %v777
        %v779 = vrot.slane %v778, 1
        %v780 = vadd.f32 %v778, %v779
        %v781 = vld [vmem:[#allocation3] sm:$0x1]
        %v783 = vlaneseq
        %v784 = vshrl.u32 %v783, 7
        %v785 = vsub.s32 0, %v784
        %v786 = vrot.slane %v781, %v785
        %787 = vset.pattern.permute.xlu0 0
        %788 = vperm.xlu0 %787, %v786
        %v789 = vpop.permute.xlu0 %788
        %v791 = vadd.f32 %v767, %v789
        %v792 = vadd.f32 %v780, %v789
        %v793 = vxor.u32 %v791, 2147483648
        %v794 = vxor.u32 %v792, 2147483648
        %v795 = vmul.f32 %v793, 1.442695
        %v796 = vpow.pop %v795
        %v797 = vmul.f32 %v794, 1.442695
        %v798 = vpow.pop %v797
        %v799 = vadd.f32 %v796, 1.0
        %v800 = vadd.f32 %v798, 1.0
        %v801 = vrcp.pop %v799
        %v802 = vmul.f32 1.0, %v801
        %v803 = vrcp.pop %v800
        %v804 = vmul.f32 1.0, %v803
        %v805 = vld [vmem:[%s555] sm:$0xff]
        %v806 = vld [vmem:[%s555 + $0x8] sm:$0xff]
        %v807 = vld [vmem:[%s555 + $0x10] sm:$0xff]
        %v808 = vld [vmem:[%s555 + $0x18] sm:$0xff]
        %v809 = vld [vmem:[%s555 + $0x20] sm:$0xff]
        %v810 = vld [vmem:[%s555 + $0x28] sm:$0xff]
        %v811 = vld [vmem:[%s555 + $0x30] sm:$0xff]
        %v812 = vld [vmem:[%s555 + $0x38] sm:$0xff]
        %v813 = vld [vmem:[%s9] sm:$0xff]
        %v814 = vld [vmem:[%s9 + $0x8] sm:$0xff]
        %v815 = vld [vmem:[%s9 + $0x10] sm:$0xff]
        %v816 = vld [vmem:[%s9 + $0x18] sm:$0xff]
        %818 = vset.pattern.permute.xlu0 0
        %819 = vperm.xlu0 %818, %v813
        %v820 = vpop.permute.xlu0 %819
        %823 = vset.pattern.permute.xlu0 0
        %824 = vperm.xlu0 %823, %v814
        %v825 = vpop.permute.xlu0 %824
        %828 = vset.pattern.permute.xlu0 0
        %829 = vperm.xlu0 %828, %v815
        %v830 = vpop.permute.xlu0 %829
        %833 = vset.pattern.permute.xlu0 0
        %834 = vperm.xlu0 %833, %v816
        %v835 = vpop.permute.xlu0 %834
        %v837 = vmul.f32 %v607, %v820
        %v838 = vmul.f32 %v607, %v825
        %v839 = vmul.f32 %v607, %v830
        %v840 = vmul.f32 %v607, %v835
        %v841 = vmul.f32 %v611, %v820
        %v842 = vmul.f32 %v611, %v825
        %v843 = vmul.f32 %v611, %v830
        %v844 = vmul.f32 %v611, %v835
        %v845 = vadd.f32 %v805, %v837
        %v846 = vadd.f32 %v806, %v838
        %v847 = vadd.f32 %v807, %v839
        %v848 = vadd.f32 %v808, %v840
        %v849 = vadd.f32 %v809, %v841
        %v850 = vadd.f32 %v810, %v842
        %v851 = vadd.f32 %v811, %v843
        %v852 = vadd.f32 %v812, %v844
        %v853 = vmul.f32 %v845, 0.5
        %v854 = vmul.f32 %v846, 0.5
        %v855 = vmul.f32 %v847, 0.5
        %v856 = vmul.f32 %v848, 0.5
        %v857 = vmul.f32 %v849, 0.5
        %v858 = vmul.f32 %v850, 0.5
        %v859 = vmul.f32 %v851, 0.5
        %v860 = vmul.f32 %v852, 0.5
        %v861 = vmul.f32 %v845, 0.044715
        %v862 = vmul.f32 %v846, 0.044715
        %v863 = vmul.f32 %v847, 0.044715
        %v864 = vmul.f32 %v848, 0.044715
        %v865 = vmul.f32 %v849, 0.044715
        %v866 = vmul.f32 %v850, 0.044715
        %v867 = vmul.f32 %v851, 0.044715
        %v868 = vmul.f32 %v852, 0.044715
        %v869 = vmul.f32 %v861, %v845
        %v870 = vmul.f32 %v862, %v846
        %v871 = vmul.f32 %v863, %v847
        %v872 = vmul.f32 %v864, %v848
        %v873 = vmul.f32 %v865, %v849
        %v874 = vmul.f32 %v866, %v850
        %v875 = vmul.f32 %v867, %v851
        %v876 = vmul.f32 %v868, %v852
        %v877 = vmul.f32 %v869, %v845
        %v878 = vmul.f32 %v870, %v846
        %v879 = vmul.f32 %v871, %v847
        %v880 = vmul.f32 %v872, %v848
        %v881 = vmul.f32 %v873, %v849
        %v882 = vmul.f32 %v874, %v850
        %v883 = vmul.f32 %v875, %v851
        %v884 = vmul.f32 %v876, %v852
        %v885 = vadd.f32 %v845, %v877
        %v886 = vadd.f32 %v846, %v878
        %v887 = vadd.f32 %v847, %v879
        %v888 = vadd.f32 %v848, %v880
        %v889 = vadd.f32 %v849, %v881
        %v890 = vadd.f32 %v850, %v882
        %v891 = vadd.f32 %v851, %v883
        %v892 = vadd.f32 %v852, %v884
        %v893 = vmul.f32 %v885, 0.7978846
        %v894 = vmul.f32 %v886, 0.7978846
        %v895 = vmul.f32 %v887, 0.7978846
        %v896 = vmul.f32 %v888, 0.7978846
        %v897 = vmul.f32 %v889, 0.7978846
        %v898 = vmul.f32 %v890, 0.7978846
        %v899 = vmul.f32 %v891, 0.7978846
        %v900 = vmul.f32 %v892, 0.7978846
        %v901 = vtanh.pop %v893
        %v902 = vtanh.pop %v894
        %v903 = vtanh.pop %v895
        %v904 = vtanh.pop %v896
        %v905 = vtanh.pop %v897
        %v906 = vtanh.pop %v898
        %v907 = vtanh.pop %v899
        %v908 = vtanh.pop %v900
        %v909 = vadd.f32 %v901, 1.0
        %v910 = vadd.f32 %v902, 1.0
        %v911 = vadd.f32 %v903, 1.0
        %v912 = vadd.f32 %v904, 1.0
        %v913 = vadd.f32 %v905, 1.0
        %v914 = vadd.f32 %v906, 1.0
        %v915 = vadd.f32 %v907, 1.0
        %v916 = vadd.f32 %v908, 1.0
        %v917 = vmul.f32 %v853, %v909
        %v918 = vmul.f32 %v854, %v910
        %v919 = vmul.f32 %v855, %v911
        %v920 = vmul.f32 %v856, %v912
        %v921 = vmul.f32 %v857, %v913
        %v922 = vmul.f32 %v858, %v914
        %v923 = vmul.f32 %v859, %v915
        %v924 = vmul.f32 %v860, %v916
        %v925 = vld [vmem:[%s10] sm:$0xff]
        %v926 = vld [vmem:[%s10 + $0x8] sm:$0xff]
        %v927 = vld [vmem:[%s10 + $0x10] sm:$0xff]
        %v928 = vld [vmem:[%s10 + $0x18] sm:$0xff]
        %930 = vset.pattern.permute.xlu0 0
        %931 = vperm.xlu0 %930, %v925
        %v932 = vpop.permute.xlu0 %931
        %935 = vset.pattern.permute.xlu0 0
        %936 = vperm.xlu0 %935, %v926
        %v937 = vpop.permute.xlu0 %936
        %940 = vset.pattern.permute.xlu0 0
        %941 = vperm.xlu0 %940, %v927
        %v942 = vpop.permute.xlu0 %941
        %945 = vset.pattern.permute.xlu0 0
        %946 = vperm.xlu0 %945, %v928
        %v947 = vpop.permute.xlu0 %946
        %v949 = vmul.f32 %v917, %v932
        %v950 = vmul.f32 %v918, %v937
        %v951 = vmul.f32 %v919, %v942
        %v952 = vmul.f32 %v920, %v947
        %v953 = vmul.f32 %v921, %v932
        %v954 = vmul.f32 %v922, %v937
        %v955 = vmul.f32 %v923, %v942
        %v956 = vmul.f32 %v924, %v947
        %v957 = vsel %vm754, %v949, 0.0
        %v958 = vsel %vm754, %v950, 0.0
        %v959 = vadd.f32 %v957, %v958
        %v960 = vsel %vm754, %v951, 0.0
        %v961 = vadd.f32 %v959, %v960
        %v962 = vsel %vm754, %v952, 0.0
        %v963 = vadd.f32 %v961, %v962
        %v964 = vrot.slane %v963, 4
        %v965 = vadd.f32 %v963, %v964
        %v966 = vrot.slane %v965, 2
        %v967 = vadd.f32 %v965, %v966
        %v968 = vrot.slane %v967, 1
        %v969 = vadd.f32 %v967, %v968
        %v970 = vsel %vm754, %v953, 0.0
        %v971 = vsel %vm754, %v954, 0.0
        %v972 = vadd.f32 %v970, %v971
        %v973 = vsel %vm754, %v955, 0.0
        %v974 = vadd.f32 %v972, %v973
        %v975 = vsel %vm754, %v956, 0.0
        %v976 = vadd.f32 %v974, %v975
        %v977 = vrot.slane %v976, 4
        %v978 = vadd.f32 %v976, %v977
        %v979 = vrot.slane %v978, 2
        %v980 = vadd.f32 %v978, %v979
        %v981 = vrot.slane %v980, 1
        %v982 = vadd.f32 %v980, %v981
        %v983 = vld [vmem:[#allocation4] sm:$0x1]
        %v985 = vlaneseq
        %v986 = vshrl.u32 %v985, 7
        %v987 = vsub.s32 0, %v986
        %v988 = vrot.slane %v983, %v987
        %989 = vset.pattern.permute.xlu0 0
        %990 = vperm.xlu0 %989, %v988
        %v991 = vpop.permute.xlu0 %990
        %v993 = vadd.f32 %v969, %v991
        %v994 = vadd.f32 %v982, %v991
        %v995 = vxor.u32 %v993, 2147483648
        %v996 = vxor.u32 %v994, 2147483648
        %v997 = vmul.f32 %v995, 1.442695
        %v998 = vpow.pop %v997
        %v999 = vmul.f32 %v996, 1.442695
        %v1000 = vpow.pop %v999
        %v1001 = vadd.f32 %v998, 1.0
        %v1002 = vadd.f32 %v1000, 1.0
        %v1003 = vrcp.pop %v1001
        %v1004 = vmul.f32 1.0, %v1003
        %v1005 = vrcp.pop %v1002
        %v1006 = vmul.f32 1.0, %v1005
        %v1007 = vld [vmem:[%s3] sm:$0xff]
        %v1008 = vld [vmem:[%s3 + $0x8] sm:$0xff]
        %v1009 = vld [vmem:[%s3 + $0x10] sm:$0xff]
        %v1010 = vld [vmem:[%s3 + $0x18] sm:$0xff]
        %v1011 = vmul.f32 %v1007, %v802
        %v1012 = vmul.f32 %v1008, %v802
        %v1013 = vmul.f32 %v1009, %v804
        %v1014 = vmul.f32 %v1010, %v804
        %v1015 = vsel %vm754, %v1011, -inf
        %1016 = vmax.xlane.f32.xlu0 %v1015
        %v1017 = vpop.xlane.xlu0 %1016
        %v1018 = vsel %vm754, %v1012, -inf
        %1019 = vmax.xlane.f32.xlu0 %v1018
        %v1020 = vpop.xlane.xlu0 %1019
        %v1021 = vsel %vm754, %v1013, -inf
        %1022 = vmax.xlane.f32.xlu0 %v1021
        %v1023 = vpop.xlane.xlu0 %1022
        %v1024 = vsel %vm754, %v1014, -inf
        %1025 = vmax.xlane.f32.xlu0 %v1024
        %v1026 = vpop.xlane.xlu0 %1025
        %v1027 = vld [vmem:[%s4] sm:$0xff]
        %v1028 = vld [vmem:[%s4 + $0x8] sm:$0xff]
        %v1029 = vld [vmem:[%s4 + $0x10] sm:$0xff]
        %v1030 = vld [vmem:[%s4 + $0x18] sm:$0xff]
        %v1031 = vmul.f32 %v1027, %v1004
        %v1032 = vmul.f32 %v1028, %v1004
        %v1033 = vmul.f32 %v1029, %v1006
        %v1034 = vmul.f32 %v1030, %v1006
        %v1035 = vsel %vm754, %v1031, -inf
        %1036 = vmax.xlane.f32.xlu0 %v1035
        %v1037 = vpop.xlane.xlu0 %1036
        %v1038 = vsel %vm754, %v1032, -inf
        %1039 = vmax.xlane.f32.xlu0 %v1038
        %v1040 = vpop.xlane.xlu0 %1039
        %v1041 = vsel %vm754, %v1033, -inf
        %1042 = vmax.xlane.f32.xlu0 %v1041
        %v1043 = vpop.xlane.xlu0 %1042
        %v1044 = vsel %vm754, %v1034, -inf
        %1045 = vmax.xlane.f32.xlu0 %v1044
        %v1046 = vpop.xlane.xlu0 %1045
        %v1047 = vadd.f32 %v1017, %v1037
        %v1048 = vadd.f32 %v1020, %v1040
        %v1049 = vadd.f32 %v1023, %v1043
        %v1050 = vadd.f32 %v1026, %v1046
        %v1051 = vmul.f32 %v1047, 0.5
        %v1052 = vmul.f32 %v1048, 0.5
        %v1053 = vmul.f32 %v1049, 0.5
        %v1054 = vmul.f32 %v1050, 0.5
        %v1059 = vlaneseq
        %v1060 = vand.u32 %v1059, 127
        %v1061 = vlaneseq
        %v1062 = vshrl.u32 %v1061, 7
        %v1063 = vsub.s32 %v1060, %v1062
        %v1064 = vrot.slane %v1051, %v1063
        %v1065 = vadd.s32 %v1060, 4294967288
        %v1066 = vlaneseq
        %v1067 = vshrl.u32 %v1066, 7
        %v1068 = vsub.s32 %v1065, %v1067
        %v1069 = vrot.slane %v1052, %v1068
        %vm1070 = vcmask 130112
        %v1071 = vsel %vm1070, %v1069, %v1064
        %v1072 = vlaneseq
        %v1073 = vshrl.u32 %v1072, 7
        %v1074 = vsub.s32 %v1060, %v1073
        %v1075 = vrot.slane %v1053, %v1074
        %v1076 = vlaneseq
        %v1077 = vshrl.u32 %v1076, 7
        %v1078 = vsub.s32 %v1065, %v1077
        %v1079 = vrot.slane %v1054, %v1078
        %v1080 = vsel %vm1070, %v1079, %v1075
        %vm1081 = vcmask 1041409
        %v1082 = vsel %vm1081, %v1080, %v1071
        %vm1084 = vcmask 123904
        %1085 = vst.msk [vmem:[%s543] sm:$0x3] %vm1084, %v1082
        %v1086 = vld [vmem:[%s12] sm:$0xff]
        %v1087 = vld [vmem:[%s12 + $0x8] sm:$0xff]
        %v1088 = vld [vmem:[%s13] sm:$0xff]
        %v1089 = vld [vmem:[%s13 + $0x8] sm:$0xff]
        %v1090 = vsel %vm754, %v568, 0
        %1092 = vmatprep.subr.mxu0 0.0
        %1093 = vmatpush1.msra.mxu0 %v1088
        %1094 = vmatprep.subr.mxu0 0.0
        %1095 = vmatpush1.msra.mxu0 %v1089
        %1096 = vmatprep.subr.mxu0 0.0
        %1097 = vmatpush1.msra.mxu0 0.0
        %1098 = vmatprep.subr.mxu0 0.0
        %1099 = vmatpush1.msra.mxu0 0.0
        %1100 = vmatprep.subr.mxu0 0.0
        %1101 = vmatpush1.msra.mxu0 0.0
        %1102 = vmatprep.subr.mxu0 0.0
        %1103 = vmatpush1.msra.mxu0 0.0
        %1104 = vmatprep.subr.mxu0 0.0
        %1105 = vmatpush1.msra.mxu0 0.0
        %1106 = vmatprep.subr.mxu0 0.0
        %1107 = vmatpush1.msra.mxu0 0.0
        %1108 = vmatprep.subr.mxu0 0.0
        %1109 = vmatpush1.msra.mxu0 0.0
        %1110 = vmatprep.subr.mxu0 0.0
        %1111 = vmatpush1.msra.mxu0 0.0
        %1112 = vmatprep.subr.mxu0 0.0
        %1113 = vmatpush1.msra.mxu0 0.0
        %1114 = vmatprep.subr.mxu0 0.0
        %1115 = vmatpush1.msra.mxu0 0.0
        %1116 = vmatprep.subr.mxu0 0.0
        %1117 = vmatpush1.msra.mxu0 0.0
        %1118 = vmatprep.subr.mxu0 0.0
        %1119 = vmatpush1.msra.mxu0 0.0
        %1120 = vmatprep.subr.mxu0 0.0
        %1121 = vmatpush1.msra.mxu0 0.0
        %1122 = vmatprep.subr.mxu0 0.0
        %1123 = vmatpush1.msra.mxu0 0.0
        %1124 = vmatprep.subr.mxu0 0.0
        %1125 = vmatpush1.msra.mxu0 0.0
        %1126 = vmatprep.subr.mxu0 0.0
        %1127 = vmatpush1.msra.mxu0 0.0
        %1128 = vmatprep.subr.mxu0 0.0
        %1129 = vmatpush1.msra.mxu0 0.0
        %1130 = vmatprep.subr.mxu0 0.0
        %1131 = vmatpush1.msra.mxu0 0.0
        %1132 = vmatprep.subr.mxu0 0.0
        %1133 = vmatpush1.msra.mxu0 0.0
        %1134 = vmatprep.subr.mxu0 0.0
        %1135 = vmatpush1.msra.mxu0 0.0
        %1136 = vmatprep.subr.mxu0 0.0
        %1137 = vmatpush1.msra.mxu0 0.0
        %1138 = vmatprep.subr.mxu0 0.0
        %1139 = vmatpush1.msra.mxu0 0.0
        %1140 = vmatprep.subr.mxu0 0.0
        %1141 = vmatpush1.msra.mxu0 0.0
        %1142 = vmatprep.subr.mxu0 0.0
        %1143 = vmatpush1.msra.mxu0 0.0
        %1144 = vmatprep.subr.mxu0 0.0
        %1145 = vmatpush1.msra.mxu0 0.0
        %1146 = vmatprep.subr.mxu0 0.0
        %1147 = vmatpush1.msra.mxu0 0.0
        %1148 = vmatprep.subr.mxu0 0.0
        %1149 = vmatpush1.msra.mxu0 0.0
        %1150 = vmatprep.subr.mxu0 0.0
        %1151 = vmatpush1.msra.mxu0 0.0
        %1152 = vmatprep.subr.mxu0 0.0
        %1153 = vmatpush1.msra.mxu0 0.0
        %1154 = vmatprep.subr.mxu0 0.0
        %1155 = vmatpush1.msra.mxu0 0.0
        %1156 = vmatprep.mubr.f32.mxu0 0.0
        %1157 = vmatmul.mubr.f32.gmra.mrb[0].mxu0 %v1090
        %v1158 = vpop.f32.mrb[0].mxu0
        %v1159 = vadd.f32 0.0, %v1158
        %v1160 = vpop.f32.mrb[0].mxu0
        %1161 = vdwg.mxu0
        %v1162 = vsel %vm754, %v1082, 0
        %1164 = vmatprep.subr.mxu0 0.0
        %1165 = vmatpush1.msra.mxu0 %v1086
        %1166 = vmatprep.subr.mxu0 0.0
        %1167 = vmatpush1.msra.mxu0 %v1087
        %1168 = vmatprep.subr.mxu0 0.0
        %1169 = vmatpush1.msra.mxu0 0.0
        %1170 = vmatprep.subr.mxu0 0.0
        %1171 = vmatpush1.msra.mxu0 0.0
        %1172 = vmatprep.subr.mxu0 0.0
        %1173 = vmatpush1.msra.mxu0 0.0
        %1174 = vmatprep.subr.mxu0 0.0
        %1175 = vmatpush1.msra.mxu0 0.0
        %1176 = vmatprep.subr.mxu0 0.0
        %1177 = vmatpush1.msra.mxu0 0.0
        %1178 = vmatprep.subr.mxu0 0.0
        %1179 = vmatpush1.msra.mxu0 0.0
        %1180 = vmatprep.subr.mxu0 0.0
        %1181 = vmatpush1.msra.mxu0 0.0
        %1182 = vmatprep.subr.mxu0 0.0
        %1183 = vmatpush1.msra.mxu0 0.0
        %1184 = vmatprep.subr.mxu0 0.0
        %1185 = vmatpush1.msra.mxu0 0.0
        %1186 = vmatprep.subr.mxu0 0.0
        %1187 = vmatpush1.msra.mxu0 0.0
        %1188 = vmatprep.subr.mxu0 0.0
        %1189 = vmatpush1.msra.mxu0 0.0
        %1190 = vmatprep.subr.mxu0 0.0
        %1191 = vmatpush1.msra.mxu0 0.0
        %1192 = vmatprep.subr.mxu0 0.0
        %1193 = vmatpush1.msra.mxu0 0.0
        %1194 = vmatprep.subr.mxu0 0.0
        %1195 = vmatpush1.msra.mxu0 0.0
        %1196 = vmatprep.subr.mxu0 0.0
        %1197 = vmatpush1.msra.mxu0 0.0
        %1198 = vmatprep.subr.mxu0 0.0
        %1199 = vmatpush1.msra.mxu0 0.0
        %1200 = vmatprep.subr.mxu0 0.0
        %1201 = vmatpush1.msra.mxu0 0.0
        %1202 = vmatprep.subr.mxu0 0.0
        %1203 = vmatpush1.msra.mxu0 0.0
        %1204 = vmatprep.subr.mxu0 0.0
        %1205 = vmatpush1.msra.mxu0 0.0
        %1206 = vmatprep.subr.mxu0 0.0
        %1207 = vmatpush1.msra.mxu0 0.0
        %1208 = vmatprep.subr.mxu0 0.0
        %1209 = vmatpush1.msra.mxu0 0.0
        %1210 = vmatprep.subr.mxu0 0.0
        %1211 = vmatpush1.msra.mxu0 0.0
        %1212 = vmatprep.subr.mxu0 0.0
        %1213 = vmatpush1.msra.mxu0 0.0
        %1214 = vmatprep.subr.mxu0 0.0
        %1215 = vmatpush1.msra.mxu0 0.0
        %1216 = vmatprep.subr.mxu0 0.0
        %1217 = vmatpush1.msra.mxu0 0.0
        %1218 = vmatprep.subr.mxu0 0.0
        %1219 = vmatpush1.msra.mxu0 0.0
        %1220 = vmatprep.subr.mxu0 0.0
        %1221 = vmatpush1.msra.mxu0 0.0
        %1222 = vmatprep.subr.mxu0 0.0
        %1223 = vmatpush1.msra.mxu0 0.0
        %1224 = vmatprep.subr.mxu0 0.0
        %1225 = vmatpush1.msra.mxu0 0.0
        %1226 = vmatprep.subr.mxu0 0.0
        %1227 = vmatpush1.msra.mxu0 0.0
        %1228 = vmatprep.mubr.f32.mxu0 0.0
        %1229 = vmatmul.mubr.f32.gmra.mrb[0].mxu0 %v1162
        %v1230 = vpop.f32.mrb[0].mxu0
        %v1231 = vadd.f32 %v1159, %v1230
        %v1232 = vpop.f32.mrb[0].mxu0
        %1233 = vdwg.mxu0
        %v1234 = vld [vmem:[%s14] sm:$0x1]
        %v1236 = vlaneseq
        %v1237 = vshrl.u32 %v1236, 7
        %v1238 = vsub.s32 0, %v1237
        %v1239 = vrot.slane %v1234, %v1238
        %v1241 = vadd.f32 %v1231, %v1239
        %1242 = vst.msk [vmem:[#allocation2] sm:$0x3] %vm1084, %v1241
        %v1243 = vld [vmem:[%s559] sm:$0x3]
        %v1244 = vlog2.pop %v1051
        %v1245 = vmul.f32 %v1244, 0.6931472
        %v1246 = vlog2.pop %v1052
        %v1247 = vmul.f32 %v1246, 0.6931472
        %v1248 = vlog2.pop %v1053
        %v1249 = vmul.f32 %v1248, 0.6931472
        %v1250 = vlog2.pop %v1054
        %v1251 = vmul.f32 %v1250, 0.6931472
        %v1252 = vmax.f32 %v1245, -100.0
        %v1253 = vmax.f32 %v1247, -100.0
        %v1254 = vmax.f32 %v1249, -100.0
        %v1255 = vmax.f32 %v1251, -100.0
        %v1256 = vsub.f32 1.0, %v1051
        %v1257 = vsub.f32 1.0, %v1052
        %v1258 = vsub.f32 1.0, %v1053
        %v1259 = vsub.f32 1.0, %v1054
        %v1260 = vlog2.pop %v1256
        %v1261 = vmul.f32 %v1260, 0.6931472
        %v1262 = vlog2.pop %v1257
        %v1263 = vmul.f32 %v1262, 0.6931472
        %v1264 = vlog2.pop %v1258
        %v1265 = vmul.f32 %v1264, 0.6931472
        %v1266 = vlog2.pop %v1259
        %v1267 = vmul.f32 %v1266, 0.6931472
        %v1268 = vmax.f32 %v1261, -100.0
        %v1269 = vmax.f32 %v1263, -100.0
        %v1270 = vmax.f32 %v1265, -100.0
        %v1271 = vmax.f32 %v1267, -100.0
        %v1276 = vlaneseq
        %v1277 = vshrl.u32 %v1276, 7
        %v1278 = vsub.s32 %v1060, %v1277
        %v1279 = vrot.slane %v1252, %v1278
        %v1280 = vlaneseq
        %v1281 = vshrl.u32 %v1280, 7
        %v1282 = vsub.s32 %v1065, %v1281
        %v1283 = vrot.slane %v1253, %v1282
        %v1284 = vsel %vm1070, %v1283, %v1279
        %v1285 = vlaneseq
        %v1286 = vshrl.u32 %v1285, 7
        %v1287 = vsub.s32 %v1060, %v1286
        %v1288 = vrot.slane %v1254, %v1287
        %v1289 = vlaneseq
        %v1290 = vshrl.u32 %v1289, 7
        %v1291 = vsub.s32 %v1065, %v1290
        %v1292 = vrot.slane %v1255, %v1291
        %v1293 = vsel %vm1070, %v1292, %v1288
        %v1294 = vsel %vm1081, %v1293, %v1284
        %v1296 = vmul.f32 %v1243, %v1294
        %v1297 = vsub.f32 1.0, %v1243
        %v1302 = vlaneseq
        %v1303 = vshrl.u32 %v1302, 7
        %v1304 = vsub.s32 %v1060, %v1303
        %v1305 = vrot.slane %v1268, %v1304
        %v1306 = vlaneseq
        %v1307 = vshrl.u32 %v1306, 7
        %v1308 = vsub.s32 %v1065, %v1307
        %v1309 = vrot.slane %v1269, %v1308
        %v1310 = vsel %vm1070, %v1309, %v1305
        %v1311 = vlaneseq
        %v1312 = vshrl.u32 %v1311, 7
        %v1313 = vsub.s32 %v1060, %v1312
        %v1314 = vrot.slane %v1270, %v1313
        %v1315 = vlaneseq
        %v1316 = vshrl.u32 %v1315, 7
        %v1317 = vsub.s32 %v1065, %v1316
        %v1318 = vrot.slane %v1271, %v1317
        %v1319 = vsel %vm1070, %v1318, %v1314
        %v1320 = vsel %vm1081, %v1319, %v1310
        %v1322 = vmul.f32 %v1297, %v1320
        %v1323 = vadd.f32 %v1296, %v1322
        %v1324 = vsub.f32 0.0, %v1323
        %v1325 = vsel %vm1084, %v1324, 0.0
        %1326 = vadd.xlane.f32.xlu0 %v1325
        %v1327 = vpop.xlane.xlu0 %1326
        %v1328 = vrot.slane %v1327, 4
        %v1329 = vadd.f32 %v1327, %v1328
        %v1330 = vrot.slane %v1329, 2
        %v1331 = vadd.f32 %v1329, %v1330
        %v1332 = vrot.slane %v1331, 1
        %v1333 = vadd.f32 %v1331, %v1332
        %s1334 = vtos %v1333
        %v1335 = vstv %s1334
        %v1336 = vrcp.pop 32.0
        %v1337 = vmul.f32 %v1335, %v1336
        %v1338 = vld [vmem:[#allocation7] sm:$0x1]
        %v1339 = vld [vmem:[%s5] sm:$0x3]
        %v1340 = vsel %vm1084, %v1339, 0.0
        %1341 = vadd.xlane.f32.xlu0 %v1340
        %v1342 = vpop.xlane.xlu0 %1341
        %v1343 = vrot.slane %v1342, 4
        %v1344 = vadd.f32 %v1342, %v1343
        %v1345 = vrot.slane %v1344, 2
        %v1346 = vadd.f32 %v1344, %v1345
        %v1347 = vrot.slane %v1346, 1
        %v1348 = vadd.f32 %v1346, %v1347
        %s1349 = vtos %v1348
        %v1350 = vstv %s1349
        %v1351 = vmul.f32 %v1337, %v1350
        %v1352 = vadd.f32 %v1338, %v1351
        %vm1353 = vcmask 0
        %1354 = vst.msk [vmem:[#allocation7] sm:$0x1] %vm1353, %v1352
        %s1355 = sand.u32 %s374, 1
        %s1356 = scalar_lea.sflag [#allocation6], %s1355
        %s1357 = sand.u32 %s374, 1
        %s1358 = smul.addr %s1357, 2
        %s1359 = scalar_lea.vmem [#allocation5], %s1358
        // Predicated region
        $region85: #{_forward_device.3} parent=79 // pred_check
          %p1360 = pneg %p384
        $region86: #{_forward_device.3} parent=79 // pred_check_branch
          %1362 = sbr.rel (%p1360) target = $region88
        $region87: #{_forward_device.3} parent=79 // pred_region
          %s1364 = ssub.s32 32, 32
          %1365 = vsyncadd %s1356, %s1364
          %s1366 = smul.addr %s36, 32
          %s1367 = scalar_lea.hbm %s15, %s1366
          %s1369 = sshll.u32 %s1359, 4
          %s1370 = int_to_ptr.vmem [resolvable:$true] %s1369
          %1372 = dma.vmem_to_hbm [thread:$0]  %s1370, 32, %s1367, %s1356
        $region88: #{_forward_device.3} parent=79 // pred_fallthru
          _
        // Predicated region
        $region89: #{_forward_device.3} parent=79 // pred_check
          %p1373 = pneg %p405
        $region90: #{_forward_device.3} parent=79 // pred_check_branch
          %1375 = sbr.rel (%p1373) target = $region92
        $region91: #{_forward_device.3} parent=79 // pred_region
          %s1377 = ssub.s32 16, 16
          %1378 = vsyncadd [#allocation8], %s1377
          %s1380 = sshll.u32 [#allocation7], 4
          %s1381 = int_to_ptr.vmem [resolvable:$true] %s1380
          %1383 = dma.vmem_to_hbm [thread:$0]  %s1381, 16, %s16, [#allocation8]
        $region92: #{_forward_device.3} parent=79 // pred_fallthru
          _
        // Predicated region
        $region93: #{_forward_device.3} parent=79 // pred_check
          %p1384 = pneg %p405
        $region94: #{_forward_device.3} parent=79 // pred_check_branch
          %1386 = sbr.rel (%p1384) target = $region96
        $region95: #{_forward_device.3} parent=79 // pred_region
          %1387 = dma.done [#allocation8], 16
        $region96: #{_forward_device.3} parent=79 // pred_fallthru
          _
      $region80: #{_forward_device.3} parent=5 // pred_fallthru
        _
      %p1388 = scmp.le.s32.totalorder 2, %s31
      // Predicated region
      $region97: #{_forward_device.3} parent=5 // pred_check
        %p1389 = pneg %p1388
      $region98: #{_forward_device.3} parent=5 // pred_check_branch
        %1391 = sbr.rel (%p1389) target = $region100
      $region99: #{_forward_device.3} parent=5 // pred_region
        %s1392 = ssub.s32 %s31, 2
        // Predicated region
        $region101: #{_forward_device.3} parent=99 // pred_check
          %p1393 = pneg %p390
        $region102: #{_forward_device.3} parent=99 // pred_check_branch
          %1395 = sbr.rel (%p1393) target = $region104
        $region103: #{_forward_device.3} parent=99 // pred_region
          %s1396 = sand.u32 %s375, 1
          %s1397 = scalar_lea.sflag [#allocation6], %s1396
          %s1398 = sand.u32 %s375, 1
          %s1399 = smul.addr %s1398, 2
          %s1400 = scalar_lea.vmem [#allocation5], %s1399
          %1401 = dma.done %s1397, 32
        $region104: #{_forward_device.3} parent=99 // pred_fallthru
          _
      $region100: #{_forward_device.3} parent=5 // pred_fallthru
        _
    $region6: #{_forward_device.3} parent=1 // loop_footer
      %s35 = sadd.s32 1, %s31
    $region7: #{_forward_device.3} parent=1 // loop_footer_branch
      %30 = sbr.rel target = $region3
    $region8: #{_forward_device.3} parent=1 // loop_exit
      _
    %1402 = vsyncpa [#allocation6], 1
    %s1403 = scalar_lea.sflag [#allocation6], 1
    %1404 = vsyncpa %s1403, 1
    %1405 = vsyncpa [#allocation8], 1

</llo_original>
